<compile_context>
chip_gen: v5e
topology: v5e:2x2
jax: 0.10.0
libtpu: 0.0.40
codegen_flags: <defaults>
</compile_context>

<pallas_src>
import functools

import jax
import jax.numpy as jnp
from jax import lax
from jax.experimental import pallas as pl
from jax.experimental.pallas import tpu as pltpu

# torchvision rgb_to_grayscale coefficients
_R, _G, _B = 0.2989, 0.587, 0.114


def _census_kernel(gp_hbm, gt_hbm, out_ref, gp_vmem, gt_vmem, sem,
                   *, window_size, tile_h, W, pad, thresh, eps, q):
    # gp_hbm / gt_hbm : (B, Hp, Wp) padded gray*255 images, left in HBM (pl.ANY)
    # out_ref         : (1, tile_h, W) per-pixel loss block
    # gp_vmem/gt_vmem : (th_p, Wp) VMEM scratch halo tiles
    th_p = tile_h + 2 * pad
    Wp = W + 2 * pad

    b = pl.program_id(0)
    t = pl.program_id(1)

    # Manual overlapping-window DMA (Blocked index_maps cannot express the halo
    # overlap between adjacent row tiles).
    row0 = t * tile_h
    cp_p = pltpu.make_async_copy(gp_hbm.at[b, pl.ds(row0, th_p), :], gp_vmem, sem.at[0])
    cp_t = pltpu.make_async_copy(gt_hbm.at[b, pl.ds(row0, th_p), :], gt_vmem, sem.at[1])
    cp_p.start()
    cp_t.start()
    cp_p.wait()
    cp_t.wait()

    gp = gp_vmem[...]
    gt = gt_vmem[...]

    # Half-offset set: (oy, ox) with oy > 0, or (oy == 0 and ox > 0).
    # |set| = (ws^2 - 1) / 2 ; the center offset contributes exactly 0 and is skipped.
    half_offsets = []
    for oy in range(0, pad + 1):
        for ox in range(-pad, pad + 1):
            if oy == 0 and ox <= 0:
                continue
            half_offsets.append((oy, ox))

    sum_r = jnp.zeros((tile_h, W), dtype=jnp.float32)
    for oy, ox in half_offsets:
        ca = max(0, -ox)            # base-pixel column start (padded coords)
        cb = max(0, ox)             # neighbor-pixel column start
        wv = Wp - abs(ox)
        hv = th_p - oy
        # all (base, base+o) pairs with both endpoints inside the padded tile
        a_p = gp[0:hv, ca:ca + wv]
        b_p = gp[oy:oy + hv, cb:cb + wv]
        a_t = gt[0:hv, ca:ca + wv]
        b_t = gt[oy:oy + hv, cb:cb + wv]
        dp = b_p - a_p
        dt = b_t - a_t
        # diff / sqrt(0.81 + diff^2)  ==  diff * rsqrt(0.81 + diff^2)  (1 EUP op)
        np_ = dp * lax.rsqrt(0.81 + dp * dp)
        nt_ = dt * lax.rsqrt(0.81 + dt * dt)
        d = np_ - nt_
        # soft threshold: sq/(thresh+sq) = 1 - thresh * r,  r = 1/(thresh+sq)
        r = pl.reciprocal(thresh + d * d, approx=True)          # shape (hv, wv)
        # Gather r once for each endpoint of the pair:
        #   offset +o seen from the base pixel p     -> rows pad..,      cols pad-ca..
        #   offset -o seen from the neighbor p + o   -> rows pad-oy..,   cols pad-ox-ca..
        c1 = pad - ca
        c2 = pad - ox - ca
        sum_r = sum_r + (r[pad:pad + tile_h, c1:c1 + W]
                         + r[pad - oy:pad - oy + tile_h, c2:c2 + W])

    n_off = float(window_size * window_size - 1)        # 48 non-center offsets
    soft = n_off - thresh * sum_r
    # abs() matches the torch spec and guards tiny negatives from the approx recip.
    soft = jnp.abs(soft)
    # (soft + eps) ** q  via EUP exp/log (base > 0)
    out_ref[0] = jnp.exp(q * jnp.log(soft + eps))


def _vmem_estimate(tile_h, W, pad):
    """Conservative per-step VMEM footprint (inputs + unrolled-loop temporaries)."""
    th_p = tile_h + 2 * pad
    Wp = W + 2 * pad
    big = th_p * Wp * 4
    small = tile_h * W * 4
    # 2 input halo scratch + ~10 concurrently-live f32 temps of the unrolled
    # offset loop + sum_r + double-buffered output block.
    return 2 * big + 10 * big + small + 2 * small


def _vmem_budget():
    cap = 64 << 20                      # safe default (v7x physical VMEM per TC)
    try:
        info = pltpu.get_tpu_info()
        cap = int(getattr(info, "vmem_capacity_bytes", cap) or cap)
    except Exception:
        pass
    return (cap * 3) // 4               # leave headroom for compiler temps


def _pick_tile_h(H, W, pad, budget, max_tile=128):
    """Largest row tile (divisor of H, mult. of 8, <= max_tile) fitting the budget."""
    cands = []
    if H <= max_tile:
        cands.append(H)
    top = min(H, max_tile)
    top -= top % 8
    cands += [t for t in range(top, 7, -8) if H % t == 0]
    seen, ordered = set(), []
    for t in cands:
        if t not in seen:
            seen.add(t)
            ordered.append(t)
    for t in ordered:
        if _vmem_estimate(t, W, pad) <= budget:
            return t
    return ordered[-1] if ordered else H


def census_loss_pallas(pred, target, *, window_size=7, thresh=0.1, eps=0.01,
                       q=0.4, reduction='mean', loss_weight=1.0, weight=None,
                       avg_factor=None):
    assert pred.shape == target.shape
    assert avg_factor is None, "avg_factor path not implemented"
    B, C, H, W = pred.shape
    assert C == 3, "census loss expects RGB input"
    pad = window_size // 2
    Hp, Wp = H + 2 * pad, W + 2 * pad

    # Grayscale(*255) + zero pad in one fused XLA pass (linear, so identical to
    # padding RGB then converting).
    def gray_pad(x):
        g = (_R * x[:, 0] + _G * x[:, 1] + _B * x[:, 2]) * 255.0
        return jnp.pad(g.astype(jnp.float32), ((0, 0), (pad, pad), (pad, pad)))

    gp = gray_pad(pred)
    gt = gray_pad(target)

    budget = _vmem_budget()
    tile_h = _pick_tile_h(H, W, pad, budget)
    assert H % tile_h == 0
    n_tiles = H // tile_h
    th_p = tile_h + 2 * pad

    est = _vmem_estimate(tile_h, W, pad)
    vmem_limit = int(max(32 << 20, min(budget, est + (16 << 20))))

    kernel = functools.partial(_census_kernel, window_size=window_size,
                               tile_h=tile_h, W=W, pad=pad,
                               thresh=float(thresh), eps=float(eps),
                               q=float(q))

    # NOTE: grid has B * n_tiles steps; for B >= 2 (or tiled H) both v7x
    # TensorCores stay busy.
    loss_map = pl.pallas_call(
        kernel,
        out_shape=jax.ShapeDtypeStruct((B, H, W), jnp.float32),
        grid=(B, n_tiles),
        in_specs=[pl.BlockSpec(memory_space=pl.ANY),
                  pl.BlockSpec(memory_space=pl.ANY)],
        out_specs=pl.BlockSpec((1, tile_h, W), lambda b, t: (b, t, 0)),
        scratch_shapes=[pltpu.VMEM((th_p, Wp), jnp.float32),
                        pltpu.VMEM((th_p, Wp), jnp.float32),
                        pltpu.SemaphoreType.DMA((2,))],
        compiler_params=pltpu.CompilerParams(
            dimension_semantics=("parallel", "parallel"),
            vmem_limit_bytes=vmem_limit),
    )(gp, gt)

    # @weighted_loss reduction semantics (avg_factor=None path); weight is
    # applied by broadcasting against the (B, 1, H, W) loss map.
    loss4 = loss_map[:, None, :, :]
    if weight is not None:
        loss4 = loss4 * jnp.asarray(weight, dtype=loss4.dtype)
    if reduction == 'mean':
        out = jnp.mean(loss4)
    elif reduction == 'sum':
        out = jnp.sum(loss4)
    else:  # 'none'
        out = loss4
    return loss_weight * out


# ----------------------------- pure-JAX reference ---------------------------
def _census_loss_ref(pred, target, window_size=7, thresh=0.1, eps=0.01, q=0.4,
                     loss_weight=1.0):
    B, C, H, W = pred.shape
    pad = window_size // 2

    def gray(x):
        return (_R * x[:, 0] + _G * x[:, 1] + _B * x[:, 2])[:, None] * 255.0

    def transform(g):
        gpad = jnp.pad(g, ((0, 0), (0, 0), (pad, pad), (pad, pad)))
        neigh = jnp.stack([gpad[:, 0, dy:dy + H, dx:dx + W]
                           for dy in range(window_size)
                           for dx in range(window_size)], axis=1)
        diff = neigh - g
        return diff / jnp.sqrt(0.81 + diff * diff)

    tp = transform(gray(pred))
    tt = transform(gray(target))
    sq = jnp.square(tp - tt)
    soft = jnp.sum(sq / (thresh + sq), axis=1, keepdims=True)
    loss = jnp.power(jnp.abs(soft) + eps, q)
    return loss_weight * jnp.mean(loss)


if __name__ == "__main__":
    key = jax.random.PRNGKey(0)
    k1, k2 = jax.random.split(key)
    B, C, H, W = 2, 3, 16, 16
    pred = jax.random.uniform(k1, (B, C, H, W), dtype=jnp.float32)
    target = jax.random.uniform(k2, (B, C, H, W), dtype=jnp.float32)

    out = census_loss_pallas(pred, target, window_size=7, thresh=0.1,
                             eps=0.01, q=0.4, reduction='mean',
                             loss_weight=1.0)
    out = jax.block_until_ready(out)

    ref = _census_loss_ref(pred, target)
    # approximate EUP reciprocal in the soft threshold => small relative drift
    assert jnp.allclose(out, ref, rtol=2e-3, atol=1e-3), (out, ref)

    print("KERNEL_OK")
</pallas_src>

<mosaic_0001>
module attributes {stable_mosaic.version = 11 : i64} {
  func.func @_census_kernel(%arg0: i32, %arg1: i32, %arg2: memref<2x22x22xf32, #tpu.memory_space<any>>, %arg3: memref<2x22x22xf32, #tpu.memory_space<any>>, %arg4: memref<1x16x16xf32, #tpu.memory_space<vmem>>, %arg5: memref<22x22xf32, #tpu.memory_space<vmem>>, %arg6: memref<22x22xf32, #tpu.memory_space<vmem>>, %arg7: memref<2x!tpu.dma_semaphore, #tpu.memory_space<semaphore_mem>>) attributes {dimension_semantics = [#tpu.dimension_semantics<parallel>, #tpu.dimension_semantics<parallel>], iteration_bounds = array<i64: 2, 1>, scalar_prefetch = 0 : i64, scratch_operands = 3 : i64, tpu.core_type = #tpu.core_type<tc>, window_params = [{}, {}, {transform_indices = @transform_2, window_bounds = array<i64: 1, 16, 16>}]} {
    %c16_i32 = arith.constant 16 : i32
    %0 = arith.muli %arg1, %c16_i32 : i32
    %c0_i32 = arith.constant 0 : i32
    %c0_i32_0 = arith.constant 0 : i32
    %1 = tpu.memref_slice %arg2[%arg0, %0, %c0_i32_0] : memref<2x22x22xf32, #tpu.memory_space<any>> -> memref<1x22x22xf32, #tpu.memory_space<any>>
    %2 = tpu.memref_squeeze %1 : memref<1x22x22xf32, #tpu.memory_space<any>> -> memref<22x22xf32, #tpu.memory_space<any>>
    %3 = tpu.memref_slice %arg7[%c0_i32] : memref<2x!tpu.dma_semaphore, #tpu.memory_space<semaphore_mem>> -> memref<1x!tpu.dma_semaphore, #tpu.memory_space<semaphore_mem>>
    %4 = tpu.memref_squeeze %3 : memref<1x!tpu.dma_semaphore, #tpu.memory_space<semaphore_mem>> -> memref<!tpu.dma_semaphore, #tpu.memory_space<semaphore_mem>>
    tpu.enqueue_dma source(%2 : memref<22x22xf32, #tpu.memory_space<any>>) target(%arg5 : memref<22x22xf32, #tpu.memory_space<vmem>>) target_semaphore(%4 : memref<!tpu.dma_semaphore, #tpu.memory_space<semaphore_mem>>)
    %c1_i32 = arith.constant 1 : i32
    %c0_i32_1 = arith.constant 0 : i32
    %5 = tpu.memref_slice %arg3[%arg0, %0, %c0_i32_1] : memref<2x22x22xf32, #tpu.memory_space<any>> -> memref<1x22x22xf32, #tpu.memory_space<any>>
    %6 = tpu.memref_squeeze %5 : memref<1x22x22xf32, #tpu.memory_space<any>> -> memref<22x22xf32, #tpu.memory_space<any>>
    %7 = tpu.memref_slice %arg7[%c1_i32] : memref<2x!tpu.dma_semaphore, #tpu.memory_space<semaphore_mem>> -> memref<1x!tpu.dma_semaphore, #tpu.memory_space<semaphore_mem>>
    %8 = tpu.memref_squeeze %7 : memref<1x!tpu.dma_semaphore, #tpu.memory_space<semaphore_mem>> -> memref<!tpu.dma_semaphore, #tpu.memory_space<semaphore_mem>>
    tpu.enqueue_dma source(%6 : memref<22x22xf32, #tpu.memory_space<any>>) target(%arg6 : memref<22x22xf32, #tpu.memory_space<vmem>>) target_semaphore(%8 : memref<!tpu.dma_semaphore, #tpu.memory_space<semaphore_mem>>)
    %c0_i32_2 = arith.constant 0 : i32
    %c0_i32_3 = arith.constant 0 : i32
    %9 = tpu.memref_slice %arg2[%arg0, %0, %c0_i32_3] : memref<2x22x22xf32, #tpu.memory_space<any>> -> memref<1x22x22xf32, #tpu.memory_space<any>>
    %10 = tpu.memref_squeeze %9 : memref<1x22x22xf32, #tpu.memory_space<any>> -> memref<22x22xf32, #tpu.memory_space<any>>
    %11 = tpu.memref_slice %arg7[%c0_i32_2] : memref<2x!tpu.dma_semaphore, #tpu.memory_space<semaphore_mem>> -> memref<1x!tpu.dma_semaphore, #tpu.memory_space<semaphore_mem>>
    %12 = tpu.memref_squeeze %11 : memref<1x!tpu.dma_semaphore, #tpu.memory_space<semaphore_mem>> -> memref<!tpu.dma_semaphore, #tpu.memory_space<semaphore_mem>>
    tpu.wait_dma2 semaphore(%12 : memref<!tpu.dma_semaphore, #tpu.memory_space<semaphore_mem>>) src(%10 : memref<22x22xf32, #tpu.memory_space<any>>) dst(%arg5 : memref<22x22xf32, #tpu.memory_space<vmem>>)
    %c1_i32_4 = arith.constant 1 : i32
    %c0_i32_5 = arith.constant 0 : i32
    %13 = tpu.memref_slice %arg3[%arg0, %0, %c0_i32_5] : memref<2x22x22xf32, #tpu.memory_space<any>> -> memref<1x22x22xf32, #tpu.memory_space<any>>
    %14 = tpu.memref_squeeze %13 : memref<1x22x22xf32, #tpu.memory_space<any>> -> memref<22x22xf32, #tpu.memory_space<any>>
    %15 = tpu.memref_slice %arg7[%c1_i32_4] : memref<2x!tpu.dma_semaphore, #tpu.memory_space<semaphore_mem>> -> memref<1x!tpu.dma_semaphore, #tpu.memory_space<semaphore_mem>>
    %16 = tpu.memref_squeeze %15 : memref<1x!tpu.dma_semaphore, #tpu.memory_space<semaphore_mem>> -> memref<!tpu.dma_semaphore, #tpu.memory_space<semaphore_mem>>
    tpu.wait_dma2 semaphore(%16 : memref<!tpu.dma_semaphore, #tpu.memory_space<semaphore_mem>>) src(%14 : memref<22x22xf32, #tpu.memory_space<any>>) dst(%arg6 : memref<22x22xf32, #tpu.memory_space<vmem>>)
    %c0 = arith.constant 0 : index
    %c0_6 = arith.constant 0 : index
    %17 = vector.load %arg5[%c0, %c0_6] : memref<22x22xf32, #tpu.memory_space<vmem>>, vector<22x22xf32>
    %c0_7 = arith.constant 0 : index
    %c0_8 = arith.constant 0 : index
    %18 = vector.load %arg6[%c0_7, %c0_8] : memref<22x22xf32, #tpu.memory_space<vmem>>, vector<22x22xf32>
    %cst = arith.constant 0.000000e+00 : f32
    %19 = vector.broadcast %cst : f32 to vector<16x16xf32>
    %20 = vector.extract_strided_slice %17 {offsets = [0, 0], sizes = [22, 21], strides = [1, 1]} : vector<22x22xf32> to vector<22x21xf32>
    %21 = vector.extract_strided_slice %17 {offsets = [0, 1], sizes = [22, 21], strides = [1, 1]} : vector<22x22xf32> to vector<22x21xf32>
    %22 = vector.extract_strided_slice %18 {offsets = [0, 0], sizes = [22, 21], strides = [1, 1]} : vector<22x22xf32> to vector<22x21xf32>
    %23 = vector.extract_strided_slice %18 {offsets = [0, 1], sizes = [22, 21], strides = [1, 1]} : vector<22x22xf32> to vector<22x21xf32>
    %24 = arith.subf %21, %20 : vector<22x21xf32>
    %25 = arith.subf %23, %22 : vector<22x21xf32>
    %26 = arith.mulf %24, %24 : vector<22x21xf32>
    %cst_9 = arith.constant 8.100000e-01 : f32
    %27 = vector.broadcast %cst_9 : f32 to vector<22x21xf32>
    %28 = arith.addf %27, %26 : vector<22x21xf32>
    %29 = math.rsqrt %28 : vector<22x21xf32>
    %30 = arith.mulf %24, %29 : vector<22x21xf32>
    %31 = arith.mulf %25, %25 : vector<22x21xf32>
    %cst_10 = arith.constant 8.100000e-01 : f32
    %32 = vector.broadcast %cst_10 : f32 to vector<22x21xf32>
    %33 = arith.addf %32, %31 : vector<22x21xf32>
    %34 = math.rsqrt %33 : vector<22x21xf32>
    %35 = arith.mulf %25, %34 : vector<22x21xf32>
    %36 = arith.subf %30, %35 : vector<22x21xf32>
    %37 = arith.mulf %36, %36 : vector<22x21xf32>
    %cst_11 = arith.constant 1.000000e-01 : f32
    %38 = vector.broadcast %cst_11 : f32 to vector<22x21xf32>
    %39 = arith.addf %38, %37 : vector<22x21xf32>
    %40 = tpu.reciprocal %39 {approx = true} : vector<22x21xf32> -> vector<22x21xf32>
    %41 = vector.extract_strided_slice %40 {offsets = [3, 3], sizes = [16, 16], strides = [1, 1]} : vector<22x21xf32> to vector<16x16xf32>
    %42 = vector.extract_strided_slice %40 {offsets = [3, 2], sizes = [16, 16], strides = [1, 1]} : vector<22x21xf32> to vector<16x16xf32>
    %43 = arith.addf %41, %42 : vector<16x16xf32>
    %44 = arith.addf %19, %43 : vector<16x16xf32>
    %45 = vector.extract_strided_slice %17 {offsets = [0, 0], sizes = [22, 20], strides = [1, 1]} : vector<22x22xf32> to vector<22x20xf32>
    %46 = vector.extract_strided_slice %17 {offsets = [0, 2], sizes = [22, 20], strides = [1, 1]} : vector<22x22xf32> to vector<22x20xf32>
    %47 = vector.extract_strided_slice %18 {offsets = [0, 0], sizes = [22, 20], strides = [1, 1]} : vector<22x22xf32> to vector<22x20xf32>
    %48 = vector.extract_strided_slice %18 {offsets = [0, 2], sizes = [22, 20], strides = [1, 1]} : vector<22x22xf32> to vector<22x20xf32>
    %49 = arith.subf %46, %45 : vector<22x20xf32>
    %50 = arith.subf %48, %47 : vector<22x20xf32>
    %51 = arith.mulf %49, %49 : vector<22x20xf32>
    %cst_12 = arith.constant 8.100000e-01 : f32
    %52 = vector.broadcast %cst_12 : f32 to vector<22x20xf32>
    %53 = arith.addf %52, %51 : vector<22x20xf32>
    %54 = math.rsqrt %53 : vector<22x20xf32>
    %55 = arith.mulf %49, %54 : vector<22x20xf32>
    %56 = arith.mulf %50, %50 : vector<22x20xf32>
    %cst_13 = arith.constant 8.100000e-01 : f32
    %57 = vector.broadcast %cst_13 : f32 to vector<22x20xf32>
    %58 = arith.addf %57, %56 : vector<22x20xf32>
    %59 = math.rsqrt %58 : vector<22x20xf32>
    %60 = arith.mulf %50, %59 : vector<22x20xf32>
    %61 = arith.subf %55, %60 : vector<22x20xf32>
    %62 = arith.mulf %61, %61 : vector<22x20xf32>
    %cst_14 = arith.constant 1.000000e-01 : f32
    %63 = vector.broadcast %cst_14 : f32 to vector<22x20xf32>
    %64 = arith.addf %63, %62 : vector<22x20xf32>
    %65 = tpu.reciprocal %64 {approx = true} : vector<22x20xf32> -> vector<22x20xf32>
    %66 = vector.extract_strided_slice %65 {offsets = [3, 3], sizes = [16, 16], strides = [1, 1]} : vector<22x20xf32> to vector<16x16xf32>
    %67 = vector.extract_strided_slice %65 {offsets = [3, 1], sizes = [16, 16], strides = [1, 1]} : vector<22x20xf32> to vector<16x16xf32>
    %68 = arith.addf %66, %67 : vector<16x16xf32>
    %69 = arith.addf %44, %68 : vector<16x16xf32>
    %70 = vector.extract_strided_slice %17 {offsets = [0, 0], sizes = [22, 19], strides = [1, 1]} : vector<22x22xf32> to vector<22x19xf32>
    %71 = vector.extract_strided_slice %17 {offsets = [0, 3], sizes = [22, 19], strides = [1, 1]} : vector<22x22xf32> to vector<22x19xf32>
    %72 = vector.extract_strided_slice %18 {offsets = [0, 0], sizes = [22, 19], strides = [1, 1]} : vector<22x22xf32> to vector<22x19xf32>
    %73 = vector.extract_strided_slice %18 {offsets = [0, 3], sizes = [22, 19], strides = [1, 1]} : vector<22x22xf32> to vector<22x19xf32>
    %74 = arith.subf %71, %70 : vector<22x19xf32>
    %75 = arith.subf %73, %72 : vector<22x19xf32>
    %76 = arith.mulf %74, %74 : vector<22x19xf32>
    %cst_15 = arith.constant 8.100000e-01 : f32
    %77 = vector.broadcast %cst_15 : f32 to vector<22x19xf32>
    %78 = arith.addf %77, %76 : vector<22x19xf32>
    %79 = math.rsqrt %78 : vector<22x19xf32>
    %80 = arith.mulf %74, %79 : vector<22x19xf32>
    %81 = arith.mulf %75, %75 : vector<22x19xf32>
    %cst_16 = arith.constant 8.100000e-01 : f32
    %82 = vector.broadcast %cst_16 : f32 to vector<22x19xf32>
    %83 = arith.addf %82, %81 : vector<22x19xf32>
    %84 = math.rsqrt %83 : vector<22x19xf32>
    %85 = arith.mulf %75, %84 : vector<22x19xf32>
    %86 = arith.subf %80, %85 : vector<22x19xf32>
    %87 = arith.mulf %86, %86 : vector<22x19xf32>
    %cst_17 = arith.constant 1.000000e-01 : f32
    %88 = vector.broadcast %cst_17 : f32 to vector<22x19xf32>
    %89 = arith.addf %88, %87 : vector<22x19xf32>
    %90 = tpu.reciprocal %89 {approx = true} : vector<22x19xf32> -> vector<22x19xf32>
    %91 = vector.extract_strided_slice %90 {offsets = [3, 3], sizes = [16, 16], strides = [1, 1]} : vector<22x19xf32> to vector<16x16xf32>
    %92 = vector.extract_strided_slice %90 {offsets = [3, 0], sizes = [16, 16], strides = [1, 1]} : vector<22x19xf32> to vector<16x16xf32>
    %93 = arith.addf %91, %92 : vector<16x16xf32>
    %94 = arith.addf %69, %93 : vector<16x16xf32>
    %95 = vector.extract_strided_slice %17 {offsets = [0, 3], sizes = [21, 19], strides = [1, 1]} : vector<22x22xf32> to vector<21x19xf32>
    %96 = vector.extract_strided_slice %17 {offsets = [1, 0], sizes = [21, 19], strides = [1, 1]} : vector<22x22xf32> to vector<21x19xf32>
    %97 = vector.extract_strided_slice %18 {offsets = [0, 3], sizes = [21, 19], strides = [1, 1]} : vector<22x22xf32> to vector<21x19xf32>
    %98 = vector.extract_strided_slice %18 {offsets = [1, 0], sizes = [21, 19], strides = [1, 1]} : vector<22x22xf32> to vector<21x19xf32>
    %99 = arith.subf %96, %95 : vector<21x19xf32>
    %100 = arith.subf %98, %97 : vector<21x19xf32>
    %101 = arith.mulf %99, %99 : vector<21x19xf32>
    %cst_18 = arith.constant 8.100000e-01 : f32
    %102 = vector.broadcast %cst_18 : f32 to vector<21x19xf32>
    %103 = arith.addf %102, %101 : vector<21x19xf32>
    %104 = math.rsqrt %103 : vector<21x19xf32>
    %105 = arith.mulf %99, %104 : vector<21x19xf32>
    %106 = arith.mulf %100, %100 : vector<21x19xf32>
    %cst_19 = arith.constant 8.100000e-01 : f32
    %107 = vector.broadcast %cst_19 : f32 to vector<21x19xf32>
    %108 = arith.addf %107, %106 : vector<21x19xf32>
    %109 = math.rsqrt %108 : vector<21x19xf32>
    %110 = arith.mulf %100, %109 : vector<21x19xf32>
    %111 = arith.subf %105, %110 : vector<21x19xf32>
    %112 = arith.mulf %111, %111 : vector<21x19xf32>
    %cst_20 = arith.constant 1.000000e-01 : f32
    %113 = vector.broadcast %cst_20 : f32 to vector<21x19xf32>
    %114 = arith.addf %113, %112 : vector<21x19xf32>
    %115 = tpu.reciprocal %114 {approx = true} : vector<21x19xf32> -> vector<21x19xf32>
    %116 = vector.extract_strided_slice %115 {offsets = [3, 0], sizes = [16, 16], strides = [1, 1]} : vector<21x19xf32> to vector<16x16xf32>
    %117 = vector.extract_strided_slice %115 {offsets = [2, 3], sizes = [16, 16], strides = [1, 1]} : vector<21x19xf32> to vector<16x16xf32>
    %118 = arith.addf %116, %117 : vector<16x16xf32>
    %119 = arith.addf %94, %118 : vector<16x16xf32>
    %120 = vector.extract_strided_slice %17 {offsets = [0, 2], sizes = [21, 20], strides = [1, 1]} : vector<22x22xf32> to vector<21x20xf32>
    %121 = vector.extract_strided_slice %17 {offsets = [1, 0], sizes = [21, 20], strides = [1, 1]} : vector<22x22xf32> to vector<21x20xf32>
    %122 = vector.extract_strided_slice %18 {offsets = [0, 2], sizes = [21, 20], strides = [1, 1]} : vector<22x22xf32> to vector<21x20xf32>
    %123 = vector.extract_strided_slice %18 {offsets = [1, 0], sizes = [21, 20], strides = [1, 1]} : vector<22x22xf32> to vector<21x20xf32>
    %124 = arith.subf %121, %120 : vector<21x20xf32>
    %125 = arith.subf %123, %122 : vector<21x20xf32>
    %126 = arith.mulf %124, %124 : vector<21x20xf32>
    %cst_21 = arith.constant 8.100000e-01 : f32
    %127 = vector.broadcast %cst_21 : f32 to vector<21x20xf32>
    %128 = arith.addf %127, %126 : vector<21x20xf32>
    %129 = math.rsqrt %128 : vector<21x20xf32>
    %130 = arith.mulf %124, %129 : vector<21x20xf32>
    %131 = arith.mulf %125, %125 : vector<21x20xf32>
    %cst_22 = arith.constant 8.100000e-01 : f32
    %132 = vector.broadcast %cst_22 : f32 to vector<21x20xf32>
    %133 = arith.addf %132, %131 : vector<21x20xf32>
    %134 = math.rsqrt %133 : vector<21x20xf32>
    %135 = arith.mulf %125, %134 : vector<21x20xf32>
    %136 = arith.subf %130, %135 : vector<21x20xf32>
    %137 = arith.mulf %136, %136 : vector<21x20xf32>
    %cst_23 = arith.constant 1.000000e-01 : f32
    %138 = vector.broadcast %cst_23 : f32 to vector<21x20xf32>
    %139 = arith.addf %138, %137 : vector<21x20xf32>
    %140 = tpu.reciprocal %139 {approx = true} : vector<21x20xf32> -> vector<21x20xf32>
    %141 = vector.extract_strided_slice %140 {offsets = [3, 1], sizes = [16, 16], strides = [1, 1]} : vector<21x20xf32> to vector<16x16xf32>
    %142 = vector.extract_strided_slice %140 {offsets = [2, 3], sizes = [16, 16], strides = [1, 1]} : vector<21x20xf32> to vector<16x16xf32>
    %143 = arith.addf %141, %142 : vector<16x16xf32>
    %144 = arith.addf %119, %143 : vector<16x16xf32>
    %145 = vector.extract_strided_slice %17 {offsets = [0, 1], sizes = [21, 21], strides = [1, 1]} : vector<22x22xf32> to vector<21x21xf32>
    %146 = vector.extract_strided_slice %17 {offsets = [1, 0], sizes = [21, 21], strides = [1, 1]} : vector<22x22xf32> to vector<21x21xf32>
    %147 = vector.extract_strided_slice %18 {offsets = [0, 1], sizes = [21, 21], strides = [1, 1]} : vector<22x22xf32> to vector<21x21xf32>
    %148 = vector.extract_strided_slice %18 {offsets = [1, 0], sizes = [21, 21], strides = [1, 1]} : vector<22x22xf32> to vector<21x21xf32>
    %149 = arith.subf %146, %145 : vector<21x21xf32>
    %150 = arith.subf %148, %147 : vector<21x21xf32>
    %151 = arith.mulf %149, %149 : vector<21x21xf32>
    %cst_24 = arith.constant 8.100000e-01 : f32
    %152 = vector.broadcast %cst_24 : f32 to vector<21x21xf32>
    %153 = arith.addf %152, %151 : vector<21x21xf32>
    %154 = math.rsqrt %153 : vector<21x21xf32>
    %155 = arith.mulf %149, %154 : vector<21x21xf32>
    %156 = arith.mulf %150, %150 : vector<21x21xf32>
    %cst_25 = arith.constant 8.100000e-01 : f32
    %157 = vector.broadcast %cst_25 : f32 to vector<21x21xf32>
    %158 = arith.addf %157, %156 : vector<21x21xf32>
    %159 = math.rsqrt %158 : vector<21x21xf32>
    %160 = arith.mulf %150, %159 : vector<21x21xf32>
    %161 = arith.subf %155, %160 : vector<21x21xf32>
    %162 = arith.mulf %161, %161 : vector<21x21xf32>
    %cst_26 = arith.constant 1.000000e-01 : f32
    %163 = vector.broadcast %cst_26 : f32 to vector<21x21xf32>
    %164 = arith.addf %163, %162 : vector<21x21xf32>
    %165 = tpu.reciprocal %164 {approx = true} : vector<21x21xf32> -> vector<21x21xf32>
    %166 = vector.extract_strided_slice %165 {offsets = [3, 2], sizes = [16, 16], strides = [1, 1]} : vector<21x21xf32> to vector<16x16xf32>
    %167 = vector.extract_strided_slice %165 {offsets = [2, 3], sizes = [16, 16], strides = [1, 1]} : vector<21x21xf32> to vector<16x16xf32>
    %168 = arith.addf %166, %167 : vector<16x16xf32>
    %169 = arith.addf %144, %168 : vector<16x16xf32>
    %170 = vector.extract_strided_slice %17 {offsets = [0, 0], sizes = [21, 22], strides = [1, 1]} : vector<22x22xf32> to vector<21x22xf32>
    %171 = vector.extract_strided_slice %17 {offsets = [1, 0], sizes = [21, 22], strides = [1, 1]} : vector<22x22xf32> to vector<21x22xf32>
    %172 = vector.extract_strided_slice %18 {offsets = [0, 0], sizes = [21, 22], strides = [1, 1]} : vector<22x22xf32> to vector<21x22xf32>
    %173 = vector.extract_strided_slice %18 {offsets = [1, 0], sizes = [21, 22], strides = [1, 1]} : vector<22x22xf32> to vector<21x22xf32>
    %174 = arith.subf %171, %170 : vector<21x22xf32>
    %175 = arith.subf %173, %172 : vector<21x22xf32>
    %176 = arith.mulf %174, %174 : vector<21x22xf32>
    %cst_27 = arith.constant 8.100000e-01 : f32
    %177 = vector.broadcast %cst_27 : f32 to vector<21x22xf32>
    %178 = arith.addf %177, %176 : vector<21x22xf32>
    %179 = math.rsqrt %178 : vector<21x22xf32>
    %180 = arith.mulf %174, %179 : vector<21x22xf32>
    %181 = arith.mulf %175, %175 : vector<21x22xf32>
    %cst_28 = arith.constant 8.100000e-01 : f32
    %182 = vector.broadcast %cst_28 : f32 to vector<21x22xf32>
    %183 = arith.addf %182, %181 : vector<21x22xf32>
    %184 = math.rsqrt %183 : vector<21x22xf32>
    %185 = arith.mulf %175, %184 : vector<21x22xf32>
    %186 = arith.subf %180, %185 : vector<21x22xf32>
    %187 = arith.mulf %186, %186 : vector<21x22xf32>
    %cst_29 = arith.constant 1.000000e-01 : f32
    %188 = vector.broadcast %cst_29 : f32 to vector<21x22xf32>
    %189 = arith.addf %188, %187 : vector<21x22xf32>
    %190 = tpu.reciprocal %189 {approx = true} : vector<21x22xf32> -> vector<21x22xf32>
    %191 = vector.extract_strided_slice %190 {offsets = [3, 3], sizes = [16, 16], strides = [1, 1]} : vector<21x22xf32> to vector<16x16xf32>
    %192 = vector.extract_strided_slice %190 {offsets = [2, 3], sizes = [16, 16], strides = [1, 1]} : vector<21x22xf32> to vector<16x16xf32>
    %193 = arith.addf %191, %192 : vector<16x16xf32>
    %194 = arith.addf %169, %193 : vector<16x16xf32>
    %195 = vector.extract_strided_slice %17 {offsets = [0, 0], sizes = [21, 21], strides = [1, 1]} : vector<22x22xf32> to vector<21x21xf32>
    %196 = vector.extract_strided_slice %17 {offsets = [1, 1], sizes = [21, 21], strides = [1, 1]} : vector<22x22xf32> to vector<21x21xf32>
    %197 = vector.extract_strided_slice %18 {offsets = [0, 0], sizes = [21, 21], strides = [1, 1]} : vector<22x22xf32> to vector<21x21xf32>
    %198 = vector.extract_strided_slice %18 {offsets = [1, 1], sizes = [21, 21], strides = [1, 1]} : vector<22x22xf32> to vector<21x21xf32>
    %199 = arith.subf %196, %195 : vector<21x21xf32>
    %200 = arith.subf %198, %197 : vector<21x21xf32>
    %201 = arith.mulf %199, %199 : vector<21x21xf32>
    %cst_30 = arith.constant 8.100000e-01 : f32
    %202 = vector.broadcast %cst_30 : f32 to vector<21x21xf32>
    %203 = arith.addf %202, %201 : vector<21x21xf32>
    %204 = math.rsqrt %203 : vector<21x21xf32>
    %205 = arith.mulf %199, %204 : vector<21x21xf32>
    %206 = arith.mulf %200, %200 : vector<21x21xf32>
    %cst_31 = arith.constant 8.100000e-01 : f32
    %207 = vector.broadcast %cst_31 : f32 to vector<21x21xf32>
    %208 = arith.addf %207, %206 : vector<21x21xf32>
    %209 = math.rsqrt %208 : vector<21x21xf32>
    %210 = arith.mulf %200, %209 : vector<21x21xf32>
    %211 = arith.subf %205, %210 : vector<21x21xf32>
    %212 = arith.mulf %211, %211 : vector<21x21xf32>
    %cst_32 = arith.constant 1.000000e-01 : f32
    %213 = vector.broadcast %cst_32 : f32 to vector<21x21xf32>
    %214 = arith.addf %213, %212 : vector<21x21xf32>
    %215 = tpu.reciprocal %214 {approx = true} : vector<21x21xf32> -> vector<21x21xf32>
    %216 = vector.extract_strided_slice %215 {offsets = [3, 3], sizes = [16, 16], strides = [1, 1]} : vector<21x21xf32> to vector<16x16xf32>
    %217 = vector.extract_strided_slice %215 {offsets = [2, 2], sizes = [16, 16], strides = [1, 1]} : vector<21x21xf32> to vector<16x16xf32>
    %218 = arith.addf %216, %217 : vector<16x16xf32>
    %219 = arith.addf %194, %218 : vector<16x16xf32>
    %220 = vector.extract_strided_slice %17 {offsets = [0, 0], sizes = [21, 20], strides = [1, 1]} : vector<22x22xf32> to vector<21x20xf32>
    %221 = vector.extract_strided_slice %17 {offsets = [1, 2], sizes = [21, 20], strides = [1, 1]} : vector<22x22xf32> to vector<21x20xf32>
    %222 = vector.extract_strided_slice %18 {offsets = [0, 0], sizes = [21, 20], strides = [1, 1]} : vector<22x22xf32> to vector<21x20xf32>
    %223 = vector.extract_strided_slice %18 {offsets = [1, 2], sizes = [21, 20], strides = [1, 1]} : vector<22x22xf32> to vector<21x20xf32>
    %224 = arith.subf %221, %220 : vector<21x20xf32>
    %225 = arith.subf %223, %222 : vector<21x20xf32>
    %226 = arith.mulf %224, %224 : vector<21x20xf32>
    %cst_33 = arith.constant 8.100000e-01 : f32
    %227 = vector.broadcast %cst_33 : f32 to vector<21x20xf32>
    %228 = arith.addf %227, %226 : vector<21x20xf32>
    %229 = math.rsqrt %228 : vector<21x20xf32>
    %230 = arith.mulf %224, %229 : vector<21x20xf32>
    %231 = arith.mulf %225, %225 : vector<21x20xf32>
    %cst_34 = arith.constant 8.100000e-01 : f32
    %232 = vector.broadcast %cst_34 : f32 to vector<21x20xf32>
    %233 = arith.addf %232, %231 : vector<21x20xf32>
    %234 = math.rsqrt %233 : vector<21x20xf32>
    %235 = arith.mulf %225, %234 : vector<21x20xf32>
    %236 = arith.subf %230, %235 : vector<21x20xf32>
    %237 = arith.mulf %236, %236 : vector<21x20xf32>
    %cst_35 = arith.constant 1.000000e-01 : f32
    %238 = vector.broadcast %cst_35 : f32 to vector<21x20xf32>
    %239 = arith.addf %238, %237 : vector<21x20xf32>
    %240 = tpu.reciprocal %239 {approx = true} : vector<21x20xf32> -> vector<21x20xf32>
    %241 = vector.extract_strided_slice %240 {offsets = [3, 3], sizes = [16, 16], strides = [1, 1]} : vector<21x20xf32> to vector<16x16xf32>
    %242 = vector.extract_strided_slice %240 {offsets = [2, 1], sizes = [16, 16], strides = [1, 1]} : vector<21x20xf32> to vector<16x16xf32>
    %243 = arith.addf %241, %242 : vector<16x16xf32>
    %244 = arith.addf %219, %243 : vector<16x16xf32>
    %245 = vector.extract_strided_slice %17 {offsets = [0, 0], sizes = [21, 19], strides = [1, 1]} : vector<22x22xf32> to vector<21x19xf32>
    %246 = vector.extract_strided_slice %17 {offsets = [1, 3], sizes = [21, 19], strides = [1, 1]} : vector<22x22xf32> to vector<21x19xf32>
    %247 = vector.extract_strided_slice %18 {offsets = [0, 0], sizes = [21, 19], strides = [1, 1]} : vector<22x22xf32> to vector<21x19xf32>
    %248 = vector.extract_strided_slice %18 {offsets = [1, 3], sizes = [21, 19], strides = [1, 1]} : vector<22x22xf32> to vector<21x19xf32>
    %249 = arith.subf %246, %245 : vector<21x19xf32>
    %250 = arith.subf %248, %247 : vector<21x19xf32>
    %251 = arith.mulf %249, %249 : vector<21x19xf32>
    %cst_36 = arith.constant 8.100000e-01 : f32
    %252 = vector.broadcast %cst_36 : f32 to vector<21x19xf32>
    %253 = arith.addf %252, %251 : vector<21x19xf32>
    %254 = math.rsqrt %253 : vector<21x19xf32>
    %255 = arith.mulf %249, %254 : vector<21x19xf32>
    %256 = arith.mulf %250, %250 : vector<21x19xf32>
    %cst_37 = arith.constant 8.100000e-01 : f32
    %257 = vector.broadcast %cst_37 : f32 to vector<21x19xf32>
    %258 = arith.addf %257, %256 : vector<21x19xf32>
    %259 = math.rsqrt %258 : vector<21x19xf32>
    %260 = arith.mulf %250, %259 : vector<21x19xf32>
    %261 = arith.subf %255, %260 : vector<21x19xf32>
    %262 = arith.mulf %261, %261 : vector<21x19xf32>
    %cst_38 = arith.constant 1.000000e-01 : f32
    %263 = vector.broadcast %cst_38 : f32 to vector<21x19xf32>
    %264 = arith.addf %263, %262 : vector<21x19xf32>
    %265 = tpu.reciprocal %264 {approx = true} : vector<21x19xf32> -> vector<21x19xf32>
    %266 = vector.extract_strided_slice %265 {offsets = [3, 3], sizes = [16, 16], strides = [1, 1]} : vector<21x19xf32> to vector<16x16xf32>
    %267 = vector.extract_strided_slice %265 {offsets = [2, 0], sizes = [16, 16], strides = [1, 1]} : vector<21x19xf32> to vector<16x16xf32>
    %268 = arith.addf %266, %267 : vector<16x16xf32>
    %269 = arith.addf %244, %268 : vector<16x16xf32>
    %270 = vector.extract_strided_slice %17 {offsets = [0, 3], sizes = [20, 19], strides = [1, 1]} : vector<22x22xf32> to vector<20x19xf32>
    %271 = vector.extract_strided_slice %17 {offsets = [2, 0], sizes = [20, 19], strides = [1, 1]} : vector<22x22xf32> to vector<20x19xf32>
    %272 = vector.extract_strided_slice %18 {offsets = [0, 3], sizes = [20, 19], strides = [1, 1]} : vector<22x22xf32> to vector<20x19xf32>
    %273 = vector.extract_strided_slice %18 {offsets = [2, 0], sizes = [20, 19], strides = [1, 1]} : vector<22x22xf32> to vector<20x19xf32>
    %274 = arith.subf %271, %270 : vector<20x19xf32>
    %275 = arith.subf %273, %272 : vector<20x19xf32>
    %276 = arith.mulf %274, %274 : vector<20x19xf32>
    %cst_39 = arith.constant 8.100000e-01 : f32
    %277 = vector.broadcast %cst_39 : f32 to vector<20x19xf32>
    %278 = arith.addf %277, %276 : vector<20x19xf32>
    %279 = math.rsqrt %278 : vector<20x19xf32>
    %280 = arith.mulf %274, %279 : vector<20x19xf32>
    %281 = arith.mulf %275, %275 : vector<20x19xf32>
    %cst_40 = arith.constant 8.100000e-01 : f32
    %282 = vector.broadcast %cst_40 : f32 to vector<20x19xf32>
    %283 = arith.addf %282, %281 : vector<20x19xf32>
    %284 = math.rsqrt %283 : vector<20x19xf32>
    %285 = arith.mulf %275, %284 : vector<20x19xf32>
    %286 = arith.subf %280, %285 : vector<20x19xf32>
    %287 = arith.mulf %286, %286 : vector<20x19xf32>
    %cst_41 = arith.constant 1.000000e-01 : f32
    %288 = vector.broadcast %cst_41 : f32 to vector<20x19xf32>
    %289 = arith.addf %288, %287 : vector<20x19xf32>
    %290 = tpu.reciprocal %289 {approx = true} : vector<20x19xf32> -> vector<20x19xf32>
    %291 = vector.extract_strided_slice %290 {offsets = [3, 0], sizes = [16, 16], strides = [1, 1]} : vector<20x19xf32> to vector<16x16xf32>
    %292 = vector.extract_strided_slice %290 {offsets = [1, 3], sizes = [16, 16], strides = [1, 1]} : vector<20x19xf32> to vector<16x16xf32>
    %293 = arith.addf %291, %292 : vector<16x16xf32>
    %294 = arith.addf %269, %293 : vector<16x16xf32>
    %295 = vector.extract_strided_slice %17 {offsets = [0, 2], sizes = [20, 20], strides = [1, 1]} : vector<22x22xf32> to vector<20x20xf32>
    %296 = vector.extract_strided_slice %17 {offsets = [2, 0], sizes = [20, 20], strides = [1, 1]} : vector<22x22xf32> to vector<20x20xf32>
    %297 = vector.extract_strided_slice %18 {offsets = [0, 2], sizes = [20, 20], strides = [1, 1]} : vector<22x22xf32> to vector<20x20xf32>
    %298 = vector.extract_strided_slice %18 {offsets = [2, 0], sizes = [20, 20], strides = [1, 1]} : vector<22x22xf32> to vector<20x20xf32>
    %299 = arith.subf %296, %295 : vector<20x20xf32>
    %300 = arith.subf %298, %297 : vector<20x20xf32>
    %301 = arith.mulf %299, %299 : vector<20x20xf32>
    %cst_42 = arith.constant 8.100000e-01 : f32
    %302 = vector.broadcast %cst_42 : f32 to vector<20x20xf32>
    %303 = arith.addf %302, %301 : vector<20x20xf32>
    %304 = math.rsqrt %303 : vector<20x20xf32>
    %305 = arith.mulf %299, %304 : vector<20x20xf32>
    %306 = arith.mulf %300, %300 : vector<20x20xf32>
    %cst_43 = arith.constant 8.100000e-01 : f32
    %307 = vector.broadcast %cst_43 : f32 to vector<20x20xf32>
    %308 = arith.addf %307, %306 : vector<20x20xf32>
    %309 = math.rsqrt %308 : vector<20x20xf32>
    %310 = arith.mulf %300, %309 : vector<20x20xf32>
    %311 = arith.subf %305, %310 : vector<20x20xf32>
    %312 = arith.mulf %311, %311 : vector<20x20xf32>
    %cst_44 = arith.constant 1.000000e-01 : f32
    %313 = vector.broadcast %cst_44 : f32 to vector<20x20xf32>
    %314 = arith.addf %313, %312 : vector<20x20xf32>
    %315 = tpu.reciprocal %314 {approx = true} : vector<20x20xf32> -> vector<20x20xf32>
    %316 = vector.extract_strided_slice %315 {offsets = [3, 1], sizes = [16, 16], strides = [1, 1]} : vector<20x20xf32> to vector<16x16xf32>
    %317 = vector.extract_strided_slice %315 {offsets = [1, 3], sizes = [16, 16], strides = [1, 1]} : vector<20x20xf32> to vector<16x16xf32>
    %318 = arith.addf %316, %317 : vector<16x16xf32>
    %319 = arith.addf %294, %318 : vector<16x16xf32>
    %320 = vector.extract_strided_slice %17 {offsets = [0, 1], sizes = [20, 21], strides = [1, 1]} : vector<22x22xf32> to vector<20x21xf32>
    %321 = vector.extract_strided_slice %17 {offsets = [2, 0], sizes = [20, 21], strides = [1, 1]} : vector<22x22xf32> to vector<20x21xf32>
    %322 = vector.extract_strided_slice %18 {offsets = [0, 1], sizes = [20, 21], strides = [1, 1]} : vector<22x22xf32> to vector<20x21xf32>
    %323 = vector.extract_strided_slice %18 {offsets = [2, 0], sizes = [20, 21], strides = [1, 1]} : vector<22x22xf32> to vector<20x21xf32>
    %324 = arith.subf %321, %320 : vector<20x21xf32>
    %325 = arith.subf %323, %322 : vector<20x21xf32>
    %326 = arith.mulf %324, %324 : vector<20x21xf32>
    %cst_45 = arith.constant 8.100000e-01 : f32
    %327 = vector.broadcast %cst_45 : f32 to vector<20x21xf32>
    %328 = arith.addf %327, %326 : vector<20x21xf32>
    %329 = math.rsqrt %328 : vector<20x21xf32>
    %330 = arith.mulf %324, %329 : vector<20x21xf32>
    %331 = arith.mulf %325, %325 : vector<20x21xf32>
    %cst_46 = arith.constant 8.100000e-01 : f32
    %332 = vector.broadcast %cst_46 : f32 to vector<20x21xf32>
    %333 = arith.addf %332, %331 : vector<20x21xf32>
    %334 = math.rsqrt %333 : vector<20x21xf32>
    %335 = arith.mulf %325, %334 : vector<20x21xf32>
    %336 = arith.subf %330, %335 : vector<20x21xf32>
    %337 = arith.mulf %336, %336 : vector<20x21xf32>
    %cst_47 = arith.constant 1.000000e-01 : f32
    %338 = vector.broadcast %cst_47 : f32 to vector<20x21xf32>
    %339 = arith.addf %338, %337 : vector<20x21xf32>
    %340 = tpu.reciprocal %339 {approx = true} : vector<20x21xf32> -> vector<20x21xf32>
    %341 = vector.extract_strided_slice %340 {offsets = [3, 2], sizes = [16, 16], strides = [1, 1]} : vector<20x21xf32> to vector<16x16xf32>
    %342 = vector.extract_strided_slice %340 {offsets = [1, 3], sizes = [16, 16], strides = [1, 1]} : vector<20x21xf32> to vector<16x16xf32>
    %343 = arith.addf %341, %342 : vector<16x16xf32>
    %344 = arith.addf %319, %343 : vector<16x16xf32>
    %345 = vector.extract_strided_slice %17 {offsets = [0, 0], sizes = [20, 22], strides = [1, 1]} : vector<22x22xf32> to vector<20x22xf32>
    %346 = vector.extract_strided_slice %17 {offsets = [2, 0], sizes = [20, 22], strides = [1, 1]} : vector<22x22xf32> to vector<20x22xf32>
    %347 = vector.extract_strided_slice %18 {offsets = [0, 0], sizes = [20, 22], strides = [1, 1]} : vector<22x22xf32> to vector<20x22xf32>
    %348 = vector.extract_strided_slice %18 {offsets = [2, 0], sizes = [20, 22], strides = [1, 1]} : vector<22x22xf32> to vector<20x22xf32>
    %349 = arith.subf %346, %345 : vector<20x22xf32>
    %350 = arith.subf %348, %347 : vector<20x22xf32>
    %351 = arith.mulf %349, %349 : vector<20x22xf32>
    %cst_48 = arith.constant 8.100000e-01 : f32
    %352 = vector.broadcast %cst_48 : f32 to vector<20x22xf32>
    %353 = arith.addf %352, %351 : vector<20x22xf32>
    %354 = math.rsqrt %353 : vector<20x22xf32>
    %355 = arith.mulf %349, %354 : vector<20x22xf32>
    %356 = arith.mulf %350, %350 : vector<20x22xf32>
    %cst_49 = arith.constant 8.100000e-01 : f32
    %357 = vector.broadcast %cst_49 : f32 to vector<20x22xf32>
    %358 = arith.addf %357, %356 : vector<20x22xf32>
    %359 = math.rsqrt %358 : vector<20x22xf32>
    %360 = arith.mulf %350, %359 : vector<20x22xf32>
    %361 = arith.subf %355, %360 : vector<20x22xf32>
    %362 = arith.mulf %361, %361 : vector<20x22xf32>
    %cst_50 = arith.constant 1.000000e-01 : f32
    %363 = vector.broadcast %cst_50 : f32 to vector<20x22xf32>
    %364 = arith.addf %363, %362 : vector<20x22xf32>
    %365 = tpu.reciprocal %364 {approx = true} : vector<20x22xf32> -> vector<20x22xf32>
    %366 = vector.extract_strided_slice %365 {offsets = [3, 3], sizes = [16, 16], strides = [1, 1]} : vector<20x22xf32> to vector<16x16xf32>
    %367 = vector.extract_strided_slice %365 {offsets = [1, 3], sizes = [16, 16], strides = [1, 1]} : vector<20x22xf32> to vector<16x16xf32>
    %368 = arith.addf %366, %367 : vector<16x16xf32>
    %369 = arith.addf %344, %368 : vector<16x16xf32>
    %370 = vector.extract_strided_slice %17 {offsets = [0, 0], sizes = [20, 21], strides = [1, 1]} : vector<22x22xf32> to vector<20x21xf32>
    %371 = vector.extract_strided_slice %17 {offsets = [2, 1], sizes = [20, 21], strides = [1, 1]} : vector<22x22xf32> to vector<20x21xf32>
    %372 = vector.extract_strided_slice %18 {offsets = [0, 0], sizes = [20, 21], strides = [1, 1]} : vector<22x22xf32> to vector<20x21xf32>
    %373 = vector.extract_strided_slice %18 {offsets = [2, 1], sizes = [20, 21], strides = [1, 1]} : vector<22x22xf32> to vector<20x21xf32>
    %374 = arith.subf %371, %370 : vector<20x21xf32>
    %375 = arith.subf %373, %372 : vector<20x21xf32>
    %376 = arith.mulf %374, %374 : vector<20x21xf32>
    %cst_51 = arith.constant 8.100000e-01 : f32
    %377 = vector.broadcast %cst_51 : f32 to vector<20x21xf32>
    %378 = arith.addf %377, %376 : vector<20x21xf32>
    %379 = math.rsqrt %378 : vector<20x21xf32>
    %380 = arith.mulf %374, %379 : vector<20x21xf32>
    %381 = arith.mulf %375, %375 : vector<20x21xf32>
    %cst_52 = arith.constant 8.100000e-01 : f32
    %382 = vector.broadcast %cst_52 : f32 to vector<20x21xf32>
    %383 = arith.addf %382, %381 : vector<20x21xf32>
    %384 = math.rsqrt %383 : vector<20x21xf32>
    %385 = arith.mulf %375, %384 : vector<20x21xf32>
    %386 = arith.subf %380, %385 : vector<20x21xf32>
    %387 = arith.mulf %386, %386 : vector<20x21xf32>
    %cst_53 = arith.constant 1.000000e-01 : f32
    %388 = vector.broadcast %cst_53 : f32 to vector<20x21xf32>
    %389 = arith.addf %388, %387 : vector<20x21xf32>
    %390 = tpu.reciprocal %389 {approx = true} : vector<20x21xf32> -> vector<20x21xf32>
    %391 = vector.extract_strided_slice %390 {offsets = [3, 3], sizes = [16, 16], strides = [1, 1]} : vector<20x21xf32> to vector<16x16xf32>
    %392 = vector.extract_strided_slice %390 {offsets = [1, 2], sizes = [16, 16], strides = [1, 1]} : vector<20x21xf32> to vector<16x16xf32>
    %393 = arith.addf %391, %392 : vector<16x16xf32>
    %394 = arith.addf %369, %393 : vector<16x16xf32>
    %395 = vector.extract_strided_slice %17 {offsets = [0, 0], sizes = [20, 20], strides = [1, 1]} : vector<22x22xf32> to vector<20x20xf32>
    %396 = vector.extract_strided_slice %17 {offsets = [2, 2], sizes = [20, 20], strides = [1, 1]} : vector<22x22xf32> to vector<20x20xf32>
    %397 = vector.extract_strided_slice %18 {offsets = [0, 0], sizes = [20, 20], strides = [1, 1]} : vector<22x22xf32> to vector<20x20xf32>
    %398 = vector.extract_strided_slice %18 {offsets = [2, 2], sizes = [20, 20], strides = [1, 1]} : vector<22x22xf32> to vector<20x20xf32>
    %399 = arith.subf %396, %395 : vector<20x20xf32>
    %400 = arith.subf %398, %397 : vector<20x20xf32>
    %401 = arith.mulf %399, %399 : vector<20x20xf32>
    %cst_54 = arith.constant 8.100000e-01 : f32
    %402 = vector.broadcast %cst_54 : f32 to vector<20x20xf32>
    %403 = arith.addf %402, %401 : vector<20x20xf32>
    %404 = math.rsqrt %403 : vector<20x20xf32>
    %405 = arith.mulf %399, %404 : vector<20x20xf32>
    %406 = arith.mulf %400, %400 : vector<20x20xf32>
    %cst_55 = arith.constant 8.100000e-01 : f32
    %407 = vector.broadcast %cst_55 : f32 to vector<20x20xf32>
    %408 = arith.addf %407, %406 : vector<20x20xf32>
    %409 = math.rsqrt %408 : vector<20x20xf32>
    %410 = arith.mulf %400, %409 : vector<20x20xf32>
    %411 = arith.subf %405, %410 : vector<20x20xf32>
    %412 = arith.mulf %411, %411 : vector<20x20xf32>
    %cst_56 = arith.constant 1.000000e-01 : f32
    %413 = vector.broadcast %cst_56 : f32 to vector<20x20xf32>
    %414 = arith.addf %413, %412 : vector<20x20xf32>
    %415 = tpu.reciprocal %414 {approx = true} : vector<20x20xf32> -> vector<20x20xf32>
    %416 = vector.extract_strided_slice %415 {offsets = [3, 3], sizes = [16, 16], strides = [1, 1]} : vector<20x20xf32> to vector<16x16xf32>
    %417 = vector.extract_strided_slice %415 {offsets = [1, 1], sizes = [16, 16], strides = [1, 1]} : vector<20x20xf32> to vector<16x16xf32>
    %418 = arith.addf %416, %417 : vector<16x16xf32>
    %419 = arith.addf %394, %418 : vector<16x16xf32>
    %420 = vector.extract_strided_slice %17 {offsets = [0, 0], sizes = [20, 19], strides = [1, 1]} : vector<22x22xf32> to vector<20x19xf32>
    %421 = vector.extract_strided_slice %17 {offsets = [2, 3], sizes = [20, 19], strides = [1, 1]} : vector<22x22xf32> to vector<20x19xf32>
    %422 = vector.extract_strided_slice %18 {offsets = [0, 0], sizes = [20, 19], strides = [1, 1]} : vector<22x22xf32> to vector<20x19xf32>
    %423 = vector.extract_strided_slice %18 {offsets = [2, 3], sizes = [20, 19], strides = [1, 1]} : vector<22x22xf32> to vector<20x19xf32>
    %424 = arith.subf %421, %420 : vector<20x19xf32>
    %425 = arith.subf %423, %422 : vector<20x19xf32>
    %426 = arith.mulf %424, %424 : vector<20x19xf32>
    %cst_57 = arith.constant 8.100000e-01 : f32
    %427 = vector.broadcast %cst_57 : f32 to vector<20x19xf32>
    %428 = arith.addf %427, %426 : vector<20x19xf32>
    %429 = math.rsqrt %428 : vector<20x19xf32>
    %430 = arith.mulf %424, %429 : vector<20x19xf32>
    %431 = arith.mulf %425, %425 : vector<20x19xf32>
    %cst_58 = arith.constant 8.100000e-01 : f32
    %432 = vector.broadcast %cst_58 : f32 to vector<20x19xf32>
    %433 = arith.addf %432, %431 : vector<20x19xf32>
    %434 = math.rsqrt %433 : vector<20x19xf32>
    %435 = arith.mulf %425, %434 : vector<20x19xf32>
    %436 = arith.subf %430, %435 : vector<20x19xf32>
    %437 = arith.mulf %436, %436 : vector<20x19xf32>
    %cst_59 = arith.constant 1.000000e-01 : f32
    %438 = vector.broadcast %cst_59 : f32 to vector<20x19xf32>
    %439 = arith.addf %438, %437 : vector<20x19xf32>
    %440 = tpu.reciprocal %439 {approx = true} : vector<20x19xf32> -> vector<20x19xf32>
    %441 = vector.extract_strided_slice %440 {offsets = [3, 3], sizes = [16, 16], strides = [1, 1]} : vector<20x19xf32> to vector<16x16xf32>
    %442 = vector.extract_strided_slice %440 {offsets = [1, 0], sizes = [16, 16], strides = [1, 1]} : vector<20x19xf32> to vector<16x16xf32>
    %443 = arith.addf %441, %442 : vector<16x16xf32>
    %444 = arith.addf %419, %443 : vector<16x16xf32>
    %445 = vector.extract_strided_slice %17 {offsets = [0, 3], sizes = [19, 19], strides = [1, 1]} : vector<22x22xf32> to vector<19x19xf32>
    %446 = vector.extract_strided_slice %17 {offsets = [3, 0], sizes = [19, 19], strides = [1, 1]} : vector<22x22xf32> to vector<19x19xf32>
    %447 = vector.extract_strided_slice %18 {offsets = [0, 3], sizes = [19, 19], strides = [1, 1]} : vector<22x22xf32> to vector<19x19xf32>
    %448 = vector.extract_strided_slice %18 {offsets = [3, 0], sizes = [19, 19], strides = [1, 1]} : vector<22x22xf32> to vector<19x19xf32>
    %449 = arith.subf %446, %445 : vector<19x19xf32>
    %450 = arith.subf %448, %447 : vector<19x19xf32>
    %451 = arith.mulf %449, %449 : vector<19x19xf32>
    %cst_60 = arith.constant 8.100000e-01 : f32
    %452 = vector.broadcast %cst_60 : f32 to vector<19x19xf32>
    %453 = arith.addf %452, %451 : vector<19x19xf32>
    %454 = math.rsqrt %453 : vector<19x19xf32>
    %455 = arith.mulf %449, %454 : vector<19x19xf32>
    %456 = arith.mulf %450, %450 : vector<19x19xf32>
    %cst_61 = arith.constant 8.100000e-01 : f32
    %457 = vector.broadcast %cst_61 : f32 to vector<19x19xf32>
    %458 = arith.addf %457, %456 : vector<19x19xf32>
    %459 = math.rsqrt %458 : vector<19x19xf32>
    %460 = arith.mulf %450, %459 : vector<19x19xf32>
    %461 = arith.subf %455, %460 : vector<19x19xf32>
    %462 = arith.mulf %461, %461 : vector<19x19xf32>
    %cst_62 = arith.constant 1.000000e-01 : f32
    %463 = vector.broadcast %cst_62 : f32 to vector<19x19xf32>
    %464 = arith.addf %463, %462 : vector<19x19xf32>
    %465 = tpu.reciprocal %464 {approx = true} : vector<19x19xf32> -> vector<19x19xf32>
    %466 = vector.extract_strided_slice %465 {offsets = [3, 0], sizes = [16, 16], strides = [1, 1]} : vector<19x19xf32> to vector<16x16xf32>
    %467 = vector.extract_strided_slice %465 {offsets = [0, 3], sizes = [16, 16], strides = [1, 1]} : vector<19x19xf32> to vector<16x16xf32>
    %468 = arith.addf %466, %467 : vector<16x16xf32>
    %469 = arith.addf %444, %468 : vector<16x16xf32>
    %470 = vector.extract_strided_slice %17 {offsets = [0, 2], sizes = [19, 20], strides = [1, 1]} : vector<22x22xf32> to vector<19x20xf32>
    %471 = vector.extract_strided_slice %17 {offsets = [3, 0], sizes = [19, 20], strides = [1, 1]} : vector<22x22xf32> to vector<19x20xf32>
    %472 = vector.extract_strided_slice %18 {offsets = [0, 2], sizes = [19, 20], strides = [1, 1]} : vector<22x22xf32> to vector<19x20xf32>
    %473 = vector.extract_strided_slice %18 {offsets = [3, 0], sizes = [19, 20], strides = [1, 1]} : vector<22x22xf32> to vector<19x20xf32>
    %474 = arith.subf %471, %470 : vector<19x20xf32>
    %475 = arith.subf %473, %472 : vector<19x20xf32>
    %476 = arith.mulf %474, %474 : vector<19x20xf32>
    %cst_63 = arith.constant 8.100000e-01 : f32
    %477 = vector.broadcast %cst_63 : f32 to vector<19x20xf32>
    %478 = arith.addf %477, %476 : vector<19x20xf32>
    %479 = math.rsqrt %478 : vector<19x20xf32>
    %480 = arith.mulf %474, %479 : vector<19x20xf32>
    %481 = arith.mulf %475, %475 : vector<19x20xf32>
    %cst_64 = arith.constant 8.100000e-01 : f32
    %482 = vector.broadcast %cst_64 : f32 to vector<19x20xf32>
    %483 = arith.addf %482, %481 : vector<19x20xf32>
    %484 = math.rsqrt %483 : vector<19x20xf32>
    %485 = arith.mulf %475, %484 : vector<19x20xf32>
    %486 = arith.subf %480, %485 : vector<19x20xf32>
    %487 = arith.mulf %486, %486 : vector<19x20xf32>
    %cst_65 = arith.constant 1.000000e-01 : f32
    %488 = vector.broadcast %cst_65 : f32 to vector<19x20xf32>
    %489 = arith.addf %488, %487 : vector<19x20xf32>
    %490 = tpu.reciprocal %489 {approx = true} : vector<19x20xf32> -> vector<19x20xf32>
    %491 = vector.extract_strided_slice %490 {offsets = [3, 1], sizes = [16, 16], strides = [1, 1]} : vector<19x20xf32> to vector<16x16xf32>
    %492 = vector.extract_strided_slice %490 {offsets = [0, 3], sizes = [16, 16], strides = [1, 1]} : vector<19x20xf32> to vector<16x16xf32>
    %493 = arith.addf %491, %492 : vector<16x16xf32>
    %494 = arith.addf %469, %493 : vector<16x16xf32>
    %495 = vector.extract_strided_slice %17 {offsets = [0, 1], sizes = [19, 21], strides = [1, 1]} : vector<22x22xf32> to vector<19x21xf32>
    %496 = vector.extract_strided_slice %17 {offsets = [3, 0], sizes = [19, 21], strides = [1, 1]} : vector<22x22xf32> to vector<19x21xf32>
    %497 = vector.extract_strided_slice %18 {offsets = [0, 1], sizes = [19, 21], strides = [1, 1]} : vector<22x22xf32> to vector<19x21xf32>
    %498 = vector.extract_strided_slice %18 {offsets = [3, 0], sizes = [19, 21], strides = [1, 1]} : vector<22x22xf32> to vector<19x21xf32>
    %499 = arith.subf %496, %495 : vector<19x21xf32>
    %500 = arith.subf %498, %497 : vector<19x21xf32>
    %501 = arith.mulf %499, %499 : vector<19x21xf32>
    %cst_66 = arith.constant 8.100000e-01 : f32
    %502 = vector.broadcast %cst_66 : f32 to vector<19x21xf32>
    %503 = arith.addf %502, %501 : vector<19x21xf32>
    %504 = math.rsqrt %503 : vector<19x21xf32>
    %505 = arith.mulf %499, %504 : vector<19x21xf32>
    %506 = arith.mulf %500, %500 : vector<19x21xf32>
    %cst_67 = arith.constant 8.100000e-01 : f32
    %507 = vector.broadcast %cst_67 : f32 to vector<19x21xf32>
    %508 = arith.addf %507, %506 : vector<19x21xf32>
    %509 = math.rsqrt %508 : vector<19x21xf32>
    %510 = arith.mulf %500, %509 : vector<19x21xf32>
    %511 = arith.subf %505, %510 : vector<19x21xf32>
    %512 = arith.mulf %511, %511 : vector<19x21xf32>
    %cst_68 = arith.constant 1.000000e-01 : f32
    %513 = vector.broadcast %cst_68 : f32 to vector<19x21xf32>
    %514 = arith.addf %513, %512 : vector<19x21xf32>
    %515 = tpu.reciprocal %514 {approx = true} : vector<19x21xf32> -> vector<19x21xf32>
    %516 = vector.extract_strided_slice %515 {offsets = [3, 2], sizes = [16, 16], strides = [1, 1]} : vector<19x21xf32> to vector<16x16xf32>
    %517 = vector.extract_strided_slice %515 {offsets = [0, 3], sizes = [16, 16], strides = [1, 1]} : vector<19x21xf32> to vector<16x16xf32>
    %518 = arith.addf %516, %517 : vector<16x16xf32>
    %519 = arith.addf %494, %518 : vector<16x16xf32>
    %520 = vector.extract_strided_slice %17 {offsets = [0, 0], sizes = [19, 22], strides = [1, 1]} : vector<22x22xf32> to vector<19x22xf32>
    %521 = vector.extract_strided_slice %17 {offsets = [3, 0], sizes = [19, 22], strides = [1, 1]} : vector<22x22xf32> to vector<19x22xf32>
    %522 = vector.extract_strided_slice %18 {offsets = [0, 0], sizes = [19, 22], strides = [1, 1]} : vector<22x22xf32> to vector<19x22xf32>
    %523 = vector.extract_strided_slice %18 {offsets = [3, 0], sizes = [19, 22], strides = [1, 1]} : vector<22x22xf32> to vector<19x22xf32>
    %524 = arith.subf %521, %520 : vector<19x22xf32>
    %525 = arith.subf %523, %522 : vector<19x22xf32>
    %526 = arith.mulf %524, %524 : vector<19x22xf32>
    %cst_69 = arith.constant 8.100000e-01 : f32
    %527 = vector.broadcast %cst_69 : f32 to vector<19x22xf32>
    %528 = arith.addf %527, %526 : vector<19x22xf32>
    %529 = math.rsqrt %528 : vector<19x22xf32>
    %530 = arith.mulf %524, %529 : vector<19x22xf32>
    %531 = arith.mulf %525, %525 : vector<19x22xf32>
    %cst_70 = arith.constant 8.100000e-01 : f32
    %532 = vector.broadcast %cst_70 : f32 to vector<19x22xf32>
    %533 = arith.addf %532, %531 : vector<19x22xf32>
    %534 = math.rsqrt %533 : vector<19x22xf32>
    %535 = arith.mulf %525, %534 : vector<19x22xf32>
    %536 = arith.subf %530, %535 : vector<19x22xf32>
    %537 = arith.mulf %536, %536 : vector<19x22xf32>
    %cst_71 = arith.constant 1.000000e-01 : f32
    %538 = vector.broadcast %cst_71 : f32 to vector<19x22xf32>
    %539 = arith.addf %538, %537 : vector<19x22xf32>
    %540 = tpu.reciprocal %539 {approx = true} : vector<19x22xf32> -> vector<19x22xf32>
    %541 = vector.extract_strided_slice %540 {offsets = [3, 3], sizes = [16, 16], strides = [1, 1]} : vector<19x22xf32> to vector<16x16xf32>
    %542 = vector.extract_strided_slice %540 {offsets = [0, 3], sizes = [16, 16], strides = [1, 1]} : vector<19x22xf32> to vector<16x16xf32>
    %543 = arith.addf %541, %542 : vector<16x16xf32>
    %544 = arith.addf %519, %543 : vector<16x16xf32>
    %545 = vector.extract_strided_slice %17 {offsets = [0, 0], sizes = [19, 21], strides = [1, 1]} : vector<22x22xf32> to vector<19x21xf32>
    %546 = vector.extract_strided_slice %17 {offsets = [3, 1], sizes = [19, 21], strides = [1, 1]} : vector<22x22xf32> to vector<19x21xf32>
    %547 = vector.extract_strided_slice %18 {offsets = [0, 0], sizes = [19, 21], strides = [1, 1]} : vector<22x22xf32> to vector<19x21xf32>
    %548 = vector.extract_strided_slice %18 {offsets = [3, 1], sizes = [19, 21], strides = [1, 1]} : vector<22x22xf32> to vector<19x21xf32>
    %549 = arith.subf %546, %545 : vector<19x21xf32>
    %550 = arith.subf %548, %547 : vector<19x21xf32>
    %551 = arith.mulf %549, %549 : vector<19x21xf32>
    %cst_72 = arith.constant 8.100000e-01 : f32
    %552 = vector.broadcast %cst_72 : f32 to vector<19x21xf32>
    %553 = arith.addf %552, %551 : vector<19x21xf32>
    %554 = math.rsqrt %553 : vector<19x21xf32>
    %555 = arith.mulf %549, %554 : vector<19x21xf32>
    %556 = arith.mulf %550, %550 : vector<19x21xf32>
    %cst_73 = arith.constant 8.100000e-01 : f32
    %557 = vector.broadcast %cst_73 : f32 to vector<19x21xf32>
    %558 = arith.addf %557, %556 : vector<19x21xf32>
    %559 = math.rsqrt %558 : vector<19x21xf32>
    %560 = arith.mulf %550, %559 : vector<19x21xf32>
    %561 = arith.subf %555, %560 : vector<19x21xf32>
    %562 = arith.mulf %561, %561 : vector<19x21xf32>
    %cst_74 = arith.constant 1.000000e-01 : f32
    %563 = vector.broadcast %cst_74 : f32 to vector<19x21xf32>
    %564 = arith.addf %563, %562 : vector<19x21xf32>
    %565 = tpu.reciprocal %564 {approx = true} : vector<19x21xf32> -> vector<19x21xf32>
    %566 = vector.extract_strided_slice %565 {offsets = [3, 3], sizes = [16, 16], strides = [1, 1]} : vector<19x21xf32> to vector<16x16xf32>
    %567 = vector.extract_strided_slice %565 {offsets = [0, 2], sizes = [16, 16], strides = [1, 1]} : vector<19x21xf32> to vector<16x16xf32>
    %568 = arith.addf %566, %567 : vector<16x16xf32>
    %569 = arith.addf %544, %568 : vector<16x16xf32>
    %570 = vector.extract_strided_slice %17 {offsets = [0, 0], sizes = [19, 20], strides = [1, 1]} : vector<22x22xf32> to vector<19x20xf32>
    %571 = vector.extract_strided_slice %17 {offsets = [3, 2], sizes = [19, 20], strides = [1, 1]} : vector<22x22xf32> to vector<19x20xf32>
    %572 = vector.extract_strided_slice %18 {offsets = [0, 0], sizes = [19, 20], strides = [1, 1]} : vector<22x22xf32> to vector<19x20xf32>
    %573 = vector.extract_strided_slice %18 {offsets = [3, 2], sizes = [19, 20], strides = [1, 1]} : vector<22x22xf32> to vector<19x20xf32>
    %574 = arith.subf %571, %570 : vector<19x20xf32>
    %575 = arith.subf %573, %572 : vector<19x20xf32>
    %576 = arith.mulf %574, %574 : vector<19x20xf32>
    %cst_75 = arith.constant 8.100000e-01 : f32
    %577 = vector.broadcast %cst_75 : f32 to vector<19x20xf32>
    %578 = arith.addf %577, %576 : vector<19x20xf32>
    %579 = math.rsqrt %578 : vector<19x20xf32>
    %580 = arith.mulf %574, %579 : vector<19x20xf32>
    %581 = arith.mulf %575, %575 : vector<19x20xf32>
    %cst_76 = arith.constant 8.100000e-01 : f32
    %582 = vector.broadcast %cst_76 : f32 to vector<19x20xf32>
    %583 = arith.addf %582, %581 : vector<19x20xf32>
    %584 = math.rsqrt %583 : vector<19x20xf32>
    %585 = arith.mulf %575, %584 : vector<19x20xf32>
    %586 = arith.subf %580, %585 : vector<19x20xf32>
    %587 = arith.mulf %586, %586 : vector<19x20xf32>
    %cst_77 = arith.constant 1.000000e-01 : f32
    %588 = vector.broadcast %cst_77 : f32 to vector<19x20xf32>
    %589 = arith.addf %588, %587 : vector<19x20xf32>
    %590 = tpu.reciprocal %589 {approx = true} : vector<19x20xf32> -> vector<19x20xf32>
    %591 = vector.extract_strided_slice %590 {offsets = [3, 3], sizes = [16, 16], strides = [1, 1]} : vector<19x20xf32> to vector<16x16xf32>
    %592 = vector.extract_strided_slice %590 {offsets = [0, 1], sizes = [16, 16], strides = [1, 1]} : vector<19x20xf32> to vector<16x16xf32>
    %593 = arith.addf %591, %592 : vector<16x16xf32>
    %594 = arith.addf %569, %593 : vector<16x16xf32>
    %595 = vector.extract_strided_slice %17 {offsets = [0, 0], sizes = [19, 19], strides = [1, 1]} : vector<22x22xf32> to vector<19x19xf32>
    %596 = vector.extract_strided_slice %17 {offsets = [3, 3], sizes = [19, 19], strides = [1, 1]} : vector<22x22xf32> to vector<19x19xf32>
    %597 = vector.extract_strided_slice %18 {offsets = [0, 0], sizes = [19, 19], strides = [1, 1]} : vector<22x22xf32> to vector<19x19xf32>
    %598 = vector.extract_strided_slice %18 {offsets = [3, 3], sizes = [19, 19], strides = [1, 1]} : vector<22x22xf32> to vector<19x19xf32>
    %599 = arith.subf %596, %595 : vector<19x19xf32>
    %600 = arith.subf %598, %597 : vector<19x19xf32>
    %601 = arith.mulf %599, %599 : vector<19x19xf32>
    %cst_78 = arith.constant 8.100000e-01 : f32
    %602 = vector.broadcast %cst_78 : f32 to vector<19x19xf32>
    %603 = arith.addf %602, %601 : vector<19x19xf32>
    %604 = math.rsqrt %603 : vector<19x19xf32>
    %605 = arith.mulf %599, %604 : vector<19x19xf32>
    %606 = arith.mulf %600, %600 : vector<19x19xf32>
    %cst_79 = arith.constant 8.100000e-01 : f32
    %607 = vector.broadcast %cst_79 : f32 to vector<19x19xf32>
    %608 = arith.addf %607, %606 : vector<19x19xf32>
    %609 = math.rsqrt %608 : vector<19x19xf32>
    %610 = arith.mulf %600, %609 : vector<19x19xf32>
    %611 = arith.subf %605, %610 : vector<19x19xf32>
    %612 = arith.mulf %611, %611 : vector<19x19xf32>
    %cst_80 = arith.constant 1.000000e-01 : f32
    %613 = vector.broadcast %cst_80 : f32 to vector<19x19xf32>
    %614 = arith.addf %613, %612 : vector<19x19xf32>
    %615 = tpu.reciprocal %614 {approx = true} : vector<19x19xf32> -> vector<19x19xf32>
    %616 = vector.extract_strided_slice %615 {offsets = [3, 3], sizes = [16, 16], strides = [1, 1]} : vector<19x19xf32> to vector<16x16xf32>
    %617 = vector.extract_strided_slice %615 {offsets = [0, 0], sizes = [16, 16], strides = [1, 1]} : vector<19x19xf32> to vector<16x16xf32>
    %618 = arith.addf %616, %617 : vector<16x16xf32>
    %619 = arith.addf %594, %618 : vector<16x16xf32>
    %cst_81 = arith.constant 1.000000e-01 : f32
    %620 = vector.broadcast %cst_81 : f32 to vector<16x16xf32>
    %621 = arith.mulf %620, %619 : vector<16x16xf32>
    %cst_82 = arith.constant 4.800000e+01 : f32
    %622 = vector.broadcast %cst_82 : f32 to vector<16x16xf32>
    %623 = arith.subf %622, %621 : vector<16x16xf32>
    %624 = math.absf %623 : vector<16x16xf32>
    %cst_83 = arith.constant 0.00999999977 : f32
    %625 = vector.broadcast %cst_83 : f32 to vector<16x16xf32>
    %626 = arith.addf %624, %625 : vector<16x16xf32>
    %627 = math.log %626 : vector<16x16xf32>
    %cst_84 = arith.constant 4.000000e-01 : f32
    %628 = vector.broadcast %cst_84 : f32 to vector<16x16xf32>
    %629 = arith.mulf %628, %627 : vector<16x16xf32>
    %630 = math.exp %629 : vector<16x16xf32>
    %c0_85 = arith.constant 0 : index
    %c0_86 = arith.constant 0 : index
    %c0_87 = arith.constant 0 : index
    %631 = vector.load %arg4[%c0_85, %c0_86, %c0_87] : memref<1x16x16xf32, #tpu.memory_space<vmem>>, vector<1x16x16xf32>
    %632 = vector.shape_cast %631 : vector<1x16x16xf32> to vector<16x16xf32>
    %633 = vector.shape_cast %630 : vector<16x16xf32> to vector<1x16x16xf32>
    tpu.vector_store %arg4[%c0_85, %c0_86, %c0_87], %633 {strides = array<i32>} : memref<1x16x16xf32, #tpu.memory_space<vmem>>, vector<1x16x16xf32>,
    return
  }
  func.func @transform_2(%arg0: i32, %arg1: i32) -> (i32, i32, i32) {
    %c0_i32 = arith.constant 0 : i32
    %c0_i32_0 = arith.constant 0 : i32
    return %arg0, %arg1, %c0_i32 : i32, i32, i32
  }
}

</mosaic_0001>

<llo_original>
// kernel: tpu_custom_call.1
$region0: #{tpu_custom_call.1}
  #allocation0 [shape = 'u32[]', space=smem, size = 0x4, offset = 0x4, fixed_abs, tag = 'smem constant byte address 0x4 - core index']
  #allocation1 [shape = 'u32[72,128]{1,0:T(1,128)}', space=vmem, size = 0x9000, scoped, tag = 'internal scratch']
  #allocation2 [shape = 'f32[22,22]{1,0:T(8,128)}', space=vmem, size = 0x3000, scoped, tag = 'scratch operand']
  #allocation3 [shape = 'f32[22,22]{1,0:T(8,128)}', space=vmem, size = 0x3000, scoped, tag = 'scratch operand']
  #allocation4 [shape = 's32[2]{0}', space=sflag, size = 0x8, scoped, tag = 'scratch operand']
  #allocation7 [shape = 's32[]', space=sflag, size = 0x4, offset = 0, fixed_abs, tag = 'sflag constant byte address 0x0 - dummy sync flag']
  #allocation8 [shape = 's32[]', space=sflag, size = 0x4, offset = 0, fixed_abs, tag = 'sflag constant byte address 0x0 - dummy sync flag']
  %s0 = inlined_call_operand.vmem [shape: f32[2,22,22], index: 0, kind: input, shape index: {}]
  %s1 = inlined_call_operand.vmem [shape: f32[2,22,22], index: 1, kind: input, shape index: {}]
  %s2 = inlined_call_operand.hbm [shape: f32[2,16,16], index: 2, kind: output, shape index: {}]
  %s3 = sld [smem:[#allocation0]]
  $region69: #{tpu_custom_call.1} parent=0
    _
  %s5 = ssub.s32 1, %s3
  %s6 = scalar_select 0, %s5, %s3
  $region1: #{tpu_custom_call.1} parent=0
    #allocation5 [shape = 'u8[16384]{0}', space=vmem, size = 0x4000, scoped, tag = 'output window, operand 0']
    #allocation6 [shape = 's32[2]{0}', space=sflag, size = 0x8, scoped, tag = 'scoped memory for tpu_custom_call.1']
    %7 = vsyncpa [#allocation6], 0
    %s8 = scalar_lea.sflag [#allocation6], 1
    %9 = vsyncpa %s8, 0
    loop: start=0, step=1, limit=3
    $region2: #{tpu_custom_call.1} parent=1 // loop_pre_header
      _
    $region3: #{tpu_custom_call.1} parent=1 // loop_header
      %s11 = sphi 0, %s15
      %p12 = scmp.ge.s32.totalorder %s11, 3
      %s17 = sphi 0, %s27
      %s18 = sphi 0, %s23
      %s19 = sphi 0, %s17
      %s20 = sphi 0, %s18
      %s32 = sphi 0, %s34
      %s35 = sphi 0, %s32
      %s45 = sphi 0, %s35
    $region4: #{tpu_custom_call.1} parent=1 // loop_header_branch
      %14 = sbr.rel (%p12) target = $region8
    $region5: #{tpu_custom_call.1} parent=1 // loop_body
      %s16 = ssub.s32 %s11, 1
      %s21 = sadd.s32 1, %s18
      %p22 = scmp.ge.s32.totalorder %s21, 1
      %s23 = scalar_select %p22, 0, %s21
      %s24 = sadd.s32 1, %s17
      %s25 = scalar_select %p22, %s24, %s17
      %p26 = scmp.ge.s32.totalorder %s25, 2
      %s27 = scalar_select %p26, 0, %s25
      %s28 = ssub.s32 %s17, %s27
      %s29 = ssub.s32 %s18, %s23
      %s30 = sor.u32 %s28, %s29
      %p31 = scmp.eq.s32.totalorder %s30, 0
      %s33 = sadd.s32 %s32, 1
      %s34 = scalar_select %p31, %s32, %s33
      %p36 = pneg %p31
      %p37 = scmp.eq.s32.totalorder %s11, 1
      %p38 = por %p36, %p37
      %p39 = scmp.ne.s32.totalorder %s32, %s35
      %p40 = scmp.eq.s32.totalorder %s11, 0
      %p41 = por %p39, %p40
      %p42 = scmp.ne.s32.totalorder %s32, %s35
      %p43 = scmp.eq.s32.totalorder %s16, 1
      %p44 = por %p42, %p43
      %p46 = scmp.ne.s32.totalorder %s35, %s45
      %p47 = scmp.eq.s32.totalorder %s16, 0
      %p48 = por %p46, %p47
      %p49 = scmp.lt.s32.totalorder %s11, 2
      // Predicated region
      $region9: #{tpu_custom_call.1} parent=5 // pred_check
        %p50 = pneg %p49
      $region10: #{tpu_custom_call.1} parent=5 // pred_check_branch
        %52 = sbr.rel (%p50) target = $region12
      $region11: #{tpu_custom_call.1} parent=5 // pred_region
        %p53 = pneg %p41
        %p54 = pneg %p38
        %s55 = sand.u32 %s32, 1
        %s56 = scalar_lea.sflag [#allocation6], %s55
        %s57 = sand.u32 %s32, 1
        %s58 = smul.addr %s57, 16
        %s59 = scalar_lea.vmem [#allocation5], %s58
        %s60 = smul.u32 2, %s18
        %s61 = smul.u32 %s18, 16
        %s62 = smul.u32 %s17, 24
        %s63 = sadd.s32 %s61, %s62
        %s64 = scalar_lea.vmem %s0, %s63
        // Predicated region
        $region13: #{tpu_custom_call.1} parent=11 // pred_check
          _
        $region14: #{tpu_custom_call.1} parent=11 // pred_check_branch
          %66 = sbr.rel (0) target = $region16
        $region15: #{tpu_custom_call.1} parent=11 // pred_region
          %s67 = scalar_lea.vmem %s64, 16
          %s68 = scalar_lea.vmem [#allocation2], 16
          loop: start=0, step=1, limit=1
          $region17: #{tpu_custom_call.1} parent=15 // loop_pre_header
            _
          $region18: #{tpu_custom_call.1} parent=15 // loop_header
            %s70 = sphi 0, %s74
            %p71 = scmp.ge.s32.totalorder %s70, 1
            %s75 = sphi %s64, %s64
            %s76 = sphi [#allocation2], [#allocation2]
          $region19: #{tpu_custom_call.1} parent=15 // loop_header_branch
            %73 = sbr.rel (%p71) target = $region23
          $region20: #{tpu_custom_call.1} parent=15 // loop_body
            %v77 = vld [vmem:[%s75] sm:$0xff]
            %78 = vst [vmem:[%s76] sm:$0xff] %v77
            %v79 = vld [vmem:[%s75 + $0x8] sm:$0xff]
            %80 = vst [vmem:[%s76 + $0x8] sm:$0xff] %v79
          $region21: #{tpu_custom_call.1} parent=15 // loop_footer
            %s74 = sadd.s32 1, %s70
          $region22: #{tpu_custom_call.1} parent=15 // loop_footer_branch
            %69 = sbr.rel target = $region18
          $region23: #{tpu_custom_call.1} parent=15 // loop_exit
            _
          %s82 = ssub.s32 64, 1
          loop: start=0, step=1, limit=1
          $region24: #{tpu_custom_call.1} parent=15 // loop_pre_header
            _
          $region25: #{tpu_custom_call.1} parent=15 // loop_header
            %s84 = sphi 0, %s88
            %p85 = scmp.ge.s32.totalorder %s84, 1
            %s89 = sphi %s67, %s67
            %s90 = sphi %s68, %s68
          $region26: #{tpu_custom_call.1} parent=15 // loop_header_branch
            %87 = sbr.rel (%p85) target = $region30
          $region27: #{tpu_custom_call.1} parent=15 // loop_body
            %v91 = vld [vmem:[%s89] sm:%s82]
            %92 = vst [vmem:[%s90] sm:%s82] %v91
          $region28: #{tpu_custom_call.1} parent=15 // loop_footer
            %s88 = sadd.s32 1, %s84
          $region29: #{tpu_custom_call.1} parent=15 // loop_footer_branch
            %83 = sbr.rel target = $region25
          $region30: #{tpu_custom_call.1} parent=15 // loop_exit
            _
        $region16: #{tpu_custom_call.1} parent=11 // pred_fallthru
          _
        // Predicated region
        $region31: #{tpu_custom_call.1} parent=11 // pred_check
          _
        $region32: #{tpu_custom_call.1} parent=11 // pred_check_branch
          %95 = sbr.rel (0) target = $region34
        $region33: #{tpu_custom_call.1} parent=11 // pred_region
          %96 = vsyncadd [#allocation4], 352
        $region34: #{tpu_custom_call.1} parent=11 // pred_fallthru
          _
        %s97 = scalar_lea.vmem %s1, %s63
        %s98 = scalar_lea.sflag [#allocation4], 1
        // Predicated region
        $region35: #{tpu_custom_call.1} parent=11 // pred_check
          _
        $region36: #{tpu_custom_call.1} parent=11 // pred_check_branch
          %100 = sbr.rel (0) target = $region38
        $region37: #{tpu_custom_call.1} parent=11 // pred_region
          %s101 = scalar_lea.vmem %s97, 16
          %s102 = scalar_lea.vmem [#allocation3], 16
          loop: start=0, step=1, limit=1
          $region39: #{tpu_custom_call.1} parent=37 // loop_pre_header
            _
          $region40: #{tpu_custom_call.1} parent=37 // loop_header
            %s104 = sphi 0, %s108
            %p105 = scmp.ge.s32.totalorder %s104, 1
            %s109 = sphi %s97, %s97
            %s110 = sphi [#allocation3], [#allocation3]
          $region41: #{tpu_custom_call.1} parent=37 // loop_header_branch
            %107 = sbr.rel (%p105) target = $region45
          $region42: #{tpu_custom_call.1} parent=37 // loop_body
            %v111 = vld [vmem:[%s109] sm:$0xff]
            %112 = vst [vmem:[%s110] sm:$0xff] %v111
            %v113 = vld [vmem:[%s109 + $0x8] sm:$0xff]
            %114 = vst [vmem:[%s110 + $0x8] sm:$0xff] %v113
          $region43: #{tpu_custom_call.1} parent=37 // loop_footer
            %s108 = sadd.s32 1, %s104
          $region44: #{tpu_custom_call.1} parent=37 // loop_footer_branch
            %103 = sbr.rel target = $region40
          $region45: #{tpu_custom_call.1} parent=37 // loop_exit
            _
          %s116 = ssub.s32 64, 1
          loop: start=0, step=1, limit=1
          $region46: #{tpu_custom_call.1} parent=37 // loop_pre_header
            _
          $region47: #{tpu_custom_call.1} parent=37 // loop_header
            %s118 = sphi 0, %s122
            %p119 = scmp.ge.s32.totalorder %s118, 1
            %s123 = sphi %s101, %s101
            %s124 = sphi %s102, %s102
          $region48: #{tpu_custom_call.1} parent=37 // loop_header_branch
            %121 = sbr.rel (%p119) target = $region52
          $region49: #{tpu_custom_call.1} parent=37 // loop_body
            %v125 = vld [vmem:[%s123] sm:%s116]
            %126 = vst [vmem:[%s124] sm:%s116] %v125
          $region50: #{tpu_custom_call.1} parent=37 // loop_footer
            %s122 = sadd.s32 1, %s118
          $region51: #{tpu_custom_call.1} parent=37 // loop_footer_branch
            %117 = sbr.rel target = $region47
          $region52: #{tpu_custom_call.1} parent=37 // loop_exit
            _
        $region38: #{tpu_custom_call.1} parent=11 // pred_fallthru
          _
        // Predicated region
        $region53: #{tpu_custom_call.1} parent=11 // pred_check
          _
        $region54: #{tpu_custom_call.1} parent=11 // pred_check_branch
          %129 = sbr.rel (0) target = $region56
        $region55: #{tpu_custom_call.1} parent=11 // pred_region
          %130 = vsyncadd %s98, 352
        $region56: #{tpu_custom_call.1} parent=11 // pred_fallthru
          _
        %s131 = smul.u32 22, 1
        %s132 = sshll.u32 %s131, 4
        %133 = dma.done [#allocation4], %s132
        %s134 = sshll.u32 %s131, 4
        %135 = dma.done %s98, %s134
        %v136 = vld [vmem:[#allocation2] sm:$0xff]
        %v137 = vld [vmem:[#allocation2 + $0x8] sm:$0xff]
        %v138 = vld [vmem:[#allocation2 + $0x10] sm:$0x3f]
        %v139 = vld [vmem:[#allocation3] sm:$0xff]
        %v140 = vld [vmem:[#allocation3 + $0x8] sm:$0xff]
        %v141 = vld [vmem:[#allocation3 + $0x10] sm:$0x3f]
        %145 = vrot.lane.b32.xlu0 %v136, 1
        %v146 = vpop.permute.xlu0 %145
        %147 = vrot.lane.b32.xlu0 %v137, 1
        %v148 = vpop.permute.xlu0 %147
        %149 = vrot.lane.b32.xlu0 %v138, 1
        %v150 = vpop.permute.xlu0 %149
        %v154 = vsub.f32 %v136, %v146
        %v155 = vsub.f32 %v137, %v148
        %v156 = vsub.f32 %v138, %v150
        %160 = vrot.lane.b32.xlu0 %v139, 1
        %v161 = vpop.permute.xlu0 %160
        %162 = vrot.lane.b32.xlu0 %v140, 1
        %v163 = vpop.permute.xlu0 %162
        %164 = vrot.lane.b32.xlu0 %v141, 1
        %v165 = vpop.permute.xlu0 %164
        %v169 = vsub.f32 %v139, %v161
        %v170 = vsub.f32 %v140, %v163
        %v171 = vsub.f32 %v141, %v165
        %v172 = vmul.f32 %v154, %v154
        %v173 = vmul.f32 %v155, %v155
        %v174 = vmul.f32 %v156, %v156
        %v175 = vadd.f32 %v172, 0.81
        %v176 = vadd.f32 %v173, 0.81
        %v177 = vadd.f32 %v174, 0.81
        %v178 = vrsqrt.pop %v175
        %v179 = vmul.f32 %v178, %v175
        %v180 = vmul.f32 %v179, %v178
        %v181 = vmul.f32 0.5, %v180
        %v182 = vsub.f32 1.5, %v181
        %v183 = vmul.f32 %v178, %v182
        %vm184 = vweird.f32 %v175
        %vm185 = vweird.f32 %v178
        %vm186 = vmor %vm184, %vm185
        %v187 = vsel %vm186, %v178, %v183
        %v188 = vrsqrt.pop %v176
        %v189 = vmul.f32 %v188, %v176
        %v190 = vmul.f32 %v189, %v188
        %v191 = vmul.f32 0.5, %v190
        %v192 = vsub.f32 1.5, %v191
        %v193 = vmul.f32 %v188, %v192
        %vm194 = vweird.f32 %v176
        %vm195 = vweird.f32 %v188
        %vm196 = vmor %vm194, %vm195
        %v197 = vsel %vm196, %v188, %v193
        %v198 = vrsqrt.pop %v177
        %v199 = vmul.f32 %v198, %v177
        %v200 = vmul.f32 %v199, %v198
        %v201 = vmul.f32 0.5, %v200
        %v202 = vsub.f32 1.5, %v201
        %v203 = vmul.f32 %v198, %v202
        %vm204 = vweird.f32 %v177
        %vm205 = vweird.f32 %v198
        %vm206 = vmor %vm204, %vm205
        %v207 = vsel %vm206, %v198, %v203
        %v208 = vmul.f32 %v154, %v187
        %v209 = vmul.f32 %v155, %v197
        %v210 = vmul.f32 %v156, %v207
        %v211 = vmul.f32 %v169, %v169
        %v212 = vmul.f32 %v170, %v170
        %v213 = vmul.f32 %v171, %v171
        %v214 = vadd.f32 %v211, 0.81
        %v215 = vadd.f32 %v212, 0.81
        %v216 = vadd.f32 %v213, 0.81
        %v217 = vrsqrt.pop %v214
        %v218 = vmul.f32 %v217, %v214
        %v219 = vmul.f32 %v218, %v217
        %v220 = vmul.f32 0.5, %v219
        %v221 = vsub.f32 1.5, %v220
        %v222 = vmul.f32 %v217, %v221
        %vm223 = vweird.f32 %v214
        %vm224 = vweird.f32 %v217
        %vm225 = vmor %vm223, %vm224
        %v226 = vsel %vm225, %v217, %v222
        %v227 = vrsqrt.pop %v215
        %v228 = vmul.f32 %v227, %v215
        %v229 = vmul.f32 %v228, %v227
        %v230 = vmul.f32 0.5, %v229
        %v231 = vsub.f32 1.5, %v230
        %v232 = vmul.f32 %v227, %v231
        %vm233 = vweird.f32 %v215
        %vm234 = vweird.f32 %v227
        %vm235 = vmor %vm233, %vm234
        %v236 = vsel %vm235, %v227, %v232
        %v237 = vrsqrt.pop %v216
        %v238 = vmul.f32 %v237, %v216
        %v239 = vmul.f32 %v238, %v237
        %v240 = vmul.f32 0.5, %v239
        %v241 = vsub.f32 1.5, %v240
        %v242 = vmul.f32 %v237, %v241
        %vm243 = vweird.f32 %v216
        %vm244 = vweird.f32 %v237
        %vm245 = vmor %vm243, %vm244
        %v246 = vsel %vm245, %v237, %v242
        %v247 = vmul.f32 %v169, %v226
        %v248 = vmul.f32 %v170, %v236
        %v249 = vmul.f32 %v171, %v246
        %v250 = vsub.f32 %v208, %v247
        %v251 = vsub.f32 %v209, %v248
        %v252 = vsub.f32 %v210, %v249
        %v253 = vmul.f32 %v250, %v250
        %v254 = vmul.f32 %v251, %v251
        %v255 = vmul.f32 %v252, %v252
        %v256 = vadd.f32 %v253, 0.1
        %v257 = vadd.f32 %v254, 0.1
        %v258 = vadd.f32 %v255, 0.1
        %v259 = vrcp.pop %v256
        %v260 = vrcp.pop %v257
        %v261 = vrcp.pop %v258
        %265 = vrot.lane.b32.xlu0 %v259, 1
        %v266 = vpop.permute.xlu0 %265
        %267 = vrot.lane.b32.xlu0 %v260, 1
        %v268 = vpop.permute.xlu0 %267
        %269 = vrot.lane.b32.xlu0 %v261, 1
        %v270 = vpop.permute.xlu0 %269
        %v274 = vadd.f32 %v259, %v266
        %v275 = vadd.f32 %v260, %v268
        %v276 = vadd.f32 %v261, %v270
        %v277 = vadd.f32 %v274, 0.0
        %v278 = vadd.f32 %v275, 0.0
        %v279 = vadd.f32 %v276, 0.0
        %280 = vrot.lane.b32.xlu0 %v136, 2
        %v281 = vpop.permute.xlu0 %280
        %282 = vrot.lane.b32.xlu0 %v137, 2
        %v283 = vpop.permute.xlu0 %282
        %284 = vrot.lane.b32.xlu0 %v138, 2
        %v285 = vpop.permute.xlu0 %284
        %v289 = vsub.f32 %v136, %v281
        %v290 = vsub.f32 %v137, %v283
        %v291 = vsub.f32 %v138, %v285
        %292 = vrot.lane.b32.xlu0 %v139, 2
        %v293 = vpop.permute.xlu0 %292
        %294 = vrot.lane.b32.xlu0 %v140, 2
        %v295 = vpop.permute.xlu0 %294
        %296 = vrot.lane.b32.xlu0 %v141, 2
        %v297 = vpop.permute.xlu0 %296
        %v301 = vsub.f32 %v139, %v293
        %v302 = vsub.f32 %v140, %v295
        %v303 = vsub.f32 %v141, %v297
        %v304 = vmul.f32 %v289, %v289
        %v305 = vmul.f32 %v290, %v290
        %v306 = vmul.f32 %v291, %v291
        %v307 = vadd.f32 %v304, 0.81
        %v308 = vadd.f32 %v305, 0.81
        %v309 = vadd.f32 %v306, 0.81
        %v310 = vrsqrt.pop %v307
        %v311 = vmul.f32 %v310, %v307
        %v312 = vmul.f32 %v311, %v310
        %v313 = vmul.f32 0.5, %v312
        %v314 = vsub.f32 1.5, %v313
        %v315 = vmul.f32 %v310, %v314
        %vm316 = vweird.f32 %v307
        %vm317 = vweird.f32 %v310
        %vm318 = vmor %vm316, %vm317
        %v319 = vsel %vm318, %v310, %v315
        %v320 = vrsqrt.pop %v308
        %v321 = vmul.f32 %v320, %v308
        %v322 = vmul.f32 %v321, %v320
        %v323 = vmul.f32 0.5, %v322
        %v324 = vsub.f32 1.5, %v323
        %v325 = vmul.f32 %v320, %v324
        %vm326 = vweird.f32 %v308
        %vm327 = vweird.f32 %v320
        %vm328 = vmor %vm326, %vm327
        %v329 = vsel %vm328, %v320, %v325
        %v330 = vrsqrt.pop %v309
        %v331 = vmul.f32 %v330, %v309
        %v332 = vmul.f32 %v331, %v330
        %v333 = vmul.f32 0.5, %v332
        %v334 = vsub.f32 1.5, %v333
        %v335 = vmul.f32 %v330, %v334
        %vm336 = vweird.f32 %v309
        %vm337 = vweird.f32 %v330
        %vm338 = vmor %vm336, %vm337
        %v339 = vsel %vm338, %v330, %v335
        %v340 = vmul.f32 %v289, %v319
        %v341 = vmul.f32 %v290, %v329
        %v342 = vmul.f32 %v291, %v339
        %v343 = vmul.f32 %v301, %v301
        %v344 = vmul.f32 %v302, %v302
        %v345 = vmul.f32 %v303, %v303
        %v346 = vadd.f32 %v343, 0.81
        %v347 = vadd.f32 %v344, 0.81
        %v348 = vadd.f32 %v345, 0.81
        %v349 = vrsqrt.pop %v346
        %v350 = vmul.f32 %v349, %v346
        %v351 = vmul.f32 %v350, %v349
        %v352 = vmul.f32 0.5, %v351
        %v353 = vsub.f32 1.5, %v352
        %v354 = vmul.f32 %v349, %v353
        %vm355 = vweird.f32 %v346
        %vm356 = vweird.f32 %v349
        %vm357 = vmor %vm355, %vm356
        %v358 = vsel %vm357, %v349, %v354
        %v359 = vrsqrt.pop %v347
        %v360 = vmul.f32 %v359, %v347
        %v361 = vmul.f32 %v360, %v359
        %v362 = vmul.f32 0.5, %v361
        %v363 = vsub.f32 1.5, %v362
        %v364 = vmul.f32 %v359, %v363
        %vm365 = vweird.f32 %v347
        %vm366 = vweird.f32 %v359
        %vm367 = vmor %vm365, %vm366
        %v368 = vsel %vm367, %v359, %v364
        %v369 = vrsqrt.pop %v348
        %v370 = vmul.f32 %v369, %v348
        %v371 = vmul.f32 %v370, %v369
        %v372 = vmul.f32 0.5, %v371
        %v373 = vsub.f32 1.5, %v372
        %v374 = vmul.f32 %v369, %v373
        %vm375 = vweird.f32 %v348
        %vm376 = vweird.f32 %v369
        %vm377 = vmor %vm375, %vm376
        %v378 = vsel %vm377, %v369, %v374
        %v379 = vmul.f32 %v301, %v358
        %v380 = vmul.f32 %v302, %v368
        %v381 = vmul.f32 %v303, %v378
        %v382 = vsub.f32 %v340, %v379
        %v383 = vsub.f32 %v341, %v380
        %v384 = vsub.f32 %v342, %v381
        %v385 = vmul.f32 %v382, %v382
        %v386 = vmul.f32 %v383, %v383
        %v387 = vmul.f32 %v384, %v384
        %v388 = vadd.f32 %v385, 0.1
        %v389 = vadd.f32 %v386, 0.1
        %v390 = vadd.f32 %v387, 0.1
        %v391 = vrcp.pop %v388
        %v392 = vrcp.pop %v389
        %v393 = vrcp.pop %v390
        %397 = vrot.lane.b32.xlu0 %v391, 2
        %v398 = vpop.permute.xlu0 %397
        %399 = vrot.lane.b32.xlu0 %v392, 2
        %v400 = vpop.permute.xlu0 %399
        %401 = vrot.lane.b32.xlu0 %v393, 2
        %v402 = vpop.permute.xlu0 %401
        %v406 = vadd.f32 %v391, %v398
        %v407 = vadd.f32 %v392, %v400
        %v408 = vadd.f32 %v393, %v402
        %412 = vrot.lane.b32.xlu0 %v406, 127
        %v413 = vpop.permute.xlu0 %412
        %414 = vrot.lane.b32.xlu0 %v407, 127
        %v415 = vpop.permute.xlu0 %414
        %416 = vrot.lane.b32.xlu0 %v408, 127
        %v417 = vpop.permute.xlu0 %416
        %v421 = vadd.f32 %v277, %v413
        %v422 = vadd.f32 %v278, %v415
        %v423 = vadd.f32 %v279, %v417
        %424 = vrot.lane.b32.xlu0 %v136, 3
        %v425 = vpop.permute.xlu0 %424
        %426 = vrot.lane.b32.xlu0 %v137, 3
        %v427 = vpop.permute.xlu0 %426
        %428 = vrot.lane.b32.xlu0 %v138, 3
        %v429 = vpop.permute.xlu0 %428
        %v433 = vsub.f32 %v136, %v425
        %v434 = vsub.f32 %v137, %v427
        %v435 = vsub.f32 %v138, %v429
        %436 = vrot.lane.b32.xlu0 %v139, 3
        %v437 = vpop.permute.xlu0 %436
        %438 = vrot.lane.b32.xlu0 %v140, 3
        %v439 = vpop.permute.xlu0 %438
        %440 = vrot.lane.b32.xlu0 %v141, 3
        %v441 = vpop.permute.xlu0 %440
        %v445 = vsub.f32 %v139, %v437
        %v446 = vsub.f32 %v140, %v439
        %v447 = vsub.f32 %v141, %v441
        %v448 = vmul.f32 %v433, %v433
        %v449 = vmul.f32 %v434, %v434
        %v450 = vmul.f32 %v435, %v435
        %v451 = vadd.f32 %v448, 0.81
        %v452 = vadd.f32 %v449, 0.81
        %v453 = vadd.f32 %v450, 0.81
        %v454 = vrsqrt.pop %v451
        %v455 = vmul.f32 %v454, %v451
        %v456 = vmul.f32 %v455, %v454
        %v457 = vmul.f32 0.5, %v456
        %v458 = vsub.f32 1.5, %v457
        %v459 = vmul.f32 %v454, %v458
        %vm460 = vweird.f32 %v451
        %vm461 = vweird.f32 %v454
        %vm462 = vmor %vm460, %vm461
        %v463 = vsel %vm462, %v454, %v459
        %v464 = vrsqrt.pop %v452
        %v465 = vmul.f32 %v464, %v452
        %v466 = vmul.f32 %v465, %v464
        %v467 = vmul.f32 0.5, %v466
        %v468 = vsub.f32 1.5, %v467
        %v469 = vmul.f32 %v464, %v468
        %vm470 = vweird.f32 %v452
        %vm471 = vweird.f32 %v464
        %vm472 = vmor %vm470, %vm471
        %v473 = vsel %vm472, %v464, %v469
        %v474 = vrsqrt.pop %v453
        %v475 = vmul.f32 %v474, %v453
        %v476 = vmul.f32 %v475, %v474
        %v477 = vmul.f32 0.5, %v476
        %v478 = vsub.f32 1.5, %v477
        %v479 = vmul.f32 %v474, %v478
        %vm480 = vweird.f32 %v453
        %vm481 = vweird.f32 %v474
        %vm482 = vmor %vm480, %vm481
        %v483 = vsel %vm482, %v474, %v479
        %v484 = vmul.f32 %v433, %v463
        %v485 = vmul.f32 %v434, %v473
        %v486 = vmul.f32 %v435, %v483
        %v487 = vmul.f32 %v445, %v445
        %v488 = vmul.f32 %v446, %v446
        %v489 = vmul.f32 %v447, %v447
        %v490 = vadd.f32 %v487, 0.81
        %v491 = vadd.f32 %v488, 0.81
        %v492 = vadd.f32 %v489, 0.81
        %v493 = vrsqrt.pop %v490
        %v494 = vmul.f32 %v493, %v490
        %v495 = vmul.f32 %v494, %v493
        %v496 = vmul.f32 0.5, %v495
        %v497 = vsub.f32 1.5, %v496
        %v498 = vmul.f32 %v493, %v497
        %vm499 = vweird.f32 %v490
        %vm500 = vweird.f32 %v493
        %vm501 = vmor %vm499, %vm500
        %v502 = vsel %vm501, %v493, %v498
        %v503 = vrsqrt.pop %v491
        %v504 = vmul.f32 %v503, %v491
        %v505 = vmul.f32 %v504, %v503
        %v506 = vmul.f32 0.5, %v505
        %v507 = vsub.f32 1.5, %v506
        %v508 = vmul.f32 %v503, %v507
        %vm509 = vweird.f32 %v491
        %vm510 = vweird.f32 %v503
        %vm511 = vmor %vm509, %vm510
        %v512 = vsel %vm511, %v503, %v508
        %v513 = vrsqrt.pop %v492
        %v514 = vmul.f32 %v513, %v492
        %v515 = vmul.f32 %v514, %v513
        %v516 = vmul.f32 0.5, %v515
        %v517 = vsub.f32 1.5, %v516
        %v518 = vmul.f32 %v513, %v517
        %vm519 = vweird.f32 %v492
        %vm520 = vweird.f32 %v513
        %vm521 = vmor %vm519, %vm520
        %v522 = vsel %vm521, %v513, %v518
        %v523 = vmul.f32 %v445, %v502
        %v524 = vmul.f32 %v446, %v512
        %v525 = vmul.f32 %v447, %v522
        %v526 = vsub.f32 %v484, %v523
        %v527 = vsub.f32 %v485, %v524
        %v528 = vsub.f32 %v486, %v525
        %v529 = vmul.f32 %v526, %v526
        %v530 = vmul.f32 %v527, %v527
        %v531 = vmul.f32 %v528, %v528
        %v532 = vadd.f32 %v529, 0.1
        %v533 = vadd.f32 %v530, 0.1
        %v534 = vadd.f32 %v531, 0.1
        %v535 = vrcp.pop %v532
        %v536 = vrcp.pop %v533
        %v537 = vrcp.pop %v534
        %541 = vrot.lane.b32.xlu0 %v535, 3
        %v542 = vpop.permute.xlu0 %541
        %543 = vrot.lane.b32.xlu0 %v536, 3
        %v544 = vpop.permute.xlu0 %543
        %545 = vrot.lane.b32.xlu0 %v537, 3
        %v546 = vpop.permute.xlu0 %545
        %v550 = vadd.f32 %v535, %v542
        %v551 = vadd.f32 %v536, %v544
        %v552 = vadd.f32 %v537, %v546
        %556 = vrot.lane.b32.xlu0 %v550, 126
        %v557 = vpop.permute.xlu0 %556
        %558 = vrot.lane.b32.xlu0 %v551, 126
        %v559 = vpop.permute.xlu0 %558
        %560 = vrot.lane.b32.xlu0 %v552, 126
        %v561 = vpop.permute.xlu0 %560
        %v565 = vadd.f32 %v421, %v557
        %v566 = vadd.f32 %v422, %v559
        %v567 = vadd.f32 %v423, %v561
        %vm568 = vcmask 1040384
        %v569 = vrot.slane %v136, 7
        %v570 = vrot.slane %v137, 7
        %v571 = vsel %vm568, %v569, %v570
        %v572 = vrot.slane %v138, 7
        %v573 = vsel %vm568, %v570, %v572
        %574 = vrot.lane.b32.xlu0 %v569, 125
        %v575 = vpop.permute.xlu0 %574
        %576 = vrot.lane.b32.xlu0 %v571, 125
        %v577 = vpop.permute.xlu0 %576
        %578 = vrot.lane.b32.xlu0 %v573, 125
        %v579 = vpop.permute.xlu0 %578
        %v583 = vsub.f32 %v136, %v575
        %v584 = vsub.f32 %v137, %v577
        %v585 = vsub.f32 %v138, %v579
        %v586 = vrot.slane %v139, 7
        %v587 = vrot.slane %v140, 7
        %v588 = vsel %vm568, %v586, %v587
        %v589 = vrot.slane %v141, 7
        %v590 = vsel %vm568, %v587, %v589
        %591 = vrot.lane.b32.xlu0 %v586, 125
        %v592 = vpop.permute.xlu0 %591
        %593 = vrot.lane.b32.xlu0 %v588, 125
        %v594 = vpop.permute.xlu0 %593
        %595 = vrot.lane.b32.xlu0 %v590, 125
        %v596 = vpop.permute.xlu0 %595
        %v600 = vsub.f32 %v139, %v592
        %v601 = vsub.f32 %v140, %v594
        %v602 = vsub.f32 %v141, %v596
        %v603 = vmul.f32 %v583, %v583
        %v604 = vmul.f32 %v584, %v584
        %v605 = vmul.f32 %v585, %v585
        %v606 = vadd.f32 %v603, 0.81
        %v607 = vadd.f32 %v604, 0.81
        %v608 = vadd.f32 %v605, 0.81
        %v609 = vrsqrt.pop %v606
        %v610 = vmul.f32 %v609, %v606
        %v611 = vmul.f32 %v610, %v609
        %v612 = vmul.f32 0.5, %v611
        %v613 = vsub.f32 1.5, %v612
        %v614 = vmul.f32 %v609, %v613
        %vm615 = vweird.f32 %v606
        %vm616 = vweird.f32 %v609
        %vm617 = vmor %vm615, %vm616
        %v618 = vsel %vm617, %v609, %v614
        %v619 = vrsqrt.pop %v607
        %v620 = vmul.f32 %v619, %v607
        %v621 = vmul.f32 %v620, %v619
        %v622 = vmul.f32 0.5, %v621
        %v623 = vsub.f32 1.5, %v622
        %v624 = vmul.f32 %v619, %v623
        %vm625 = vweird.f32 %v607
        %vm626 = vweird.f32 %v619
        %vm627 = vmor %vm625, %vm626
        %v628 = vsel %vm627, %v619, %v624
        %v629 = vrsqrt.pop %v608
        %v630 = vmul.f32 %v629, %v608
        %v631 = vmul.f32 %v630, %v629
        %v632 = vmul.f32 0.5, %v631
        %v633 = vsub.f32 1.5, %v632
        %v634 = vmul.f32 %v629, %v633
        %vm635 = vweird.f32 %v608
        %vm636 = vweird.f32 %v629
        %vm637 = vmor %vm635, %vm636
        %v638 = vsel %vm637, %v629, %v634
        %v639 = vmul.f32 %v583, %v618
        %v640 = vmul.f32 %v584, %v628
        %v641 = vmul.f32 %v585, %v638
        %v642 = vmul.f32 %v600, %v600
        %v643 = vmul.f32 %v601, %v601
        %v644 = vmul.f32 %v602, %v602
        %v645 = vadd.f32 %v642, 0.81
        %v646 = vadd.f32 %v643, 0.81
        %v647 = vadd.f32 %v644, 0.81
        %v648 = vrsqrt.pop %v645
        %v649 = vmul.f32 %v648, %v645
        %v650 = vmul.f32 %v649, %v648
        %v651 = vmul.f32 0.5, %v650
        %v652 = vsub.f32 1.5, %v651
        %v653 = vmul.f32 %v648, %v652
        %vm654 = vweird.f32 %v645
        %vm655 = vweird.f32 %v648
        %vm656 = vmor %vm654, %vm655
        %v657 = vsel %vm656, %v648, %v653
        %v658 = vrsqrt.pop %v646
        %v659 = vmul.f32 %v658, %v646
        %v660 = vmul.f32 %v659, %v658
        %v661 = vmul.f32 0.5, %v660
        %v662 = vsub.f32 1.5, %v661
        %v663 = vmul.f32 %v658, %v662
        %vm664 = vweird.f32 %v646
        %vm665 = vweird.f32 %v658
        %vm666 = vmor %vm664, %vm665
        %v667 = vsel %vm666, %v658, %v663
        %v668 = vrsqrt.pop %v647
        %v669 = vmul.f32 %v668, %v647
        %v670 = vmul.f32 %v669, %v668
        %v671 = vmul.f32 0.5, %v670
        %v672 = vsub.f32 1.5, %v671
        %v673 = vmul.f32 %v668, %v672
        %vm674 = vweird.f32 %v647
        %vm675 = vweird.f32 %v668
        %vm676 = vmor %vm674, %vm675
        %v677 = vsel %vm676, %v668, %v673
        %v678 = vmul.f32 %v600, %v657
        %v679 = vmul.f32 %v601, %v667
        %v680 = vmul.f32 %v602, %v677
        %v681 = vsub.f32 %v639, %v678
        %v682 = vsub.f32 %v640, %v679
        %v683 = vsub.f32 %v641, %v680
        %v684 = vmul.f32 %v681, %v681
        %v685 = vmul.f32 %v682, %v682
        %v686 = vmul.f32 %v683, %v683
        %v687 = vadd.f32 %v684, 0.1
        %v688 = vadd.f32 %v685, 0.1
        %v689 = vadd.f32 %v686, 0.1
        %v690 = vrcp.pop %v687
        %v691 = vrcp.pop %v688
        %v692 = vrcp.pop %v689
        %v696 = vrot.slane %v690, 7
        %v697 = vrot.slane %v691, 7
        %v698 = vsel %vm568, %v696, %v697
        %v699 = vrot.slane %v692, 7
        %v700 = vsel %vm568, %v697, %v699
        %701 = vrot.lane.b32.xlu0 %v696, 125
        %v702 = vpop.permute.xlu0 %701
        %703 = vrot.lane.b32.xlu0 %v698, 125
        %v704 = vpop.permute.xlu0 %703
        %705 = vrot.lane.b32.xlu0 %v700, 125
        %v706 = vpop.permute.xlu0 %705
        %v710 = vadd.f32 %v690, %v702
        %v711 = vadd.f32 %v691, %v704
        %v712 = vadd.f32 %v692, %v706
        %vm716 = vcmask 1046528
        %v717 = vrot.slane %v710, 1
        %v718 = vrot.slane %v711, 1
        %v719 = vsel %vm716, %v717, %v718
        %v720 = vrot.slane %v712, 1
        %v721 = vsel %vm716, %v718, %v720
        %722 = vrot.lane.b32.xlu0 %v719, 4
        %v723 = vpop.permute.xlu0 %722
        %724 = vrot.lane.b32.xlu0 %v721, 4
        %v725 = vpop.permute.xlu0 %724
        %726 = vrot.lane.b32.xlu0 %v720, 4
        %v727 = vpop.permute.xlu0 %726
        %v731 = vadd.f32 %v565, %v723
        %v732 = vadd.f32 %v566, %v725
        %v733 = vadd.f32 %v567, %v727
        %734 = vrot.lane.b32.xlu0 %v569, 126
        %v735 = vpop.permute.xlu0 %734
        %736 = vrot.lane.b32.xlu0 %v571, 126
        %v737 = vpop.permute.xlu0 %736
        %738 = vrot.lane.b32.xlu0 %v573, 126
        %v739 = vpop.permute.xlu0 %738
        %v743 = vsub.f32 %v136, %v735
        %v744 = vsub.f32 %v137, %v737
        %v745 = vsub.f32 %v138, %v739
        %746 = vrot.lane.b32.xlu0 %v586, 126
        %v747 = vpop.permute.xlu0 %746
        %748 = vrot.lane.b32.xlu0 %v588, 126
        %v749 = vpop.permute.xlu0 %748
        %750 = vrot.lane.b32.xlu0 %v590, 126
        %v751 = vpop.permute.xlu0 %750
        %v755 = vsub.f32 %v139, %v747
        %v756 = vsub.f32 %v140, %v749
        %v757 = vsub.f32 %v141, %v751
        %v758 = vmul.f32 %v743, %v743
        %v759 = vmul.f32 %v744, %v744
        %v760 = vmul.f32 %v745, %v745
        %v761 = vadd.f32 %v758, 0.81
        %v762 = vadd.f32 %v759, 0.81
        %v763 = vadd.f32 %v760, 0.81
        %v764 = vrsqrt.pop %v761
        %v765 = vmul.f32 %v764, %v761
        %v766 = vmul.f32 %v765, %v764
        %v767 = vmul.f32 0.5, %v766
        %v768 = vsub.f32 1.5, %v767
        %v769 = vmul.f32 %v764, %v768
        %vm770 = vweird.f32 %v761
        %vm771 = vweird.f32 %v764
        %vm772 = vmor %vm770, %vm771
        %v773 = vsel %vm772, %v764, %v769
        %v774 = vrsqrt.pop %v762
        %v775 = vmul.f32 %v774, %v762
        %v776 = vmul.f32 %v775, %v774
        %v777 = vmul.f32 0.5, %v776
        %v778 = vsub.f32 1.5, %v777
        %v779 = vmul.f32 %v774, %v778
        %vm780 = vweird.f32 %v762
        %vm781 = vweird.f32 %v774
        %vm782 = vmor %vm780, %vm781
        %v783 = vsel %vm782, %v774, %v779
        %v784 = vrsqrt.pop %v763
        %v785 = vmul.f32 %v784, %v763
        %v786 = vmul.f32 %v785, %v784
        %v787 = vmul.f32 0.5, %v786
        %v788 = vsub.f32 1.5, %v787
        %v789 = vmul.f32 %v784, %v788
        %vm790 = vweird.f32 %v763
        %vm791 = vweird.f32 %v784
        %vm792 = vmor %vm790, %vm791
        %v793 = vsel %vm792, %v784, %v789
        %v794 = vmul.f32 %v743, %v773
        %v795 = vmul.f32 %v744, %v783
        %v796 = vmul.f32 %v745, %v793
        %v797 = vmul.f32 %v755, %v755
        %v798 = vmul.f32 %v756, %v756
        %v799 = vmul.f32 %v757, %v757
        %v800 = vadd.f32 %v797, 0.81
        %v801 = vadd.f32 %v798, 0.81
        %v802 = vadd.f32 %v799, 0.81
        %v803 = vrsqrt.pop %v800
        %v804 = vmul.f32 %v803, %v800
        %v805 = vmul.f32 %v804, %v803
        %v806 = vmul.f32 0.5, %v805
        %v807 = vsub.f32 1.5, %v806
        %v808 = vmul.f32 %v803, %v807
        %vm809 = vweird.f32 %v800
        %vm810 = vweird.f32 %v803
        %vm811 = vmor %vm809, %vm810
        %v812 = vsel %vm811, %v803, %v808
        %v813 = vrsqrt.pop %v801
        %v814 = vmul.f32 %v813, %v801
        %v815 = vmul.f32 %v814, %v813
        %v816 = vmul.f32 0.5, %v815
        %v817 = vsub.f32 1.5, %v816
        %v818 = vmul.f32 %v813, %v817
        %vm819 = vweird.f32 %v801
        %vm820 = vweird.f32 %v813
        %vm821 = vmor %vm819, %vm820
        %v822 = vsel %vm821, %v813, %v818
        %v823 = vrsqrt.pop %v802
        %v824 = vmul.f32 %v823, %v802
        %v825 = vmul.f32 %v824, %v823
        %v826 = vmul.f32 0.5, %v825
        %v827 = vsub.f32 1.5, %v826
        %v828 = vmul.f32 %v823, %v827
        %vm829 = vweird.f32 %v802
        %vm830 = vweird.f32 %v823
        %vm831 = vmor %vm829, %vm830
        %v832 = vsel %vm831, %v823, %v828
        %v833 = vmul.f32 %v755, %v812
        %v834 = vmul.f32 %v756, %v822
        %v835 = vmul.f32 %v757, %v832
        %v836 = vsub.f32 %v794, %v833
        %v837 = vsub.f32 %v795, %v834
        %v838 = vsub.f32 %v796, %v835
        %v839 = vmul.f32 %v836, %v836
        %v840 = vmul.f32 %v837, %v837
        %v841 = vmul.f32 %v838, %v838
        %v842 = vadd.f32 %v839, 0.1
        %v843 = vadd.f32 %v840, 0.1
        %v844 = vadd.f32 %v841, 0.1
        %v845 = vrcp.pop %v842
        %v846 = vrcp.pop %v843
        %v847 = vrcp.pop %v844
        %v851 = vrot.slane %v845, 7
        %v852 = vrot.slane %v846, 7
        %v853 = vsel %vm568, %v851, %v852
        %v854 = vrot.slane %v847, 7
        %v855 = vsel %vm568, %v852, %v854
        %856 = vrot.lane.b32.xlu0 %v851, 126
        %v857 = vpop.permute.xlu0 %856
        %858 = vrot.lane.b32.xlu0 %v853, 126
        %v859 = vpop.permute.xlu0 %858
        %860 = vrot.lane.b32.xlu0 %v855, 126
        %v861 = vpop.permute.xlu0 %860
        %v865 = vadd.f32 %v845, %v857
        %v866 = vadd.f32 %v846, %v859
        %v867 = vadd.f32 %v847, %v861
        %v871 = vrot.slane %v865, 1
        %v872 = vrot.slane %v866, 1
        %v873 = vsel %vm716, %v871, %v872
        %v874 = vrot.slane %v867, 1
        %v875 = vsel %vm716, %v872, %v874
        %876 = vrot.lane.b32.xlu0 %v873, 3
        %v877 = vpop.permute.xlu0 %876
        %878 = vrot.lane.b32.xlu0 %v875, 3
        %v879 = vpop.permute.xlu0 %878
        %880 = vrot.lane.b32.xlu0 %v874, 3
        %v881 = vpop.permute.xlu0 %880
        %v885 = vadd.f32 %v731, %v877
        %v886 = vadd.f32 %v732, %v879
        %v887 = vadd.f32 %v733, %v881
        %888 = vrot.lane.b32.xlu0 %v569, 127
        %v889 = vpop.permute.xlu0 %888
        %890 = vrot.lane.b32.xlu0 %v571, 127
        %v891 = vpop.permute.xlu0 %890
        %892 = vrot.lane.b32.xlu0 %v573, 127
        %v893 = vpop.permute.xlu0 %892
        %v897 = vsub.f32 %v136, %v889
        %v898 = vsub.f32 %v137, %v891
        %v899 = vsub.f32 %v138, %v893
        %900 = vrot.lane.b32.xlu0 %v586, 127
        %v901 = vpop.permute.xlu0 %900
        %902 = vrot.lane.b32.xlu0 %v588, 127
        %v903 = vpop.permute.xlu0 %902
        %904 = vrot.lane.b32.xlu0 %v590, 127
        %v905 = vpop.permute.xlu0 %904
        %v909 = vsub.f32 %v139, %v901
        %v910 = vsub.f32 %v140, %v903
        %v911 = vsub.f32 %v141, %v905
        %v912 = vmul.f32 %v897, %v897
        %v913 = vmul.f32 %v898, %v898
        %v914 = vmul.f32 %v899, %v899
        %v915 = vadd.f32 %v912, 0.81
        %v916 = vadd.f32 %v913, 0.81
        %v917 = vadd.f32 %v914, 0.81
        %v918 = vrsqrt.pop %v915
        %v919 = vmul.f32 %v918, %v915
        %v920 = vmul.f32 %v919, %v918
        %v921 = vmul.f32 0.5, %v920
        %v922 = vsub.f32 1.5, %v921
        %v923 = vmul.f32 %v918, %v922
        %vm924 = vweird.f32 %v915
        %vm925 = vweird.f32 %v918
        %vm926 = vmor %vm924, %vm925
        %v927 = vsel %vm926, %v918, %v923
        %v928 = vrsqrt.pop %v916
        %v929 = vmul.f32 %v928, %v916
        %v930 = vmul.f32 %v929, %v928
        %v931 = vmul.f32 0.5, %v930
        %v932 = vsub.f32 1.5, %v931
        %v933 = vmul.f32 %v928, %v932
        %vm934 = vweird.f32 %v916
        %vm935 = vweird.f32 %v928
        %vm936 = vmor %vm934, %vm935
        %v937 = vsel %vm936, %v928, %v933
        %v938 = vrsqrt.pop %v917
        %v939 = vmul.f32 %v938, %v917
        %v940 = vmul.f32 %v939, %v938
        %v941 = vmul.f32 0.5, %v940
        %v942 = vsub.f32 1.5, %v941
        %v943 = vmul.f32 %v938, %v942
        %vm944 = vweird.f32 %v917
        %vm945 = vweird.f32 %v938
        %vm946 = vmor %vm944, %vm945
        %v947 = vsel %vm946, %v938, %v943
        %v948 = vmul.f32 %v897, %v927
        %v949 = vmul.f32 %v898, %v937
        %v950 = vmul.f32 %v899, %v947
        %v951 = vmul.f32 %v909, %v909
        %v952 = vmul.f32 %v910, %v910
        %v953 = vmul.f32 %v911, %v911
        %v954 = vadd.f32 %v951, 0.81
        %v955 = vadd.f32 %v952, 0.81
        %v956 = vadd.f32 %v953, 0.81
        %v957 = vrsqrt.pop %v954
        %v958 = vmul.f32 %v957, %v954
        %v959 = vmul.f32 %v958, %v957
        %v960 = vmul.f32 0.5, %v959
        %v961 = vsub.f32 1.5, %v960
        %v962 = vmul.f32 %v957, %v961
        %vm963 = vweird.f32 %v954
        %vm964 = vweird.f32 %v957
        %vm965 = vmor %vm963, %vm964
        %v966 = vsel %vm965, %v957, %v962
        %v967 = vrsqrt.pop %v955
        %v968 = vmul.f32 %v967, %v955
        %v969 = vmul.f32 %v968, %v967
        %v970 = vmul.f32 0.5, %v969
        %v971 = vsub.f32 1.5, %v970
        %v972 = vmul.f32 %v967, %v971
        %vm973 = vweird.f32 %v955
        %vm974 = vweird.f32 %v967
        %vm975 = vmor %vm973, %vm974
        %v976 = vsel %vm975, %v967, %v972
        %v977 = vrsqrt.pop %v956
        %v978 = vmul.f32 %v977, %v956
        %v979 = vmul.f32 %v978, %v977
        %v980 = vmul.f32 0.5, %v979
        %v981 = vsub.f32 1.5, %v980
        %v982 = vmul.f32 %v977, %v981
        %vm983 = vweird.f32 %v956
        %vm984 = vweird.f32 %v977
        %vm985 = vmor %vm983, %vm984
        %v986 = vsel %vm985, %v977, %v982
        %v987 = vmul.f32 %v909, %v966
        %v988 = vmul.f32 %v910, %v976
        %v989 = vmul.f32 %v911, %v986
        %v990 = vsub.f32 %v948, %v987
        %v991 = vsub.f32 %v949, %v988
        %v992 = vsub.f32 %v950, %v989
        %v993 = vmul.f32 %v990, %v990
        %v994 = vmul.f32 %v991, %v991
        %v995 = vmul.f32 %v992, %v992
        %v996 = vadd.f32 %v993, 0.1
        %v997 = vadd.f32 %v994, 0.1
        %v998 = vadd.f32 %v995, 0.1
        %v999 = vrcp.pop %v996
        %v1000 = vrcp.pop %v997
        %v1001 = vrcp.pop %v998
        %v1005 = vrot.slane %v999, 7
        %v1006 = vrot.slane %v1000, 7
        %v1007 = vsel %vm568, %v1005, %v1006
        %v1008 = vrot.slane %v1001, 7
        %v1009 = vsel %vm568, %v1006, %v1008
        %1010 = vrot.lane.b32.xlu0 %v1005, 127
        %v1011 = vpop.permute.xlu0 %1010
        %1012 = vrot.lane.b32.xlu0 %v1007, 127
        %v1013 = vpop.permute.xlu0 %1012
        %1014 = vrot.lane.b32.xlu0 %v1009, 127
        %v1015 = vpop.permute.xlu0 %1014
        %v1019 = vadd.f32 %v999, %v1011
        %v1020 = vadd.f32 %v1000, %v1013
        %v1021 = vadd.f32 %v1001, %v1015
        %v1025 = vrot.slane %v1019, 1
        %v1026 = vrot.slane %v1020, 1
        %v1027 = vsel %vm716, %v1025, %v1026
        %v1028 = vrot.slane %v1021, 1
        %v1029 = vsel %vm716, %v1026, %v1028
        %1030 = vrot.lane.b32.xlu0 %v1027, 2
        %v1031 = vpop.permute.xlu0 %1030
        %1032 = vrot.lane.b32.xlu0 %v1029, 2
        %v1033 = vpop.permute.xlu0 %1032
        %1034 = vrot.lane.b32.xlu0 %v1028, 2
        %v1035 = vpop.permute.xlu0 %1034
        %v1039 = vadd.f32 %v885, %v1031
        %v1040 = vadd.f32 %v886, %v1033
        %v1041 = vadd.f32 %v887, %v1035
        %v1045 = vsub.f32 %v136, %v569
        %v1046 = vsub.f32 %v137, %v571
        %v1047 = vsub.f32 %v138, %v573
        %v1051 = vsub.f32 %v139, %v586
        %v1052 = vsub.f32 %v140, %v588
        %v1053 = vsub.f32 %v141, %v590
        %v1054 = vmul.f32 %v1045, %v1045
        %v1055 = vmul.f32 %v1046, %v1046
        %v1056 = vmul.f32 %v1047, %v1047
        %v1057 = vadd.f32 %v1054, 0.81
        %v1058 = vadd.f32 %v1055, 0.81
        %v1059 = vadd.f32 %v1056, 0.81
        %v1060 = vrsqrt.pop %v1057
        %v1061 = vmul.f32 %v1060, %v1057
        %v1062 = vmul.f32 %v1061, %v1060
        %v1063 = vmul.f32 0.5, %v1062
        %v1064 = vsub.f32 1.5, %v1063
        %v1065 = vmul.f32 %v1060, %v1064
        %vm1066 = vweird.f32 %v1057
        %vm1067 = vweird.f32 %v1060
        %vm1068 = vmor %vm1066, %vm1067
        %v1069 = vsel %vm1068, %v1060, %v1065
        %v1070 = vrsqrt.pop %v1058
        %v1071 = vmul.f32 %v1070, %v1058
        %v1072 = vmul.f32 %v1071, %v1070
        %v1073 = vmul.f32 0.5, %v1072
        %v1074 = vsub.f32 1.5, %v1073
        %v1075 = vmul.f32 %v1070, %v1074
        %vm1076 = vweird.f32 %v1058
        %vm1077 = vweird.f32 %v1070
        %vm1078 = vmor %vm1076, %vm1077
        %v1079 = vsel %vm1078, %v1070, %v1075
        %v1080 = vrsqrt.pop %v1059
        %v1081 = vmul.f32 %v1080, %v1059
        %v1082 = vmul.f32 %v1081, %v1080
        %v1083 = vmul.f32 0.5, %v1082
        %v1084 = vsub.f32 1.5, %v1083
        %v1085 = vmul.f32 %v1080, %v1084
        %vm1086 = vweird.f32 %v1059
        %vm1087 = vweird.f32 %v1080
        %vm1088 = vmor %vm1086, %vm1087
        %v1089 = vsel %vm1088, %v1080, %v1085
        %v1090 = vmul.f32 %v1045, %v1069
        %v1091 = vmul.f32 %v1046, %v1079
        %v1092 = vmul.f32 %v1047, %v1089
        %v1093 = vmul.f32 %v1051, %v1051
        %v1094 = vmul.f32 %v1052, %v1052
        %v1095 = vmul.f32 %v1053, %v1053
        %v1096 = vadd.f32 %v1093, 0.81
        %v1097 = vadd.f32 %v1094, 0.81
        %v1098 = vadd.f32 %v1095, 0.81
        %v1099 = vrsqrt.pop %v1096
        %v1100 = vmul.f32 %v1099, %v1096
        %v1101 = vmul.f32 %v1100, %v1099
        %v1102 = vmul.f32 0.5, %v1101
        %v1103 = vsub.f32 1.5, %v1102
        %v1104 = vmul.f32 %v1099, %v1103
        %vm1105 = vweird.f32 %v1096
        %vm1106 = vweird.f32 %v1099
        %vm1107 = vmor %vm1105, %vm1106
        %v1108 = vsel %vm1107, %v1099, %v1104
        %v1109 = vrsqrt.pop %v1097
        %v1110 = vmul.f32 %v1109, %v1097
        %v1111 = vmul.f32 %v1110, %v1109
        %v1112 = vmul.f32 0.5, %v1111
        %v1113 = vsub.f32 1.5, %v1112
        %v1114 = vmul.f32 %v1109, %v1113
        %vm1115 = vweird.f32 %v1097
        %vm1116 = vweird.f32 %v1109
        %vm1117 = vmor %vm1115, %vm1116
        %v1118 = vsel %vm1117, %v1109, %v1114
        %v1119 = vrsqrt.pop %v1098
        %v1120 = vmul.f32 %v1119, %v1098
        %v1121 = vmul.f32 %v1120, %v1119
        %v1122 = vmul.f32 0.5, %v1121
        %v1123 = vsub.f32 1.5, %v1122
        %v1124 = vmul.f32 %v1119, %v1123
        %vm1125 = vweird.f32 %v1098
        %vm1126 = vweird.f32 %v1119
        %vm1127 = vmor %vm1125, %vm1126
        %v1128 = vsel %vm1127, %v1119, %v1124
        %v1129 = vmul.f32 %v1051, %v1108
        %v1130 = vmul.f32 %v1052, %v1118
        %v1131 = vmul.f32 %v1053, %v1128
        %v1132 = vsub.f32 %v1090, %v1129
        %v1133 = vsub.f32 %v1091, %v1130
        %v1134 = vsub.f32 %v1092, %v1131
        %v1135 = vmul.f32 %v1132, %v1132
        %v1136 = vmul.f32 %v1133, %v1133
        %v1137 = vmul.f32 %v1134, %v1134
        %v1138 = vadd.f32 %v1135, 0.1
        %v1139 = vadd.f32 %v1136, 0.1
        %v1140 = vadd.f32 %v1137, 0.1
        %v1141 = vrcp.pop %v1138
        %v1142 = vrcp.pop %v1139
        %v1143 = vrcp.pop %v1140
        %v1147 = vrot.slane %v1141, 7
        %v1148 = vrot.slane %v1142, 7
        %v1149 = vsel %vm568, %v1147, %v1148
        %v1150 = vrot.slane %v1143, 7
        %v1151 = vsel %vm568, %v1148, %v1150
        %v1155 = vadd.f32 %v1141, %v1147
        %v1156 = vadd.f32 %v1142, %v1149
        %v1157 = vadd.f32 %v1143, %v1151
        %v1161 = vrot.slane %v1155, 1
        %v1162 = vrot.slane %v1156, 1
        %v1163 = vsel %vm716, %v1161, %v1162
        %v1164 = vrot.slane %v1157, 1
        %v1165 = vsel %vm716, %v1162, %v1164
        %1166 = vrot.lane.b32.xlu0 %v1163, 1
        %v1167 = vpop.permute.xlu0 %1166
        %1168 = vrot.lane.b32.xlu0 %v1165, 1
        %v1169 = vpop.permute.xlu0 %1168
        %1170 = vrot.lane.b32.xlu0 %v1164, 1
        %v1171 = vpop.permute.xlu0 %1170
        %v1175 = vadd.f32 %v1039, %v1167
        %v1176 = vadd.f32 %v1040, %v1169
        %v1177 = vadd.f32 %v1041, %v1171
        %1178 = vrot.lane.b32.xlu0 %v569, 1
        %v1179 = vpop.permute.xlu0 %1178
        %1180 = vrot.lane.b32.xlu0 %v571, 1
        %v1181 = vpop.permute.xlu0 %1180
        %1182 = vrot.lane.b32.xlu0 %v573, 1
        %v1183 = vpop.permute.xlu0 %1182
        %v1187 = vsub.f32 %v136, %v1179
        %v1188 = vsub.f32 %v137, %v1181
        %v1189 = vsub.f32 %v138, %v1183
        %1190 = vrot.lane.b32.xlu0 %v586, 1
        %v1191 = vpop.permute.xlu0 %1190
        %1192 = vrot.lane.b32.xlu0 %v588, 1
        %v1193 = vpop.permute.xlu0 %1192
        %1194 = vrot.lane.b32.xlu0 %v590, 1
        %v1195 = vpop.permute.xlu0 %1194
        %v1199 = vsub.f32 %v139, %v1191
        %v1200 = vsub.f32 %v140, %v1193
        %v1201 = vsub.f32 %v141, %v1195
        %v1202 = vmul.f32 %v1187, %v1187
        %v1203 = vmul.f32 %v1188, %v1188
        %v1204 = vmul.f32 %v1189, %v1189
        %v1205 = vadd.f32 %v1202, 0.81
        %v1206 = vadd.f32 %v1203, 0.81
        %v1207 = vadd.f32 %v1204, 0.81
        %v1208 = vrsqrt.pop %v1205
        %v1209 = vmul.f32 %v1208, %v1205
        %v1210 = vmul.f32 %v1209, %v1208
        %v1211 = vmul.f32 0.5, %v1210
        %v1212 = vsub.f32 1.5, %v1211
        %v1213 = vmul.f32 %v1208, %v1212
        %vm1214 = vweird.f32 %v1205
        %vm1215 = vweird.f32 %v1208
        %vm1216 = vmor %vm1214, %vm1215
        %v1217 = vsel %vm1216, %v1208, %v1213
        %v1218 = vrsqrt.pop %v1206
        %v1219 = vmul.f32 %v1218, %v1206
        %v1220 = vmul.f32 %v1219, %v1218
        %v1221 = vmul.f32 0.5, %v1220
        %v1222 = vsub.f32 1.5, %v1221
        %v1223 = vmul.f32 %v1218, %v1222
        %vm1224 = vweird.f32 %v1206
        %vm1225 = vweird.f32 %v1218
        %vm1226 = vmor %vm1224, %vm1225
        %v1227 = vsel %vm1226, %v1218, %v1223
        %v1228 = vrsqrt.pop %v1207
        %v1229 = vmul.f32 %v1228, %v1207
        %v1230 = vmul.f32 %v1229, %v1228
        %v1231 = vmul.f32 0.5, %v1230
        %v1232 = vsub.f32 1.5, %v1231
        %v1233 = vmul.f32 %v1228, %v1232
        %vm1234 = vweird.f32 %v1207
        %vm1235 = vweird.f32 %v1228
        %vm1236 = vmor %vm1234, %vm1235
        %v1237 = vsel %vm1236, %v1228, %v1233
        %v1238 = vmul.f32 %v1187, %v1217
        %v1239 = vmul.f32 %v1188, %v1227
        %v1240 = vmul.f32 %v1189, %v1237
        %v1241 = vmul.f32 %v1199, %v1199
        %v1242 = vmul.f32 %v1200, %v1200
        %v1243 = vmul.f32 %v1201, %v1201
        %v1244 = vadd.f32 %v1241, 0.81
        %v1245 = vadd.f32 %v1242, 0.81
        %v1246 = vadd.f32 %v1243, 0.81
        %v1247 = vrsqrt.pop %v1244
        %v1248 = vmul.f32 %v1247, %v1244
        %v1249 = vmul.f32 %v1248, %v1247
        %v1250 = vmul.f32 0.5, %v1249
        %v1251 = vsub.f32 1.5, %v1250
        %v1252 = vmul.f32 %v1247, %v1251
        %vm1253 = vweird.f32 %v1244
        %vm1254 = vweird.f32 %v1247
        %vm1255 = vmor %vm1253, %vm1254
        %v1256 = vsel %vm1255, %v1247, %v1252
        %v1257 = vrsqrt.pop %v1245
        %v1258 = vmul.f32 %v1257, %v1245
        %v1259 = vmul.f32 %v1258, %v1257
        %v1260 = vmul.f32 0.5, %v1259
        %v1261 = vsub.f32 1.5, %v1260
        %v1262 = vmul.f32 %v1257, %v1261
        %vm1263 = vweird.f32 %v1245
        %vm1264 = vweird.f32 %v1257
        %vm1265 = vmor %vm1263, %vm1264
        %v1266 = vsel %vm1265, %v1257, %v1262
        %v1267 = vrsqrt.pop %v1246
        %v1268 = vmul.f32 %v1267, %v1246
        %v1269 = vmul.f32 %v1268, %v1267
        %v1270 = vmul.f32 0.5, %v1269
        %v1271 = vsub.f32 1.5, %v1270
        %v1272 = vmul.f32 %v1267, %v1271
        %vm1273 = vweird.f32 %v1246
        %vm1274 = vweird.f32 %v1267
        %vm1275 = vmor %vm1273, %vm1274
        %v1276 = vsel %vm1275, %v1267, %v1272
        %v1277 = vmul.f32 %v1199, %v1256
        %v1278 = vmul.f32 %v1200, %v1266
        %v1279 = vmul.f32 %v1201, %v1276
        %v1280 = vsub.f32 %v1238, %v1277
        %v1281 = vsub.f32 %v1239, %v1278
        %v1282 = vsub.f32 %v1240, %v1279
        %v1283 = vmul.f32 %v1280, %v1280
        %v1284 = vmul.f32 %v1281, %v1281
        %v1285 = vmul.f32 %v1282, %v1282
        %v1286 = vadd.f32 %v1283, 0.1
        %v1287 = vadd.f32 %v1284, 0.1
        %v1288 = vadd.f32 %v1285, 0.1
        %v1289 = vrcp.pop %v1286
        %v1290 = vrcp.pop %v1287
        %v1291 = vrcp.pop %v1288
        %v1295 = vrot.slane %v1289, 7
        %v1296 = vrot.slane %v1290, 7
        %v1297 = vsel %vm568, %v1295, %v1296
        %v1298 = vrot.slane %v1291, 7
        %v1299 = vsel %vm568, %v1296, %v1298
        %1300 = vrot.lane.b32.xlu0 %v1295, 1
        %v1301 = vpop.permute.xlu0 %1300
        %1302 = vrot.lane.b32.xlu0 %v1297, 1
        %v1303 = vpop.permute.xlu0 %1302
        %1304 = vrot.lane.b32.xlu0 %v1299, 1
        %v1305 = vpop.permute.xlu0 %1304
        %v1309 = vadd.f32 %v1289, %v1301
        %v1310 = vadd.f32 %v1290, %v1303
        %v1311 = vadd.f32 %v1291, %v1305
        %v1315 = vrot.slane %v1309, 1
        %v1316 = vrot.slane %v1310, 1
        %v1317 = vsel %vm716, %v1315, %v1316
        %v1318 = vrot.slane %v1311, 1
        %v1319 = vsel %vm716, %v1316, %v1318
        %v1323 = vadd.f32 %v1175, %v1317
        %v1324 = vadd.f32 %v1176, %v1319
        %v1325 = vadd.f32 %v1177, %v1318
        %1326 = vrot.lane.b32.xlu0 %v569, 2
        %v1327 = vpop.permute.xlu0 %1326
        %1328 = vrot.lane.b32.xlu0 %v571, 2
        %v1329 = vpop.permute.xlu0 %1328
        %1330 = vrot.lane.b32.xlu0 %v573, 2
        %v1331 = vpop.permute.xlu0 %1330
        %v1335 = vsub.f32 %v136, %v1327
        %v1336 = vsub.f32 %v137, %v1329
        %v1337 = vsub.f32 %v138, %v1331
        %1338 = vrot.lane.b32.xlu0 %v586, 2
        %v1339 = vpop.permute.xlu0 %1338
        %1340 = vrot.lane.b32.xlu0 %v588, 2
        %v1341 = vpop.permute.xlu0 %1340
        %1342 = vrot.lane.b32.xlu0 %v590, 2
        %v1343 = vpop.permute.xlu0 %1342
        %v1347 = vsub.f32 %v139, %v1339
        %v1348 = vsub.f32 %v140, %v1341
        %v1349 = vsub.f32 %v141, %v1343
        %v1350 = vmul.f32 %v1335, %v1335
        %v1351 = vmul.f32 %v1336, %v1336
        %v1352 = vmul.f32 %v1337, %v1337
        %v1353 = vadd.f32 %v1350, 0.81
        %v1354 = vadd.f32 %v1351, 0.81
        %v1355 = vadd.f32 %v1352, 0.81
        %v1356 = vrsqrt.pop %v1353
        %v1357 = vmul.f32 %v1356, %v1353
        %v1358 = vmul.f32 %v1357, %v1356
        %v1359 = vmul.f32 0.5, %v1358
        %v1360 = vsub.f32 1.5, %v1359
        %v1361 = vmul.f32 %v1356, %v1360
        %vm1362 = vweird.f32 %v1353
        %vm1363 = vweird.f32 %v1356
        %vm1364 = vmor %vm1362, %vm1363
        %v1365 = vsel %vm1364, %v1356, %v1361
        %v1366 = vrsqrt.pop %v1354
        %v1367 = vmul.f32 %v1366, %v1354
        %v1368 = vmul.f32 %v1367, %v1366
        %v1369 = vmul.f32 0.5, %v1368
        %v1370 = vsub.f32 1.5, %v1369
        %v1371 = vmul.f32 %v1366, %v1370
        %vm1372 = vweird.f32 %v1354
        %vm1373 = vweird.f32 %v1366
        %vm1374 = vmor %vm1372, %vm1373
        %v1375 = vsel %vm1374, %v1366, %v1371
        %v1376 = vrsqrt.pop %v1355
        %v1377 = vmul.f32 %v1376, %v1355
        %v1378 = vmul.f32 %v1377, %v1376
        %v1379 = vmul.f32 0.5, %v1378
        %v1380 = vsub.f32 1.5, %v1379
        %v1381 = vmul.f32 %v1376, %v1380
        %vm1382 = vweird.f32 %v1355
        %vm1383 = vweird.f32 %v1376
        %vm1384 = vmor %vm1382, %vm1383
        %v1385 = vsel %vm1384, %v1376, %v1381
        %v1386 = vmul.f32 %v1335, %v1365
        %v1387 = vmul.f32 %v1336, %v1375
        %v1388 = vmul.f32 %v1337, %v1385
        %v1389 = vmul.f32 %v1347, %v1347
        %v1390 = vmul.f32 %v1348, %v1348
        %v1391 = vmul.f32 %v1349, %v1349
        %v1392 = vadd.f32 %v1389, 0.81
        %v1393 = vadd.f32 %v1390, 0.81
        %v1394 = vadd.f32 %v1391, 0.81
        %v1395 = vrsqrt.pop %v1392
        %v1396 = vmul.f32 %v1395, %v1392
        %v1397 = vmul.f32 %v1396, %v1395
        %v1398 = vmul.f32 0.5, %v1397
        %v1399 = vsub.f32 1.5, %v1398
        %v1400 = vmul.f32 %v1395, %v1399
        %vm1401 = vweird.f32 %v1392
        %vm1402 = vweird.f32 %v1395
        %vm1403 = vmor %vm1401, %vm1402
        %v1404 = vsel %vm1403, %v1395, %v1400
        %v1405 = vrsqrt.pop %v1393
        %v1406 = vmul.f32 %v1405, %v1393
        %v1407 = vmul.f32 %v1406, %v1405
        %v1408 = vmul.f32 0.5, %v1407
        %v1409 = vsub.f32 1.5, %v1408
        %v1410 = vmul.f32 %v1405, %v1409
        %vm1411 = vweird.f32 %v1393
        %vm1412 = vweird.f32 %v1405
        %vm1413 = vmor %vm1411, %vm1412
        %v1414 = vsel %vm1413, %v1405, %v1410
        %v1415 = vrsqrt.pop %v1394
        %v1416 = vmul.f32 %v1415, %v1394
        %v1417 = vmul.f32 %v1416, %v1415
        %v1418 = vmul.f32 0.5, %v1417
        %v1419 = vsub.f32 1.5, %v1418
        %v1420 = vmul.f32 %v1415, %v1419
        %vm1421 = vweird.f32 %v1394
        %vm1422 = vweird.f32 %v1415
        %vm1423 = vmor %vm1421, %vm1422
        %v1424 = vsel %vm1423, %v1415, %v1420
        %v1425 = vmul.f32 %v1347, %v1404
        %v1426 = vmul.f32 %v1348, %v1414
        %v1427 = vmul.f32 %v1349, %v1424
        %v1428 = vsub.f32 %v1386, %v1425
        %v1429 = vsub.f32 %v1387, %v1426
        %v1430 = vsub.f32 %v1388, %v1427
        %v1431 = vmul.f32 %v1428, %v1428
        %v1432 = vmul.f32 %v1429, %v1429
        %v1433 = vmul.f32 %v1430, %v1430
        %v1434 = vadd.f32 %v1431, 0.1
        %v1435 = vadd.f32 %v1432, 0.1
        %v1436 = vadd.f32 %v1433, 0.1
        %v1437 = vrcp.pop %v1434
        %v1438 = vrcp.pop %v1435
        %v1439 = vrcp.pop %v1436
        %v1443 = vrot.slane %v1437, 7
        %v1444 = vrot.slane %v1438, 7
        %v1445 = vsel %vm568, %v1443, %v1444
        %v1446 = vrot.slane %v1439, 7
        %v1447 = vsel %vm568, %v1444, %v1446
        %1448 = vrot.lane.b32.xlu0 %v1443, 2
        %v1449 = vpop.permute.xlu0 %1448
        %1450 = vrot.lane.b32.xlu0 %v1445, 2
        %v1451 = vpop.permute.xlu0 %1450
        %1452 = vrot.lane.b32.xlu0 %v1447, 2
        %v1453 = vpop.permute.xlu0 %1452
        %v1457 = vadd.f32 %v1437, %v1449
        %v1458 = vadd.f32 %v1438, %v1451
        %v1459 = vadd.f32 %v1439, %v1453
        %v1463 = vrot.slane %v1457, 1
        %v1464 = vrot.slane %v1458, 1
        %v1465 = vsel %vm716, %v1463, %v1464
        %v1466 = vrot.slane %v1459, 1
        %v1467 = vsel %vm716, %v1464, %v1466
        %1468 = vrot.lane.b32.xlu0 %v1465, 127
        %v1469 = vpop.permute.xlu0 %1468
        %1470 = vrot.lane.b32.xlu0 %v1467, 127
        %v1471 = vpop.permute.xlu0 %1470
        %1472 = vrot.lane.b32.xlu0 %v1466, 127
        %v1473 = vpop.permute.xlu0 %1472
        %v1477 = vadd.f32 %v1323, %v1469
        %v1478 = vadd.f32 %v1324, %v1471
        %v1479 = vadd.f32 %v1325, %v1473
        %1480 = vrot.lane.b32.xlu0 %v569, 3
        %v1481 = vpop.permute.xlu0 %1480
        %1482 = vrot.lane.b32.xlu0 %v571, 3
        %v1483 = vpop.permute.xlu0 %1482
        %1484 = vrot.lane.b32.xlu0 %v573, 3
        %v1485 = vpop.permute.xlu0 %1484
        %v1489 = vsub.f32 %v136, %v1481
        %v1490 = vsub.f32 %v137, %v1483
        %v1491 = vsub.f32 %v138, %v1485
        %1492 = vrot.lane.b32.xlu0 %v586, 3
        %v1493 = vpop.permute.xlu0 %1492
        %1494 = vrot.lane.b32.xlu0 %v588, 3
        %v1495 = vpop.permute.xlu0 %1494
        %1496 = vrot.lane.b32.xlu0 %v590, 3
        %v1497 = vpop.permute.xlu0 %1496
        %v1501 = vsub.f32 %v139, %v1493
        %v1502 = vsub.f32 %v140, %v1495
        %v1503 = vsub.f32 %v141, %v1497
        %v1504 = vmul.f32 %v1489, %v1489
        %v1505 = vmul.f32 %v1490, %v1490
        %v1506 = vmul.f32 %v1491, %v1491
        %v1507 = vadd.f32 %v1504, 0.81
        %v1508 = vadd.f32 %v1505, 0.81
        %v1509 = vadd.f32 %v1506, 0.81
        %v1510 = vrsqrt.pop %v1507
        %v1511 = vmul.f32 %v1510, %v1507
        %v1512 = vmul.f32 %v1511, %v1510
        %v1513 = vmul.f32 0.5, %v1512
        %v1514 = vsub.f32 1.5, %v1513
        %v1515 = vmul.f32 %v1510, %v1514
        %vm1516 = vweird.f32 %v1507
        %vm1517 = vweird.f32 %v1510
        %vm1518 = vmor %vm1516, %vm1517
        %v1519 = vsel %vm1518, %v1510, %v1515
        %v1520 = vrsqrt.pop %v1508
        %v1521 = vmul.f32 %v1520, %v1508
        %v1522 = vmul.f32 %v1521, %v1520
        %v1523 = vmul.f32 0.5, %v1522
        %v1524 = vsub.f32 1.5, %v1523
        %v1525 = vmul.f32 %v1520, %v1524
        %vm1526 = vweird.f32 %v1508
        %vm1527 = vweird.f32 %v1520
        %vm1528 = vmor %vm1526, %vm1527
        %v1529 = vsel %vm1528, %v1520, %v1525
        %v1530 = vrsqrt.pop %v1509
        %v1531 = vmul.f32 %v1530, %v1509
        %v1532 = vmul.f32 %v1531, %v1530
        %v1533 = vmul.f32 0.5, %v1532
        %v1534 = vsub.f32 1.5, %v1533
        %v1535 = vmul.f32 %v1530, %v1534
        %vm1536 = vweird.f32 %v1509
        %vm1537 = vweird.f32 %v1530
        %vm1538 = vmor %vm1536, %vm1537
        %v1539 = vsel %vm1538, %v1530, %v1535
        %v1540 = vmul.f32 %v1489, %v1519
        %v1541 = vmul.f32 %v1490, %v1529
        %v1542 = vmul.f32 %v1491, %v1539
        %v1543 = vmul.f32 %v1501, %v1501
        %v1544 = vmul.f32 %v1502, %v1502
        %v1545 = vmul.f32 %v1503, %v1503
        %v1546 = vadd.f32 %v1543, 0.81
        %v1547 = vadd.f32 %v1544, 0.81
        %v1548 = vadd.f32 %v1545, 0.81
        %v1549 = vrsqrt.pop %v1546
        %v1550 = vmul.f32 %v1549, %v1546
        %v1551 = vmul.f32 %v1550, %v1549
        %v1552 = vmul.f32 0.5, %v1551
        %v1553 = vsub.f32 1.5, %v1552
        %v1554 = vmul.f32 %v1549, %v1553
        %vm1555 = vweird.f32 %v1546
        %vm1556 = vweird.f32 %v1549
        %vm1557 = vmor %vm1555, %vm1556
        %v1558 = vsel %vm1557, %v1549, %v1554
        %v1559 = vrsqrt.pop %v1547
        %v1560 = vmul.f32 %v1559, %v1547
        %v1561 = vmul.f32 %v1560, %v1559
        %v1562 = vmul.f32 0.5, %v1561
        %v1563 = vsub.f32 1.5, %v1562
        %v1564 = vmul.f32 %v1559, %v1563
        %vm1565 = vweird.f32 %v1547
        %vm1566 = vweird.f32 %v1559
        %vm1567 = vmor %vm1565, %vm1566
        %v1568 = vsel %vm1567, %v1559, %v1564
        %v1569 = vrsqrt.pop %v1548
        %v1570 = vmul.f32 %v1569, %v1548
        %v1571 = vmul.f32 %v1570, %v1569
        %v1572 = vmul.f32 0.5, %v1571
        %v1573 = vsub.f32 1.5, %v1572
        %v1574 = vmul.f32 %v1569, %v1573
        %vm1575 = vweird.f32 %v1548
        %vm1576 = vweird.f32 %v1569
        %vm1577 = vmor %vm1575, %vm1576
        %v1578 = vsel %vm1577, %v1569, %v1574
        %v1579 = vmul.f32 %v1501, %v1558
        %v1580 = vmul.f32 %v1502, %v1568
        %v1581 = vmul.f32 %v1503, %v1578
        %v1582 = vsub.f32 %v1540, %v1579
        %v1583 = vsub.f32 %v1541, %v1580
        %v1584 = vsub.f32 %v1542, %v1581
        %v1585 = vmul.f32 %v1582, %v1582
        %v1586 = vmul.f32 %v1583, %v1583
        %v1587 = vmul.f32 %v1584, %v1584
        %v1588 = vadd.f32 %v1585, 0.1
        %v1589 = vadd.f32 %v1586, 0.1
        %v1590 = vadd.f32 %v1587, 0.1
        %v1591 = vrcp.pop %v1588
        %v1592 = vrcp.pop %v1589
        %v1593 = vrcp.pop %v1590
        %v1597 = vrot.slane %v1591, 7
        %v1598 = vrot.slane %v1592, 7
        %v1599 = vsel %vm568, %v1597, %v1598
        %v1600 = vrot.slane %v1593, 7
        %v1601 = vsel %vm568, %v1598, %v1600
        %1602 = vrot.lane.b32.xlu0 %v1597, 3
        %v1603 = vpop.permute.xlu0 %1602
        %1604 = vrot.lane.b32.xlu0 %v1599, 3
        %v1605 = vpop.permute.xlu0 %1604
        %1606 = vrot.lane.b32.xlu0 %v1601, 3
        %v1607 = vpop.permute.xlu0 %1606
        %v1611 = vadd.f32 %v1591, %v1603
        %v1612 = vadd.f32 %v1592, %v1605
        %v1613 = vadd.f32 %v1593, %v1607
        %v1617 = vrot.slane %v1611, 1
        %v1618 = vrot.slane %v1612, 1
        %v1619 = vsel %vm716, %v1617, %v1618
        %v1620 = vrot.slane %v1613, 1
        %v1621 = vsel %vm716, %v1618, %v1620
        %1622 = vrot.lane.b32.xlu0 %v1619, 126
        %v1623 = vpop.permute.xlu0 %1622
        %1624 = vrot.lane.b32.xlu0 %v1621, 126
        %v1625 = vpop.permute.xlu0 %1624
        %1626 = vrot.lane.b32.xlu0 %v1620, 126
        %v1627 = vpop.permute.xlu0 %1626
        %v1631 = vadd.f32 %v1477, %v1623
        %v1632 = vadd.f32 %v1478, %v1625
        %v1633 = vadd.f32 %v1479, %v1627
        %vm1634 = vcmask 1041408
        %v1635 = vrot.slane %v136, 6
        %v1636 = vrot.slane %v137, 6
        %v1637 = vsel %vm1634, %v1635, %v1636
        %v1638 = vrot.slane %v138, 6
        %v1639 = vsel %vm1634, %v1636, %v1638
        %1640 = vrot.lane.b32.xlu0 %v1635, 125
        %v1641 = vpop.permute.xlu0 %1640
        %1642 = vrot.lane.b32.xlu0 %v1637, 125
        %v1643 = vpop.permute.xlu0 %1642
        %1644 = vrot.lane.b32.xlu0 %v1639, 125
        %v1645 = vpop.permute.xlu0 %1644
        %v1649 = vsub.f32 %v136, %v1641
        %v1650 = vsub.f32 %v137, %v1643
        %v1651 = vsub.f32 %v138, %v1645
        %v1652 = vrot.slane %v139, 6
        %v1653 = vrot.slane %v140, 6
        %v1654 = vsel %vm1634, %v1652, %v1653
        %v1655 = vrot.slane %v141, 6
        %v1656 = vsel %vm1634, %v1653, %v1655
        %1657 = vrot.lane.b32.xlu0 %v1652, 125
        %v1658 = vpop.permute.xlu0 %1657
        %1659 = vrot.lane.b32.xlu0 %v1654, 125
        %v1660 = vpop.permute.xlu0 %1659
        %1661 = vrot.lane.b32.xlu0 %v1656, 125
        %v1662 = vpop.permute.xlu0 %1661
        %v1666 = vsub.f32 %v139, %v1658
        %v1667 = vsub.f32 %v140, %v1660
        %v1668 = vsub.f32 %v141, %v1662
        %v1669 = vmul.f32 %v1649, %v1649
        %v1670 = vmul.f32 %v1650, %v1650
        %v1671 = vmul.f32 %v1651, %v1651
        %v1672 = vadd.f32 %v1669, 0.81
        %v1673 = vadd.f32 %v1670, 0.81
        %v1674 = vadd.f32 %v1671, 0.81
        %v1675 = vrsqrt.pop %v1672
        %v1676 = vmul.f32 %v1675, %v1672
        %v1677 = vmul.f32 %v1676, %v1675
        %v1678 = vmul.f32 0.5, %v1677
        %v1679 = vsub.f32 1.5, %v1678
        %v1680 = vmul.f32 %v1675, %v1679
        %vm1681 = vweird.f32 %v1672
        %vm1682 = vweird.f32 %v1675
        %vm1683 = vmor %vm1681, %vm1682
        %v1684 = vsel %vm1683, %v1675, %v1680
        %v1685 = vrsqrt.pop %v1673
        %v1686 = vmul.f32 %v1685, %v1673
        %v1687 = vmul.f32 %v1686, %v1685
        %v1688 = vmul.f32 0.5, %v1687
        %v1689 = vsub.f32 1.5, %v1688
        %v1690 = vmul.f32 %v1685, %v1689
        %vm1691 = vweird.f32 %v1673
        %vm1692 = vweird.f32 %v1685
        %vm1693 = vmor %vm1691, %vm1692
        %v1694 = vsel %vm1693, %v1685, %v1690
        %v1695 = vrsqrt.pop %v1674
        %v1696 = vmul.f32 %v1695, %v1674
        %v1697 = vmul.f32 %v1696, %v1695
        %v1698 = vmul.f32 0.5, %v1697
        %v1699 = vsub.f32 1.5, %v1698
        %v1700 = vmul.f32 %v1695, %v1699
        %vm1701 = vweird.f32 %v1674
        %vm1702 = vweird.f32 %v1695
        %vm1703 = vmor %vm1701, %vm1702
        %v1704 = vsel %vm1703, %v1695, %v1700
        %v1705 = vmul.f32 %v1649, %v1684
        %v1706 = vmul.f32 %v1650, %v1694
        %v1707 = vmul.f32 %v1651, %v1704
        %v1708 = vmul.f32 %v1666, %v1666
        %v1709 = vmul.f32 %v1667, %v1667
        %v1710 = vmul.f32 %v1668, %v1668
        %v1711 = vadd.f32 %v1708, 0.81
        %v1712 = vadd.f32 %v1709, 0.81
        %v1713 = vadd.f32 %v1710, 0.81
        %v1714 = vrsqrt.pop %v1711
        %v1715 = vmul.f32 %v1714, %v1711
        %v1716 = vmul.f32 %v1715, %v1714
        %v1717 = vmul.f32 0.5, %v1716
        %v1718 = vsub.f32 1.5, %v1717
        %v1719 = vmul.f32 %v1714, %v1718
        %vm1720 = vweird.f32 %v1711
        %vm1721 = vweird.f32 %v1714
        %vm1722 = vmor %vm1720, %vm1721
        %v1723 = vsel %vm1722, %v1714, %v1719
        %v1724 = vrsqrt.pop %v1712
        %v1725 = vmul.f32 %v1724, %v1712
        %v1726 = vmul.f32 %v1725, %v1724
        %v1727 = vmul.f32 0.5, %v1726
        %v1728 = vsub.f32 1.5, %v1727
        %v1729 = vmul.f32 %v1724, %v1728
        %vm1730 = vweird.f32 %v1712
        %vm1731 = vweird.f32 %v1724
        %vm1732 = vmor %vm1730, %vm1731
        %v1733 = vsel %vm1732, %v1724, %v1729
        %v1734 = vrsqrt.pop %v1713
        %v1735 = vmul.f32 %v1734, %v1713
        %v1736 = vmul.f32 %v1735, %v1734
        %v1737 = vmul.f32 0.5, %v1736
        %v1738 = vsub.f32 1.5, %v1737
        %v1739 = vmul.f32 %v1734, %v1738
        %vm1740 = vweird.f32 %v1713
        %vm1741 = vweird.f32 %v1734
        %vm1742 = vmor %vm1740, %vm1741
        %v1743 = vsel %vm1742, %v1734, %v1739
        %v1744 = vmul.f32 %v1666, %v1723
        %v1745 = vmul.f32 %v1667, %v1733
        %v1746 = vmul.f32 %v1668, %v1743
        %v1747 = vsub.f32 %v1705, %v1744
        %v1748 = vsub.f32 %v1706, %v1745
        %v1749 = vsub.f32 %v1707, %v1746
        %v1750 = vmul.f32 %v1747, %v1747
        %v1751 = vmul.f32 %v1748, %v1748
        %v1752 = vmul.f32 %v1749, %v1749
        %v1753 = vadd.f32 %v1750, 0.1
        %v1754 = vadd.f32 %v1751, 0.1
        %v1755 = vadd.f32 %v1752, 0.1
        %v1756 = vrcp.pop %v1753
        %v1757 = vrcp.pop %v1754
        %v1758 = vrcp.pop %v1755
        %v1762 = vrot.slane %v1756, 6
        %v1763 = vrot.slane %v1757, 6
        %v1764 = vsel %vm1634, %v1762, %v1763
        %v1765 = vrot.slane %v1758, 6
        %v1766 = vsel %vm1634, %v1763, %v1765
        %1767 = vrot.lane.b32.xlu0 %v1762, 125
        %v1768 = vpop.permute.xlu0 %1767
        %1769 = vrot.lane.b32.xlu0 %v1764, 125
        %v1770 = vpop.permute.xlu0 %1769
        %1771 = vrot.lane.b32.xlu0 %v1766, 125
        %v1772 = vpop.permute.xlu0 %1771
        %v1776 = vadd.f32 %v1756, %v1768
        %v1777 = vadd.f32 %v1757, %v1770
        %v1778 = vadd.f32 %v1758, %v1772
        %vm1782 = vcmask 1045504
        %v1783 = vrot.slane %v1776, 2
        %v1784 = vrot.slane %v1777, 2
        %v1785 = vsel %vm1782, %v1783, %v1784
        %v1786 = vrot.slane %v1778, 2
        %v1787 = vsel %vm1782, %v1784, %v1786
        %1788 = vrot.lane.b32.xlu0 %v1785, 4
        %v1789 = vpop.permute.xlu0 %1788
        %1790 = vrot.lane.b32.xlu0 %v1787, 4
        %v1791 = vpop.permute.xlu0 %1790
        %1792 = vrot.lane.b32.xlu0 %v1786, 4
        %v1793 = vpop.permute.xlu0 %1792
        %v1797 = vadd.f32 %v1631, %v1789
        %v1798 = vadd.f32 %v1632, %v1791
        %v1799 = vadd.f32 %v1633, %v1793
        %1800 = vrot.lane.b32.xlu0 %v1635, 126
        %v1801 = vpop.permute.xlu0 %1800
        %1802 = vrot.lane.b32.xlu0 %v1637, 126
        %v1803 = vpop.permute.xlu0 %1802
        %1804 = vrot.lane.b32.xlu0 %v1639, 126
        %v1805 = vpop.permute.xlu0 %1804
        %v1809 = vsub.f32 %v136, %v1801
        %v1810 = vsub.f32 %v137, %v1803
        %v1811 = vsub.f32 %v138, %v1805
        %1812 = vrot.lane.b32.xlu0 %v1652, 126
        %v1813 = vpop.permute.xlu0 %1812
        %1814 = vrot.lane.b32.xlu0 %v1654, 126
        %v1815 = vpop.permute.xlu0 %1814
        %1816 = vrot.lane.b32.xlu0 %v1656, 126
        %v1817 = vpop.permute.xlu0 %1816
        %v1821 = vsub.f32 %v139, %v1813
        %v1822 = vsub.f32 %v140, %v1815
        %v1823 = vsub.f32 %v141, %v1817
        %v1824 = vmul.f32 %v1809, %v1809
        %v1825 = vmul.f32 %v1810, %v1810
        %v1826 = vmul.f32 %v1811, %v1811
        %v1827 = vadd.f32 %v1824, 0.81
        %v1828 = vadd.f32 %v1825, 0.81
        %v1829 = vadd.f32 %v1826, 0.81
        %v1830 = vrsqrt.pop %v1827
        %v1831 = vmul.f32 %v1830, %v1827
        %v1832 = vmul.f32 %v1831, %v1830
        %v1833 = vmul.f32 0.5, %v1832
        %v1834 = vsub.f32 1.5, %v1833
        %v1835 = vmul.f32 %v1830, %v1834
        %vm1836 = vweird.f32 %v1827
        %vm1837 = vweird.f32 %v1830
        %vm1838 = vmor %vm1836, %vm1837
        %v1839 = vsel %vm1838, %v1830, %v1835
        %v1840 = vrsqrt.pop %v1828
        %v1841 = vmul.f32 %v1840, %v1828
        %v1842 = vmul.f32 %v1841, %v1840
        %v1843 = vmul.f32 0.5, %v1842
        %v1844 = vsub.f32 1.5, %v1843
        %v1845 = vmul.f32 %v1840, %v1844
        %vm1846 = vweird.f32 %v1828
        %vm1847 = vweird.f32 %v1840
        %vm1848 = vmor %vm1846, %vm1847
        %v1849 = vsel %vm1848, %v1840, %v1845
        %v1850 = vrsqrt.pop %v1829
        %v1851 = vmul.f32 %v1850, %v1829
        %v1852 = vmul.f32 %v1851, %v1850
        %v1853 = vmul.f32 0.5, %v1852
        %v1854 = vsub.f32 1.5, %v1853
        %v1855 = vmul.f32 %v1850, %v1854
        %vm1856 = vweird.f32 %v1829
        %vm1857 = vweird.f32 %v1850
        %vm1858 = vmor %vm1856, %vm1857
        %v1859 = vsel %vm1858, %v1850, %v1855
        %v1860 = vmul.f32 %v1809, %v1839
        %v1861 = vmul.f32 %v1810, %v1849
        %v1862 = vmul.f32 %v1811, %v1859
        %v1863 = vmul.f32 %v1821, %v1821
        %v1864 = vmul.f32 %v1822, %v1822
        %v1865 = vmul.f32 %v1823, %v1823
        %v1866 = vadd.f32 %v1863, 0.81
        %v1867 = vadd.f32 %v1864, 0.81
        %v1868 = vadd.f32 %v1865, 0.81
        %v1869 = vrsqrt.pop %v1866
        %v1870 = vmul.f32 %v1869, %v1866
        %v1871 = vmul.f32 %v1870, %v1869
        %v1872 = vmul.f32 0.5, %v1871
        %v1873 = vsub.f32 1.5, %v1872
        %v1874 = vmul.f32 %v1869, %v1873
        %vm1875 = vweird.f32 %v1866
        %vm1876 = vweird.f32 %v1869
        %vm1877 = vmor %vm1875, %vm1876
        %v1878 = vsel %vm1877, %v1869, %v1874
        %v1879 = vrsqrt.pop %v1867
        %v1880 = vmul.f32 %v1879, %v1867
        %v1881 = vmul.f32 %v1880, %v1879
        %v1882 = vmul.f32 0.5, %v1881
        %v1883 = vsub.f32 1.5, %v1882
        %v1884 = vmul.f32 %v1879, %v1883
        %vm1885 = vweird.f32 %v1867
        %vm1886 = vweird.f32 %v1879
        %vm1887 = vmor %vm1885, %vm1886
        %v1888 = vsel %vm1887, %v1879, %v1884
        %v1889 = vrsqrt.pop %v1868
        %v1890 = vmul.f32 %v1889, %v1868
        %v1891 = vmul.f32 %v1890, %v1889
        %v1892 = vmul.f32 0.5, %v1891
        %v1893 = vsub.f32 1.5, %v1892
        %v1894 = vmul.f32 %v1889, %v1893
        %vm1895 = vweird.f32 %v1868
        %vm1896 = vweird.f32 %v1889
        %vm1897 = vmor %vm1895, %vm1896
        %v1898 = vsel %vm1897, %v1889, %v1894
        %v1899 = vmul.f32 %v1821, %v1878
        %v1900 = vmul.f32 %v1822, %v1888
        %v1901 = vmul.f32 %v1823, %v1898
        %v1902 = vsub.f32 %v1860, %v1899
        %v1903 = vsub.f32 %v1861, %v1900
        %v1904 = vsub.f32 %v1862, %v1901
        %v1905 = vmul.f32 %v1902, %v1902
        %v1906 = vmul.f32 %v1903, %v1903
        %v1907 = vmul.f32 %v1904, %v1904
        %v1908 = vadd.f32 %v1905, 0.1
        %v1909 = vadd.f32 %v1906, 0.1
        %v1910 = vadd.f32 %v1907, 0.1
        %v1911 = vrcp.pop %v1908
        %v1912 = vrcp.pop %v1909
        %v1913 = vrcp.pop %v1910
        %v1917 = vrot.slane %v1911, 6
        %v1918 = vrot.slane %v1912, 6
        %v1919 = vsel %vm1634, %v1917, %v1918
        %v1920 = vrot.slane %v1913, 6
        %v1921 = vsel %vm1634, %v1918, %v1920
        %1922 = vrot.lane.b32.xlu0 %v1917, 126
        %v1923 = vpop.permute.xlu0 %1922
        %1924 = vrot.lane.b32.xlu0 %v1919, 126
        %v1925 = vpop.permute.xlu0 %1924
        %1926 = vrot.lane.b32.xlu0 %v1921, 126
        %v1927 = vpop.permute.xlu0 %1926
        %v1931 = vadd.f32 %v1911, %v1923
        %v1932 = vadd.f32 %v1912, %v1925
        %v1933 = vadd.f32 %v1913, %v1927
        %v1937 = vrot.slane %v1931, 2
        %v1938 = vrot.slane %v1932, 2
        %v1939 = vsel %vm1782, %v1937, %v1938
        %v1940 = vrot.slane %v1933, 2
        %v1941 = vsel %vm1782, %v1938, %v1940
        %1942 = vrot.lane.b32.xlu0 %v1939, 3
        %v1943 = vpop.permute.xlu0 %1942
        %1944 = vrot.lane.b32.xlu0 %v1941, 3
        %v1945 = vpop.permute.xlu0 %1944
        %1946 = vrot.lane.b32.xlu0 %v1940, 3
        %v1947 = vpop.permute.xlu0 %1946
        %v1951 = vadd.f32 %v1797, %v1943
        %v1952 = vadd.f32 %v1798, %v1945
        %v1953 = vadd.f32 %v1799, %v1947
        %1954 = vrot.lane.b32.xlu0 %v1635, 127
        %v1955 = vpop.permute.xlu0 %1954
        %1956 = vrot.lane.b32.xlu0 %v1637, 127
        %v1957 = vpop.permute.xlu0 %1956
        %1958 = vrot.lane.b32.xlu0 %v1639, 127
        %v1959 = vpop.permute.xlu0 %1958
        %v1963 = vsub.f32 %v136, %v1955
        %v1964 = vsub.f32 %v137, %v1957
        %v1965 = vsub.f32 %v138, %v1959
        %1966 = vrot.lane.b32.xlu0 %v1652, 127
        %v1967 = vpop.permute.xlu0 %1966
        %1968 = vrot.lane.b32.xlu0 %v1654, 127
        %v1969 = vpop.permute.xlu0 %1968
        %1970 = vrot.lane.b32.xlu0 %v1656, 127
        %v1971 = vpop.permute.xlu0 %1970
        %v1975 = vsub.f32 %v139, %v1967
        %v1976 = vsub.f32 %v140, %v1969
        %v1977 = vsub.f32 %v141, %v1971
        %v1978 = vmul.f32 %v1963, %v1963
        %v1979 = vmul.f32 %v1964, %v1964
        %v1980 = vmul.f32 %v1965, %v1965
        %v1981 = vadd.f32 %v1978, 0.81
        %v1982 = vadd.f32 %v1979, 0.81
        %v1983 = vadd.f32 %v1980, 0.81
        %v1984 = vrsqrt.pop %v1981
        %v1985 = vmul.f32 %v1984, %v1981
        %v1986 = vmul.f32 %v1985, %v1984
        %v1987 = vmul.f32 0.5, %v1986
        %v1988 = vsub.f32 1.5, %v1987
        %v1989 = vmul.f32 %v1984, %v1988
        %vm1990 = vweird.f32 %v1981
        %vm1991 = vweird.f32 %v1984
        %vm1992 = vmor %vm1990, %vm1991
        %v1993 = vsel %vm1992, %v1984, %v1989
        %v1994 = vrsqrt.pop %v1982
        %v1995 = vmul.f32 %v1994, %v1982
        %v1996 = vmul.f32 %v1995, %v1994
        %v1997 = vmul.f32 0.5, %v1996
        %v1998 = vsub.f32 1.5, %v1997
        %v1999 = vmul.f32 %v1994, %v1998
        %vm2000 = vweird.f32 %v1982
        %vm2001 = vweird.f32 %v1994
        %vm2002 = vmor %vm2000, %vm2001
        %v2003 = vsel %vm2002, %v1994, %v1999
        %v2004 = vrsqrt.pop %v1983
        %v2005 = vmul.f32 %v2004, %v1983
        %v2006 = vmul.f32 %v2005, %v2004
        %v2007 = vmul.f32 0.5, %v2006
        %v2008 = vsub.f32 1.5, %v2007
        %v2009 = vmul.f32 %v2004, %v2008
        %vm2010 = vweird.f32 %v1983
        %vm2011 = vweird.f32 %v2004
        %vm2012 = vmor %vm2010, %vm2011
        %v2013 = vsel %vm2012, %v2004, %v2009
        %v2014 = vmul.f32 %v1963, %v1993
        %v2015 = vmul.f32 %v1964, %v2003
        %v2016 = vmul.f32 %v1965, %v2013
        %v2017 = vmul.f32 %v1975, %v1975
        %v2018 = vmul.f32 %v1976, %v1976
        %v2019 = vmul.f32 %v1977, %v1977
        %v2020 = vadd.f32 %v2017, 0.81
        %v2021 = vadd.f32 %v2018, 0.81
        %v2022 = vadd.f32 %v2019, 0.81
        %v2023 = vrsqrt.pop %v2020
        %v2024 = vmul.f32 %v2023, %v2020
        %v2025 = vmul.f32 %v2024, %v2023
        %v2026 = vmul.f32 0.5, %v2025
        %v2027 = vsub.f32 1.5, %v2026
        %v2028 = vmul.f32 %v2023, %v2027
        %vm2029 = vweird.f32 %v2020
        %vm2030 = vweird.f32 %v2023
        %vm2031 = vmor %vm2029, %vm2030
        %v2032 = vsel %vm2031, %v2023, %v2028
        %v2033 = vrsqrt.pop %v2021
        %v2034 = vmul.f32 %v2033, %v2021
        %v2035 = vmul.f32 %v2034, %v2033
        %v2036 = vmul.f32 0.5, %v2035
        %v2037 = vsub.f32 1.5, %v2036
        %v2038 = vmul.f32 %v2033, %v2037
        %vm2039 = vweird.f32 %v2021
        %vm2040 = vweird.f32 %v2033
        %vm2041 = vmor %vm2039, %vm2040
        %v2042 = vsel %vm2041, %v2033, %v2038
        %v2043 = vrsqrt.pop %v2022
        %v2044 = vmul.f32 %v2043, %v2022
        %v2045 = vmul.f32 %v2044, %v2043
        %v2046 = vmul.f32 0.5, %v2045
        %v2047 = vsub.f32 1.5, %v2046
        %v2048 = vmul.f32 %v2043, %v2047
        %vm2049 = vweird.f32 %v2022
        %vm2050 = vweird.f32 %v2043
        %vm2051 = vmor %vm2049, %vm2050
        %v2052 = vsel %vm2051, %v2043, %v2048
        %v2053 = vmul.f32 %v1975, %v2032
        %v2054 = vmul.f32 %v1976, %v2042
        %v2055 = vmul.f32 %v1977, %v2052
        %v2056 = vsub.f32 %v2014, %v2053
        %v2057 = vsub.f32 %v2015, %v2054
        %v2058 = vsub.f32 %v2016, %v2055
        %v2059 = vmul.f32 %v2056, %v2056
        %v2060 = vmul.f32 %v2057, %v2057
        %v2061 = vmul.f32 %v2058, %v2058
        %v2062 = vadd.f32 %v2059, 0.1
        %v2063 = vadd.f32 %v2060, 0.1
        %v2064 = vadd.f32 %v2061, 0.1
        %v2065 = vrcp.pop %v2062
        %v2066 = vrcp.pop %v2063
        %v2067 = vrcp.pop %v2064
        %v2071 = vrot.slane %v2065, 6
        %v2072 = vrot.slane %v2066, 6
        %v2073 = vsel %vm1634, %v2071, %v2072
        %v2074 = vrot.slane %v2067, 6
        %v2075 = vsel %vm1634, %v2072, %v2074
        %2076 = vrot.lane.b32.xlu0 %v2071, 127
        %v2077 = vpop.permute.xlu0 %2076
        %2078 = vrot.lane.b32.xlu0 %v2073, 127
        %v2079 = vpop.permute.xlu0 %2078
        %2080 = vrot.lane.b32.xlu0 %v2075, 127
        %v2081 = vpop.permute.xlu0 %2080
        %v2085 = vadd.f32 %v2065, %v2077
        %v2086 = vadd.f32 %v2066, %v2079
        %v2087 = vadd.f32 %v2067, %v2081
        %v2091 = vrot.slane %v2085, 2
        %v2092 = vrot.slane %v2086, 2
        %v2093 = vsel %vm1782, %v2091, %v2092
        %v2094 = vrot.slane %v2087, 2
        %v2095 = vsel %vm1782, %v2092, %v2094
        %2096 = vrot.lane.b32.xlu0 %v2093, 2
        %v2097 = vpop.permute.xlu0 %2096
        %2098 = vrot.lane.b32.xlu0 %v2095, 2
        %v2099 = vpop.permute.xlu0 %2098
        %2100 = vrot.lane.b32.xlu0 %v2094, 2
        %v2101 = vpop.permute.xlu0 %2100
        %v2105 = vadd.f32 %v1951, %v2097
        %v2106 = vadd.f32 %v1952, %v2099
        %v2107 = vadd.f32 %v1953, %v2101
        %v2111 = vsub.f32 %v136, %v1635
        %v2112 = vsub.f32 %v137, %v1637
        %v2113 = vsub.f32 %v138, %v1639
        %v2117 = vsub.f32 %v139, %v1652
        %v2118 = vsub.f32 %v140, %v1654
        %v2119 = vsub.f32 %v141, %v1656
        %v2120 = vmul.f32 %v2111, %v2111
        %v2121 = vmul.f32 %v2112, %v2112
        %v2122 = vmul.f32 %v2113, %v2113
        %v2123 = vadd.f32 %v2120, 0.81
        %v2124 = vadd.f32 %v2121, 0.81
        %v2125 = vadd.f32 %v2122, 0.81
        %v2126 = vrsqrt.pop %v2123
        %v2127 = vmul.f32 %v2126, %v2123
        %v2128 = vmul.f32 %v2127, %v2126
        %v2129 = vmul.f32 0.5, %v2128
        %v2130 = vsub.f32 1.5, %v2129
        %v2131 = vmul.f32 %v2126, %v2130
        %vm2132 = vweird.f32 %v2123
        %vm2133 = vweird.f32 %v2126
        %vm2134 = vmor %vm2132, %vm2133
        %v2135 = vsel %vm2134, %v2126, %v2131
        %v2136 = vrsqrt.pop %v2124
        %v2137 = vmul.f32 %v2136, %v2124
        %v2138 = vmul.f32 %v2137, %v2136
        %v2139 = vmul.f32 0.5, %v2138
        %v2140 = vsub.f32 1.5, %v2139
        %v2141 = vmul.f32 %v2136, %v2140
        %vm2142 = vweird.f32 %v2124
        %vm2143 = vweird.f32 %v2136
        %vm2144 = vmor %vm2142, %vm2143
        %v2145 = vsel %vm2144, %v2136, %v2141
        %v2146 = vrsqrt.pop %v2125
        %v2147 = vmul.f32 %v2146, %v2125
        %v2148 = vmul.f32 %v2147, %v2146
        %v2149 = vmul.f32 0.5, %v2148
        %v2150 = vsub.f32 1.5, %v2149
        %v2151 = vmul.f32 %v2146, %v2150
        %vm2152 = vweird.f32 %v2125
        %vm2153 = vweird.f32 %v2146
        %vm2154 = vmor %vm2152, %vm2153
        %v2155 = vsel %vm2154, %v2146, %v2151
        %v2156 = vmul.f32 %v2111, %v2135
        %v2157 = vmul.f32 %v2112, %v2145
        %v2158 = vmul.f32 %v2113, %v2155
        %v2159 = vmul.f32 %v2117, %v2117
        %v2160 = vmul.f32 %v2118, %v2118
        %v2161 = vmul.f32 %v2119, %v2119
        %v2162 = vadd.f32 %v2159, 0.81
        %v2163 = vadd.f32 %v2160, 0.81
        %v2164 = vadd.f32 %v2161, 0.81
        %v2165 = vrsqrt.pop %v2162
        %v2166 = vmul.f32 %v2165, %v2162
        %v2167 = vmul.f32 %v2166, %v2165
        %v2168 = vmul.f32 0.5, %v2167
        %v2169 = vsub.f32 1.5, %v2168
        %v2170 = vmul.f32 %v2165, %v2169
        %vm2171 = vweird.f32 %v2162
        %vm2172 = vweird.f32 %v2165
        %vm2173 = vmor %vm2171, %vm2172
        %v2174 = vsel %vm2173, %v2165, %v2170
        %v2175 = vrsqrt.pop %v2163
        %v2176 = vmul.f32 %v2175, %v2163
        %v2177 = vmul.f32 %v2176, %v2175
        %v2178 = vmul.f32 0.5, %v2177
        %v2179 = vsub.f32 1.5, %v2178
        %v2180 = vmul.f32 %v2175, %v2179
        %vm2181 = vweird.f32 %v2163
        %vm2182 = vweird.f32 %v2175
        %vm2183 = vmor %vm2181, %vm2182
        %v2184 = vsel %vm2183, %v2175, %v2180
        %v2185 = vrsqrt.pop %v2164
        %v2186 = vmul.f32 %v2185, %v2164
        %v2187 = vmul.f32 %v2186, %v2185
        %v2188 = vmul.f32 0.5, %v2187
        %v2189 = vsub.f32 1.5, %v2188
        %v2190 = vmul.f32 %v2185, %v2189
        %vm2191 = vweird.f32 %v2164
        %vm2192 = vweird.f32 %v2185
        %vm2193 = vmor %vm2191, %vm2192
        %v2194 = vsel %vm2193, %v2185, %v2190
        %v2195 = vmul.f32 %v2117, %v2174
        %v2196 = vmul.f32 %v2118, %v2184
        %v2197 = vmul.f32 %v2119, %v2194
        %v2198 = vsub.f32 %v2156, %v2195
        %v2199 = vsub.f32 %v2157, %v2196
        %v2200 = vsub.f32 %v2158, %v2197
        %v2201 = vmul.f32 %v2198, %v2198
        %v2202 = vmul.f32 %v2199, %v2199
        %v2203 = vmul.f32 %v2200, %v2200
        %v2204 = vadd.f32 %v2201, 0.1
        %v2205 = vadd.f32 %v2202, 0.1
        %v2206 = vadd.f32 %v2203, 0.1
        %v2207 = vrcp.pop %v2204
        %v2208 = vrcp.pop %v2205
        %v2209 = vrcp.pop %v2206
        %v2213 = vrot.slane %v2207, 6
        %v2214 = vrot.slane %v2208, 6
        %v2215 = vsel %vm1634, %v2213, %v2214
        %v2216 = vrot.slane %v2209, 6
        %v2217 = vsel %vm1634, %v2214, %v2216
        %v2221 = vadd.f32 %v2207, %v2213
        %v2222 = vadd.f32 %v2208, %v2215
        %v2223 = vadd.f32 %v2209, %v2217
        %v2227 = vrot.slane %v2221, 2
        %v2228 = vrot.slane %v2222, 2
        %v2229 = vsel %vm1782, %v2227, %v2228
        %v2230 = vrot.slane %v2223, 2
        %v2231 = vsel %vm1782, %v2228, %v2230
        %2232 = vrot.lane.b32.xlu0 %v2229, 1
        %v2233 = vpop.permute.xlu0 %2232
        %2234 = vrot.lane.b32.xlu0 %v2231, 1
        %v2235 = vpop.permute.xlu0 %2234
        %2236 = vrot.lane.b32.xlu0 %v2230, 1
        %v2237 = vpop.permute.xlu0 %2236
        %v2241 = vadd.f32 %v2105, %v2233
        %v2242 = vadd.f32 %v2106, %v2235
        %v2243 = vadd.f32 %v2107, %v2237
        %2244 = vrot.lane.b32.xlu0 %v1635, 1
        %v2245 = vpop.permute.xlu0 %2244
        %2246 = vrot.lane.b32.xlu0 %v1637, 1
        %v2247 = vpop.permute.xlu0 %2246
        %2248 = vrot.lane.b32.xlu0 %v1639, 1
        %v2249 = vpop.permute.xlu0 %2248
        %v2253 = vsub.f32 %v136, %v2245
        %v2254 = vsub.f32 %v137, %v2247
        %v2255 = vsub.f32 %v138, %v2249
        %2256 = vrot.lane.b32.xlu0 %v1652, 1
        %v2257 = vpop.permute.xlu0 %2256
        %2258 = vrot.lane.b32.xlu0 %v1654, 1
        %v2259 = vpop.permute.xlu0 %2258
        %2260 = vrot.lane.b32.xlu0 %v1656, 1
        %v2261 = vpop.permute.xlu0 %2260
        %v2265 = vsub.f32 %v139, %v2257
        %v2266 = vsub.f32 %v140, %v2259
        %v2267 = vsub.f32 %v141, %v2261
        %v2268 = vmul.f32 %v2253, %v2253
        %v2269 = vmul.f32 %v2254, %v2254
        %v2270 = vmul.f32 %v2255, %v2255
        %v2271 = vadd.f32 %v2268, 0.81
        %v2272 = vadd.f32 %v2269, 0.81
        %v2273 = vadd.f32 %v2270, 0.81
        %v2274 = vrsqrt.pop %v2271
        %v2275 = vmul.f32 %v2274, %v2271
        %v2276 = vmul.f32 %v2275, %v2274
        %v2277 = vmul.f32 0.5, %v2276
        %v2278 = vsub.f32 1.5, %v2277
        %v2279 = vmul.f32 %v2274, %v2278
        %vm2280 = vweird.f32 %v2271
        %vm2281 = vweird.f32 %v2274
        %vm2282 = vmor %vm2280, %vm2281
        %v2283 = vsel %vm2282, %v2274, %v2279
        %v2284 = vrsqrt.pop %v2272
        %v2285 = vmul.f32 %v2284, %v2272
        %v2286 = vmul.f32 %v2285, %v2284
        %v2287 = vmul.f32 0.5, %v2286
        %v2288 = vsub.f32 1.5, %v2287
        %v2289 = vmul.f32 %v2284, %v2288
        %vm2290 = vweird.f32 %v2272
        %vm2291 = vweird.f32 %v2284
        %vm2292 = vmor %vm2290, %vm2291
        %v2293 = vsel %vm2292, %v2284, %v2289
        %v2294 = vrsqrt.pop %v2273
        %v2295 = vmul.f32 %v2294, %v2273
        %v2296 = vmul.f32 %v2295, %v2294
        %v2297 = vmul.f32 0.5, %v2296
        %v2298 = vsub.f32 1.5, %v2297
        %v2299 = vmul.f32 %v2294, %v2298
        %vm2300 = vweird.f32 %v2273
        %vm2301 = vweird.f32 %v2294
        %vm2302 = vmor %vm2300, %vm2301
        %v2303 = vsel %vm2302, %v2294, %v2299
        %v2304 = vmul.f32 %v2253, %v2283
        %v2305 = vmul.f32 %v2254, %v2293
        %v2306 = vmul.f32 %v2255, %v2303
        %v2307 = vmul.f32 %v2265, %v2265
        %v2308 = vmul.f32 %v2266, %v2266
        %v2309 = vmul.f32 %v2267, %v2267
        %v2310 = vadd.f32 %v2307, 0.81
        %v2311 = vadd.f32 %v2308, 0.81
        %v2312 = vadd.f32 %v2309, 0.81
        %v2313 = vrsqrt.pop %v2310
        %v2314 = vmul.f32 %v2313, %v2310
        %v2315 = vmul.f32 %v2314, %v2313
        %v2316 = vmul.f32 0.5, %v2315
        %v2317 = vsub.f32 1.5, %v2316
        %v2318 = vmul.f32 %v2313, %v2317
        %vm2319 = vweird.f32 %v2310
        %vm2320 = vweird.f32 %v2313
        %vm2321 = vmor %vm2319, %vm2320
        %v2322 = vsel %vm2321, %v2313, %v2318
        %v2323 = vrsqrt.pop %v2311
        %v2324 = vmul.f32 %v2323, %v2311
        %v2325 = vmul.f32 %v2324, %v2323
        %v2326 = vmul.f32 0.5, %v2325
        %v2327 = vsub.f32 1.5, %v2326
        %v2328 = vmul.f32 %v2323, %v2327
        %vm2329 = vweird.f32 %v2311
        %vm2330 = vweird.f32 %v2323
        %vm2331 = vmor %vm2329, %vm2330
        %v2332 = vsel %vm2331, %v2323, %v2328
        %v2333 = vrsqrt.pop %v2312
        %v2334 = vmul.f32 %v2333, %v2312
        %v2335 = vmul.f32 %v2334, %v2333
        %v2336 = vmul.f32 0.5, %v2335
        %v2337 = vsub.f32 1.5, %v2336
        %v2338 = vmul.f32 %v2333, %v2337
        %vm2339 = vweird.f32 %v2312
        %vm2340 = vweird.f32 %v2333
        %vm2341 = vmor %vm2339, %vm2340
        %v2342 = vsel %vm2341, %v2333, %v2338
        %v2343 = vmul.f32 %v2265, %v2322
        %v2344 = vmul.f32 %v2266, %v2332
        %v2345 = vmul.f32 %v2267, %v2342
        %v2346 = vsub.f32 %v2304, %v2343
        %v2347 = vsub.f32 %v2305, %v2344
        %v2348 = vsub.f32 %v2306, %v2345
        %v2349 = vmul.f32 %v2346, %v2346
        %v2350 = vmul.f32 %v2347, %v2347
        %v2351 = vmul.f32 %v2348, %v2348
        %v2352 = vadd.f32 %v2349, 0.1
        %v2353 = vadd.f32 %v2350, 0.1
        %v2354 = vadd.f32 %v2351, 0.1
        %v2355 = vrcp.pop %v2352
        %v2356 = vrcp.pop %v2353
        %v2357 = vrcp.pop %v2354
        %v2361 = vrot.slane %v2355, 6
        %v2362 = vrot.slane %v2356, 6
        %v2363 = vsel %vm1634, %v2361, %v2362
        %v2364 = vrot.slane %v2357, 6
        %v2365 = vsel %vm1634, %v2362, %v2364
        %2366 = vrot.lane.b32.xlu0 %v2361, 1
        %v2367 = vpop.permute.xlu0 %2366
        %2368 = vrot.lane.b32.xlu0 %v2363, 1
        %v2369 = vpop.permute.xlu0 %2368
        %2370 = vrot.lane.b32.xlu0 %v2365, 1
        %v2371 = vpop.permute.xlu0 %2370
        %v2375 = vadd.f32 %v2355, %v2367
        %v2376 = vadd.f32 %v2356, %v2369
        %v2377 = vadd.f32 %v2357, %v2371
        %v2381 = vrot.slane %v2375, 2
        %v2382 = vrot.slane %v2376, 2
        %v2383 = vsel %vm1782, %v2381, %v2382
        %v2384 = vrot.slane %v2377, 2
        %v2385 = vsel %vm1782, %v2382, %v2384
        %v2389 = vadd.f32 %v2241, %v2383
        %v2390 = vadd.f32 %v2242, %v2385
        %v2391 = vadd.f32 %v2243, %v2384
        %2392 = vrot.lane.b32.xlu0 %v1635, 2
        %v2393 = vpop.permute.xlu0 %2392
        %2394 = vrot.lane.b32.xlu0 %v1637, 2
        %v2395 = vpop.permute.xlu0 %2394
        %2396 = vrot.lane.b32.xlu0 %v1639, 2
        %v2397 = vpop.permute.xlu0 %2396
        %v2401 = vsub.f32 %v136, %v2393
        %v2402 = vsub.f32 %v137, %v2395
        %v2403 = vsub.f32 %v138, %v2397
        %2404 = vrot.lane.b32.xlu0 %v1652, 2
        %v2405 = vpop.permute.xlu0 %2404
        %2406 = vrot.lane.b32.xlu0 %v1654, 2
        %v2407 = vpop.permute.xlu0 %2406
        %2408 = vrot.lane.b32.xlu0 %v1656, 2
        %v2409 = vpop.permute.xlu0 %2408
        %v2413 = vsub.f32 %v139, %v2405
        %v2414 = vsub.f32 %v140, %v2407
        %v2415 = vsub.f32 %v141, %v2409
        %v2416 = vmul.f32 %v2401, %v2401
        %v2417 = vmul.f32 %v2402, %v2402
        %v2418 = vmul.f32 %v2403, %v2403
        %v2419 = vadd.f32 %v2416, 0.81
        %v2420 = vadd.f32 %v2417, 0.81
        %v2421 = vadd.f32 %v2418, 0.81
        %v2422 = vrsqrt.pop %v2419
        %v2423 = vmul.f32 %v2422, %v2419
        %v2424 = vmul.f32 %v2423, %v2422
        %v2425 = vmul.f32 0.5, %v2424
        %v2426 = vsub.f32 1.5, %v2425
        %v2427 = vmul.f32 %v2422, %v2426
        %vm2428 = vweird.f32 %v2419
        %vm2429 = vweird.f32 %v2422
        %vm2430 = vmor %vm2428, %vm2429
        %v2431 = vsel %vm2430, %v2422, %v2427
        %v2432 = vrsqrt.pop %v2420
        %v2433 = vmul.f32 %v2432, %v2420
        %v2434 = vmul.f32 %v2433, %v2432
        %v2435 = vmul.f32 0.5, %v2434
        %v2436 = vsub.f32 1.5, %v2435
        %v2437 = vmul.f32 %v2432, %v2436
        %vm2438 = vweird.f32 %v2420
        %vm2439 = vweird.f32 %v2432
        %vm2440 = vmor %vm2438, %vm2439
        %v2441 = vsel %vm2440, %v2432, %v2437
        %v2442 = vrsqrt.pop %v2421
        %v2443 = vmul.f32 %v2442, %v2421
        %v2444 = vmul.f32 %v2443, %v2442
        %v2445 = vmul.f32 0.5, %v2444
        %v2446 = vsub.f32 1.5, %v2445
        %v2447 = vmul.f32 %v2442, %v2446
        %vm2448 = vweird.f32 %v2421
        %vm2449 = vweird.f32 %v2442
        %vm2450 = vmor %vm2448, %vm2449
        %v2451 = vsel %vm2450, %v2442, %v2447
        %v2452 = vmul.f32 %v2401, %v2431
        %v2453 = vmul.f32 %v2402, %v2441
        %v2454 = vmul.f32 %v2403, %v2451
        %v2455 = vmul.f32 %v2413, %v2413
        %v2456 = vmul.f32 %v2414, %v2414
        %v2457 = vmul.f32 %v2415, %v2415
        %v2458 = vadd.f32 %v2455, 0.81
        %v2459 = vadd.f32 %v2456, 0.81
        %v2460 = vadd.f32 %v2457, 0.81
        %v2461 = vrsqrt.pop %v2458
        %v2462 = vmul.f32 %v2461, %v2458
        %v2463 = vmul.f32 %v2462, %v2461
        %v2464 = vmul.f32 0.5, %v2463
        %v2465 = vsub.f32 1.5, %v2464
        %v2466 = vmul.f32 %v2461, %v2465
        %vm2467 = vweird.f32 %v2458
        %vm2468 = vweird.f32 %v2461
        %vm2469 = vmor %vm2467, %vm2468
        %v2470 = vsel %vm2469, %v2461, %v2466
        %v2471 = vrsqrt.pop %v2459
        %v2472 = vmul.f32 %v2471, %v2459
        %v2473 = vmul.f32 %v2472, %v2471
        %v2474 = vmul.f32 0.5, %v2473
        %v2475 = vsub.f32 1.5, %v2474
        %v2476 = vmul.f32 %v2471, %v2475
        %vm2477 = vweird.f32 %v2459
        %vm2478 = vweird.f32 %v2471
        %vm2479 = vmor %vm2477, %vm2478
        %v2480 = vsel %vm2479, %v2471, %v2476
        %v2481 = vrsqrt.pop %v2460
        %v2482 = vmul.f32 %v2481, %v2460
        %v2483 = vmul.f32 %v2482, %v2481
        %v2484 = vmul.f32 0.5, %v2483
        %v2485 = vsub.f32 1.5, %v2484
        %v2486 = vmul.f32 %v2481, %v2485
        %vm2487 = vweird.f32 %v2460
        %vm2488 = vweird.f32 %v2481
        %vm2489 = vmor %vm2487, %vm2488
        %v2490 = vsel %vm2489, %v2481, %v2486
        %v2491 = vmul.f32 %v2413, %v2470
        %v2492 = vmul.f32 %v2414, %v2480
        %v2493 = vmul.f32 %v2415, %v2490
        %v2494 = vsub.f32 %v2452, %v2491
        %v2495 = vsub.f32 %v2453, %v2492
        %v2496 = vsub.f32 %v2454, %v2493
        %v2497 = vmul.f32 %v2494, %v2494
        %v2498 = vmul.f32 %v2495, %v2495
        %v2499 = vmul.f32 %v2496, %v2496
        %v2500 = vadd.f32 %v2497, 0.1
        %v2501 = vadd.f32 %v2498, 0.1
        %v2502 = vadd.f32 %v2499, 0.1
        %v2503 = vrcp.pop %v2500
        %v2504 = vrcp.pop %v2501
        %v2505 = vrcp.pop %v2502
        %v2509 = vrot.slane %v2503, 6
        %v2510 = vrot.slane %v2504, 6
        %v2511 = vsel %vm1634, %v2509, %v2510
        %v2512 = vrot.slane %v2505, 6
        %v2513 = vsel %vm1634, %v2510, %v2512
        %2514 = vrot.lane.b32.xlu0 %v2509, 2
        %v2515 = vpop.permute.xlu0 %2514
        %2516 = vrot.lane.b32.xlu0 %v2511, 2
        %v2517 = vpop.permute.xlu0 %2516
        %2518 = vrot.lane.b32.xlu0 %v2513, 2
        %v2519 = vpop.permute.xlu0 %2518
        %v2523 = vadd.f32 %v2503, %v2515
        %v2524 = vadd.f32 %v2504, %v2517
        %v2525 = vadd.f32 %v2505, %v2519
        %v2529 = vrot.slane %v2523, 2
        %v2530 = vrot.slane %v2524, 2
        %v2531 = vsel %vm1782, %v2529, %v2530
        %v2532 = vrot.slane %v2525, 2
        %v2533 = vsel %vm1782, %v2530, %v2532
        %2534 = vrot.lane.b32.xlu0 %v2531, 127
        %v2535 = vpop.permute.xlu0 %2534
        %2536 = vrot.lane.b32.xlu0 %v2533, 127
        %v2537 = vpop.permute.xlu0 %2536
        %2538 = vrot.lane.b32.xlu0 %v2532, 127
        %v2539 = vpop.permute.xlu0 %2538
        %v2543 = vadd.f32 %v2389, %v2535
        %v2544 = vadd.f32 %v2390, %v2537
        %v2545 = vadd.f32 %v2391, %v2539
        %2546 = vrot.lane.b32.xlu0 %v1635, 3
        %v2547 = vpop.permute.xlu0 %2546
        %2548 = vrot.lane.b32.xlu0 %v1637, 3
        %v2549 = vpop.permute.xlu0 %2548
        %2550 = vrot.lane.b32.xlu0 %v1639, 3
        %v2551 = vpop.permute.xlu0 %2550
        %v2555 = vsub.f32 %v136, %v2547
        %v2556 = vsub.f32 %v137, %v2549
        %v2557 = vsub.f32 %v138, %v2551
        %2558 = vrot.lane.b32.xlu0 %v1652, 3
        %v2559 = vpop.permute.xlu0 %2558
        %2560 = vrot.lane.b32.xlu0 %v1654, 3
        %v2561 = vpop.permute.xlu0 %2560
        %2562 = vrot.lane.b32.xlu0 %v1656, 3
        %v2563 = vpop.permute.xlu0 %2562
        %v2567 = vsub.f32 %v139, %v2559
        %v2568 = vsub.f32 %v140, %v2561
        %v2569 = vsub.f32 %v141, %v2563
        %v2570 = vmul.f32 %v2555, %v2555
        %v2571 = vmul.f32 %v2556, %v2556
        %v2572 = vmul.f32 %v2557, %v2557
        %v2573 = vadd.f32 %v2570, 0.81
        %v2574 = vadd.f32 %v2571, 0.81
        %v2575 = vadd.f32 %v2572, 0.81
        %v2576 = vrsqrt.pop %v2573
        %v2577 = vmul.f32 %v2576, %v2573
        %v2578 = vmul.f32 %v2577, %v2576
        %v2579 = vmul.f32 0.5, %v2578
        %v2580 = vsub.f32 1.5, %v2579
        %v2581 = vmul.f32 %v2576, %v2580
        %vm2582 = vweird.f32 %v2573
        %vm2583 = vweird.f32 %v2576
        %vm2584 = vmor %vm2582, %vm2583
        %v2585 = vsel %vm2584, %v2576, %v2581
        %v2586 = vrsqrt.pop %v2574
        %v2587 = vmul.f32 %v2586, %v2574
        %v2588 = vmul.f32 %v2587, %v2586
        %v2589 = vmul.f32 0.5, %v2588
        %v2590 = vsub.f32 1.5, %v2589
        %v2591 = vmul.f32 %v2586, %v2590
        %vm2592 = vweird.f32 %v2574
        %vm2593 = vweird.f32 %v2586
        %vm2594 = vmor %vm2592, %vm2593
        %v2595 = vsel %vm2594, %v2586, %v2591
        %v2596 = vrsqrt.pop %v2575
        %v2597 = vmul.f32 %v2596, %v2575
        %v2598 = vmul.f32 %v2597, %v2596
        %v2599 = vmul.f32 0.5, %v2598
        %v2600 = vsub.f32 1.5, %v2599
        %v2601 = vmul.f32 %v2596, %v2600
        %vm2602 = vweird.f32 %v2575
        %vm2603 = vweird.f32 %v2596
        %vm2604 = vmor %vm2602, %vm2603
        %v2605 = vsel %vm2604, %v2596, %v2601
        %v2606 = vmul.f32 %v2555, %v2585
        %v2607 = vmul.f32 %v2556, %v2595
        %v2608 = vmul.f32 %v2557, %v2605
        %v2609 = vmul.f32 %v2567, %v2567
        %v2610 = vmul.f32 %v2568, %v2568
        %v2611 = vmul.f32 %v2569, %v2569
        %v2612 = vadd.f32 %v2609, 0.81
        %v2613 = vadd.f32 %v2610, 0.81
        %v2614 = vadd.f32 %v2611, 0.81
        %v2615 = vrsqrt.pop %v2612
        %v2616 = vmul.f32 %v2615, %v2612
        %v2617 = vmul.f32 %v2616, %v2615
        %v2618 = vmul.f32 0.5, %v2617
        %v2619 = vsub.f32 1.5, %v2618
        %v2620 = vmul.f32 %v2615, %v2619
        %vm2621 = vweird.f32 %v2612
        %vm2622 = vweird.f32 %v2615
        %vm2623 = vmor %vm2621, %vm2622
        %v2624 = vsel %vm2623, %v2615, %v2620
        %v2625 = vrsqrt.pop %v2613
        %v2626 = vmul.f32 %v2625, %v2613
        %v2627 = vmul.f32 %v2626, %v2625
        %v2628 = vmul.f32 0.5, %v2627
        %v2629 = vsub.f32 1.5, %v2628
        %v2630 = vmul.f32 %v2625, %v2629
        %vm2631 = vweird.f32 %v2613
        %vm2632 = vweird.f32 %v2625
        %vm2633 = vmor %vm2631, %vm2632
        %v2634 = vsel %vm2633, %v2625, %v2630
        %v2635 = vrsqrt.pop %v2614
        %v2636 = vmul.f32 %v2635, %v2614
        %v2637 = vmul.f32 %v2636, %v2635
        %v2638 = vmul.f32 0.5, %v2637
        %v2639 = vsub.f32 1.5, %v2638
        %v2640 = vmul.f32 %v2635, %v2639
        %vm2641 = vweird.f32 %v2614
        %vm2642 = vweird.f32 %v2635
        %vm2643 = vmor %vm2641, %vm2642
        %v2644 = vsel %vm2643, %v2635, %v2640
        %v2645 = vmul.f32 %v2567, %v2624
        %v2646 = vmul.f32 %v2568, %v2634
        %v2647 = vmul.f32 %v2569, %v2644
        %v2648 = vsub.f32 %v2606, %v2645
        %v2649 = vsub.f32 %v2607, %v2646
        %v2650 = vsub.f32 %v2608, %v2647
        %v2651 = vmul.f32 %v2648, %v2648
        %v2652 = vmul.f32 %v2649, %v2649
        %v2653 = vmul.f32 %v2650, %v2650
        %v2654 = vadd.f32 %v2651, 0.1
        %v2655 = vadd.f32 %v2652, 0.1
        %v2656 = vadd.f32 %v2653, 0.1
        %v2657 = vrcp.pop %v2654
        %v2658 = vrcp.pop %v2655
        %v2659 = vrcp.pop %v2656
        %v2663 = vrot.slane %v2657, 6
        %v2664 = vrot.slane %v2658, 6
        %v2665 = vsel %vm1634, %v2663, %v2664
        %v2666 = vrot.slane %v2659, 6
        %v2667 = vsel %vm1634, %v2664, %v2666
        %2668 = vrot.lane.b32.xlu0 %v2663, 3
        %v2669 = vpop.permute.xlu0 %2668
        %2670 = vrot.lane.b32.xlu0 %v2665, 3
        %v2671 = vpop.permute.xlu0 %2670
        %2672 = vrot.lane.b32.xlu0 %v2667, 3
        %v2673 = vpop.permute.xlu0 %2672
        %v2677 = vadd.f32 %v2657, %v2669
        %v2678 = vadd.f32 %v2658, %v2671
        %v2679 = vadd.f32 %v2659, %v2673
        %v2683 = vrot.slane %v2677, 2
        %v2684 = vrot.slane %v2678, 2
        %v2685 = vsel %vm1782, %v2683, %v2684
        %v2686 = vrot.slane %v2679, 2
        %v2687 = vsel %vm1782, %v2684, %v2686
        %2688 = vrot.lane.b32.xlu0 %v2685, 126
        %v2689 = vpop.permute.xlu0 %2688
        %2690 = vrot.lane.b32.xlu0 %v2687, 126
        %v2691 = vpop.permute.xlu0 %2690
        %2692 = vrot.lane.b32.xlu0 %v2686, 126
        %v2693 = vpop.permute.xlu0 %2692
        %v2697 = vadd.f32 %v2543, %v2689
        %v2698 = vadd.f32 %v2544, %v2691
        %v2699 = vadd.f32 %v2545, %v2693
        %vm2700 = vcmask 1042432
        %v2701 = vrot.slane %v136, 5
        %v2702 = vrot.slane %v137, 5
        %v2703 = vsel %vm2700, %v2701, %v2702
        %v2704 = vrot.slane %v138, 5
        %v2705 = vsel %vm2700, %v2702, %v2704
        %2706 = vrot.lane.b32.xlu0 %v2701, 125
        %v2707 = vpop.permute.xlu0 %2706
        %2708 = vrot.lane.b32.xlu0 %v2703, 125
        %v2709 = vpop.permute.xlu0 %2708
        %2710 = vrot.lane.b32.xlu0 %v2705, 125
        %v2711 = vpop.permute.xlu0 %2710
        %v2715 = vsub.f32 %v136, %v2707
        %v2716 = vsub.f32 %v137, %v2709
        %v2717 = vsub.f32 %v138, %v2711
        %v2718 = vrot.slane %v139, 5
        %v2719 = vrot.slane %v140, 5
        %v2720 = vsel %vm2700, %v2718, %v2719
        %v2721 = vrot.slane %v141, 5
        %v2722 = vsel %vm2700, %v2719, %v2721
        %2723 = vrot.lane.b32.xlu0 %v2718, 125
        %v2724 = vpop.permute.xlu0 %2723
        %2725 = vrot.lane.b32.xlu0 %v2720, 125
        %v2726 = vpop.permute.xlu0 %2725
        %2727 = vrot.lane.b32.xlu0 %v2722, 125
        %v2728 = vpop.permute.xlu0 %2727
        %v2732 = vsub.f32 %v139, %v2724
        %v2733 = vsub.f32 %v140, %v2726
        %v2734 = vsub.f32 %v141, %v2728
        %v2735 = vmul.f32 %v2715, %v2715
        %v2736 = vmul.f32 %v2716, %v2716
        %v2737 = vmul.f32 %v2717, %v2717
        %v2738 = vadd.f32 %v2735, 0.81
        %v2739 = vadd.f32 %v2736, 0.81
        %v2740 = vadd.f32 %v2737, 0.81
        %v2741 = vrsqrt.pop %v2738
        %v2742 = vmul.f32 %v2741, %v2738
        %v2743 = vmul.f32 %v2742, %v2741
        %v2744 = vmul.f32 0.5, %v2743
        %v2745 = vsub.f32 1.5, %v2744
        %v2746 = vmul.f32 %v2741, %v2745
        %vm2747 = vweird.f32 %v2738
        %vm2748 = vweird.f32 %v2741
        %vm2749 = vmor %vm2747, %vm2748
        %v2750 = vsel %vm2749, %v2741, %v2746
        %v2751 = vrsqrt.pop %v2739
        %v2752 = vmul.f32 %v2751, %v2739
        %v2753 = vmul.f32 %v2752, %v2751
        %v2754 = vmul.f32 0.5, %v2753
        %v2755 = vsub.f32 1.5, %v2754
        %v2756 = vmul.f32 %v2751, %v2755
        %vm2757 = vweird.f32 %v2739
        %vm2758 = vweird.f32 %v2751
        %vm2759 = vmor %vm2757, %vm2758
        %v2760 = vsel %vm2759, %v2751, %v2756
        %v2761 = vrsqrt.pop %v2740
        %v2762 = vmul.f32 %v2761, %v2740
        %v2763 = vmul.f32 %v2762, %v2761
        %v2764 = vmul.f32 0.5, %v2763
        %v2765 = vsub.f32 1.5, %v2764
        %v2766 = vmul.f32 %v2761, %v2765
        %vm2767 = vweird.f32 %v2740
        %vm2768 = vweird.f32 %v2761
        %vm2769 = vmor %vm2767, %vm2768
        %v2770 = vsel %vm2769, %v2761, %v2766
        %v2771 = vmul.f32 %v2715, %v2750
        %v2772 = vmul.f32 %v2716, %v2760
        %v2773 = vmul.f32 %v2717, %v2770
        %v2774 = vmul.f32 %v2732, %v2732
        %v2775 = vmul.f32 %v2733, %v2733
        %v2776 = vmul.f32 %v2734, %v2734
        %v2777 = vadd.f32 %v2774, 0.81
        %v2778 = vadd.f32 %v2775, 0.81
        %v2779 = vadd.f32 %v2776, 0.81
        %v2780 = vrsqrt.pop %v2777
        %v2781 = vmul.f32 %v2780, %v2777
        %v2782 = vmul.f32 %v2781, %v2780
        %v2783 = vmul.f32 0.5, %v2782
        %v2784 = vsub.f32 1.5, %v2783
        %v2785 = vmul.f32 %v2780, %v2784
        %vm2786 = vweird.f32 %v2777
        %vm2787 = vweird.f32 %v2780
        %vm2788 = vmor %vm2786, %vm2787
        %v2789 = vsel %vm2788, %v2780, %v2785
        %v2790 = vrsqrt.pop %v2778
        %v2791 = vmul.f32 %v2790, %v2778
        %v2792 = vmul.f32 %v2791, %v2790
        %v2793 = vmul.f32 0.5, %v2792
        %v2794 = vsub.f32 1.5, %v2793
        %v2795 = vmul.f32 %v2790, %v2794
        %vm2796 = vweird.f32 %v2778
        %vm2797 = vweird.f32 %v2790
        %vm2798 = vmor %vm2796, %vm2797
        %v2799 = vsel %vm2798, %v2790, %v2795
        %v2800 = vrsqrt.pop %v2779
        %v2801 = vmul.f32 %v2800, %v2779
        %v2802 = vmul.f32 %v2801, %v2800
        %v2803 = vmul.f32 0.5, %v2802
        %v2804 = vsub.f32 1.5, %v2803
        %v2805 = vmul.f32 %v2800, %v2804
        %vm2806 = vweird.f32 %v2779
        %vm2807 = vweird.f32 %v2800
        %vm2808 = vmor %vm2806, %vm2807
        %v2809 = vsel %vm2808, %v2800, %v2805
        %v2810 = vmul.f32 %v2732, %v2789
        %v2811 = vmul.f32 %v2733, %v2799
        %v2812 = vmul.f32 %v2734, %v2809
        %v2813 = vsub.f32 %v2771, %v2810
        %v2814 = vsub.f32 %v2772, %v2811
        %v2815 = vsub.f32 %v2773, %v2812
        %v2816 = vmul.f32 %v2813, %v2813
        %v2817 = vmul.f32 %v2814, %v2814
        %v2818 = vmul.f32 %v2815, %v2815
        %v2819 = vadd.f32 %v2816, 0.1
        %v2820 = vadd.f32 %v2817, 0.1
        %v2821 = vadd.f32 %v2818, 0.1
        %v2822 = vrcp.pop %v2819
        %v2823 = vrcp.pop %v2820
        %v2824 = vrcp.pop %v2821
        %v2828 = vrot.slane %v2822, 5
        %v2829 = vrot.slane %v2823, 5
        %v2830 = vsel %vm2700, %v2828, %v2829
        %v2831 = vrot.slane %v2824, 5
        %v2832 = vsel %vm2700, %v2829, %v2831
        %2833 = vrot.lane.b32.xlu0 %v2828, 125
        %v2834 = vpop.permute.xlu0 %2833
        %2835 = vrot.lane.b32.xlu0 %v2830, 125
        %v2836 = vpop.permute.xlu0 %2835
        %2837 = vrot.lane.b32.xlu0 %v2832, 125
        %v2838 = vpop.permute.xlu0 %2837
        %v2842 = vadd.f32 %v2822, %v2834
        %v2843 = vadd.f32 %v2823, %v2836
        %v2844 = vadd.f32 %v2824, %v2838
        %vm2848 = vcmask 1044480
        %v2849 = vrot.slane %v2842, 3
        %v2850 = vrot.slane %v2843, 3
        %v2851 = vsel %vm2848, %v2849, %v2850
        %v2852 = vrot.slane %v2844, 3
        %v2853 = vsel %vm2848, %v2850, %v2852
        %2854 = vrot.lane.b32.xlu0 %v2851, 4
        %v2855 = vpop.permute.xlu0 %2854
        %2856 = vrot.lane.b32.xlu0 %v2853, 4
        %v2857 = vpop.permute.xlu0 %2856
        %2858 = vrot.lane.b32.xlu0 %v2852, 4
        %v2859 = vpop.permute.xlu0 %2858
        %v2863 = vadd.f32 %v2697, %v2855
        %v2864 = vadd.f32 %v2698, %v2857
        %v2865 = vadd.f32 %v2699, %v2859
        %2866 = vrot.lane.b32.xlu0 %v2701, 126
        %v2867 = vpop.permute.xlu0 %2866
        %2868 = vrot.lane.b32.xlu0 %v2703, 126
        %v2869 = vpop.permute.xlu0 %2868
        %2870 = vrot.lane.b32.xlu0 %v2705, 126
        %v2871 = vpop.permute.xlu0 %2870
        %v2875 = vsub.f32 %v136, %v2867
        %v2876 = vsub.f32 %v137, %v2869
        %v2877 = vsub.f32 %v138, %v2871
        %2878 = vrot.lane.b32.xlu0 %v2718, 126
        %v2879 = vpop.permute.xlu0 %2878
        %2880 = vrot.lane.b32.xlu0 %v2720, 126
        %v2881 = vpop.permute.xlu0 %2880
        %2882 = vrot.lane.b32.xlu0 %v2722, 126
        %v2883 = vpop.permute.xlu0 %2882
        %v2887 = vsub.f32 %v139, %v2879
        %v2888 = vsub.f32 %v140, %v2881
        %v2889 = vsub.f32 %v141, %v2883
        %v2890 = vmul.f32 %v2875, %v2875
        %v2891 = vmul.f32 %v2876, %v2876
        %v2892 = vmul.f32 %v2877, %v2877
        %v2893 = vadd.f32 %v2890, 0.81
        %v2894 = vadd.f32 %v2891, 0.81
        %v2895 = vadd.f32 %v2892, 0.81
        %v2896 = vrsqrt.pop %v2893
        %v2897 = vmul.f32 %v2896, %v2893
        %v2898 = vmul.f32 %v2897, %v2896
        %v2899 = vmul.f32 0.5, %v2898
        %v2900 = vsub.f32 1.5, %v2899
        %v2901 = vmul.f32 %v2896, %v2900
        %vm2902 = vweird.f32 %v2893
        %vm2903 = vweird.f32 %v2896
        %vm2904 = vmor %vm2902, %vm2903
        %v2905 = vsel %vm2904, %v2896, %v2901
        %v2906 = vrsqrt.pop %v2894
        %v2907 = vmul.f32 %v2906, %v2894
        %v2908 = vmul.f32 %v2907, %v2906
        %v2909 = vmul.f32 0.5, %v2908
        %v2910 = vsub.f32 1.5, %v2909
        %v2911 = vmul.f32 %v2906, %v2910
        %vm2912 = vweird.f32 %v2894
        %vm2913 = vweird.f32 %v2906
        %vm2914 = vmor %vm2912, %vm2913
        %v2915 = vsel %vm2914, %v2906, %v2911
        %v2916 = vrsqrt.pop %v2895
        %v2917 = vmul.f32 %v2916, %v2895
        %v2918 = vmul.f32 %v2917, %v2916
        %v2919 = vmul.f32 0.5, %v2918
        %v2920 = vsub.f32 1.5, %v2919
        %v2921 = vmul.f32 %v2916, %v2920
        %vm2922 = vweird.f32 %v2895
        %vm2923 = vweird.f32 %v2916
        %vm2924 = vmor %vm2922, %vm2923
        %v2925 = vsel %vm2924, %v2916, %v2921
        %v2926 = vmul.f32 %v2875, %v2905
        %v2927 = vmul.f32 %v2876, %v2915
        %v2928 = vmul.f32 %v2877, %v2925
        %v2929 = vmul.f32 %v2887, %v2887
        %v2930 = vmul.f32 %v2888, %v2888
        %v2931 = vmul.f32 %v2889, %v2889
        %v2932 = vadd.f32 %v2929, 0.81
        %v2933 = vadd.f32 %v2930, 0.81
        %v2934 = vadd.f32 %v2931, 0.81
        %v2935 = vrsqrt.pop %v2932
        %v2936 = vmul.f32 %v2935, %v2932
        %v2937 = vmul.f32 %v2936, %v2935
        %v2938 = vmul.f32 0.5, %v2937
        %v2939 = vsub.f32 1.5, %v2938
        %v2940 = vmul.f32 %v2935, %v2939
        %vm2941 = vweird.f32 %v2932
        %vm2942 = vweird.f32 %v2935
        %vm2943 = vmor %vm2941, %vm2942
        %v2944 = vsel %vm2943, %v2935, %v2940
        %v2945 = vrsqrt.pop %v2933
        %v2946 = vmul.f32 %v2945, %v2933
        %v2947 = vmul.f32 %v2946, %v2945
        %v2948 = vmul.f32 0.5, %v2947
        %v2949 = vsub.f32 1.5, %v2948
        %v2950 = vmul.f32 %v2945, %v2949
        %vm2951 = vweird.f32 %v2933
        %vm2952 = vweird.f32 %v2945
        %vm2953 = vmor %vm2951, %vm2952
        %v2954 = vsel %vm2953, %v2945, %v2950
        %v2955 = vrsqrt.pop %v2934
        %v2956 = vmul.f32 %v2955, %v2934
        %v2957 = vmul.f32 %v2956, %v2955
        %v2958 = vmul.f32 0.5, %v2957
        %v2959 = vsub.f32 1.5, %v2958
        %v2960 = vmul.f32 %v2955, %v2959
        %vm2961 = vweird.f32 %v2934
        %vm2962 = vweird.f32 %v2955
        %vm2963 = vmor %vm2961, %vm2962
        %v2964 = vsel %vm2963, %v2955, %v2960
        %v2965 = vmul.f32 %v2887, %v2944
        %v2966 = vmul.f32 %v2888, %v2954
        %v2967 = vmul.f32 %v2889, %v2964
        %v2968 = vsub.f32 %v2926, %v2965
        %v2969 = vsub.f32 %v2927, %v2966
        %v2970 = vsub.f32 %v2928, %v2967
        %v2971 = vmul.f32 %v2968, %v2968
        %v2972 = vmul.f32 %v2969, %v2969
        %v2973 = vmul.f32 %v2970, %v2970
        %v2974 = vadd.f32 %v2971, 0.1
        %v2975 = vadd.f32 %v2972, 0.1
        %v2976 = vadd.f32 %v2973, 0.1
        %v2977 = vrcp.pop %v2974
        %v2978 = vrcp.pop %v2975
        %v2979 = vrcp.pop %v2976
        %v2983 = vrot.slane %v2977, 5
        %v2984 = vrot.slane %v2978, 5
        %v2985 = vsel %vm2700, %v2983, %v2984
        %v2986 = vrot.slane %v2979, 5
        %v2987 = vsel %vm2700, %v2984, %v2986
        %2988 = vrot.lane.b32.xlu0 %v2983, 126
        %v2989 = vpop.permute.xlu0 %2988
        %2990 = vrot.lane.b32.xlu0 %v2985, 126
        %v2991 = vpop.permute.xlu0 %2990
        %2992 = vrot.lane.b32.xlu0 %v2987, 126
        %v2993 = vpop.permute.xlu0 %2992
        %v2997 = vadd.f32 %v2977, %v2989
        %v2998 = vadd.f32 %v2978, %v2991
        %v2999 = vadd.f32 %v2979, %v2993
        %v3003 = vrot.slane %v2997, 3
        %v3004 = vrot.slane %v2998, 3
        %v3005 = vsel %vm2848, %v3003, %v3004
        %v3006 = vrot.slane %v2999, 3
        %v3007 = vsel %vm2848, %v3004, %v3006
        %3008 = vrot.lane.b32.xlu0 %v3005, 3
        %v3009 = vpop.permute.xlu0 %3008
        %3010 = vrot.lane.b32.xlu0 %v3007, 3
        %v3011 = vpop.permute.xlu0 %3010
        %3012 = vrot.lane.b32.xlu0 %v3006, 3
        %v3013 = vpop.permute.xlu0 %3012
        %v3017 = vadd.f32 %v2863, %v3009
        %v3018 = vadd.f32 %v2864, %v3011
        %v3019 = vadd.f32 %v2865, %v3013
        %3020 = vrot.lane.b32.xlu0 %v2701, 127
        %v3021 = vpop.permute.xlu0 %3020
        %3022 = vrot.lane.b32.xlu0 %v2703, 127
        %v3023 = vpop.permute.xlu0 %3022
        %3024 = vrot.lane.b32.xlu0 %v2705, 127
        %v3025 = vpop.permute.xlu0 %3024
        %v3029 = vsub.f32 %v136, %v3021
        %v3030 = vsub.f32 %v137, %v3023
        %v3031 = vsub.f32 %v138, %v3025
        %3032 = vrot.lane.b32.xlu0 %v2718, 127
        %v3033 = vpop.permute.xlu0 %3032
        %3034 = vrot.lane.b32.xlu0 %v2720, 127
        %v3035 = vpop.permute.xlu0 %3034
        %3036 = vrot.lane.b32.xlu0 %v2722, 127
        %v3037 = vpop.permute.xlu0 %3036
        %v3041 = vsub.f32 %v139, %v3033
        %v3042 = vsub.f32 %v140, %v3035
        %v3043 = vsub.f32 %v141, %v3037
        %v3044 = vmul.f32 %v3029, %v3029
        %v3045 = vmul.f32 %v3030, %v3030
        %v3046 = vmul.f32 %v3031, %v3031
        %v3047 = vadd.f32 %v3044, 0.81
        %v3048 = vadd.f32 %v3045, 0.81
        %v3049 = vadd.f32 %v3046, 0.81
        %v3050 = vrsqrt.pop %v3047
        %v3051 = vmul.f32 %v3050, %v3047
        %v3052 = vmul.f32 %v3051, %v3050
        %v3053 = vmul.f32 0.5, %v3052
        %v3054 = vsub.f32 1.5, %v3053
        %v3055 = vmul.f32 %v3050, %v3054
        %vm3056 = vweird.f32 %v3047
        %vm3057 = vweird.f32 %v3050
        %vm3058 = vmor %vm3056, %vm3057
        %v3059 = vsel %vm3058, %v3050, %v3055
        %v3060 = vrsqrt.pop %v3048
        %v3061 = vmul.f32 %v3060, %v3048
        %v3062 = vmul.f32 %v3061, %v3060
        %v3063 = vmul.f32 0.5, %v3062
        %v3064 = vsub.f32 1.5, %v3063
        %v3065 = vmul.f32 %v3060, %v3064
        %vm3066 = vweird.f32 %v3048
        %vm3067 = vweird.f32 %v3060
        %vm3068 = vmor %vm3066, %vm3067
        %v3069 = vsel %vm3068, %v3060, %v3065
        %v3070 = vrsqrt.pop %v3049
        %v3071 = vmul.f32 %v3070, %v3049
        %v3072 = vmul.f32 %v3071, %v3070
        %v3073 = vmul.f32 0.5, %v3072
        %v3074 = vsub.f32 1.5, %v3073
        %v3075 = vmul.f32 %v3070, %v3074
        %vm3076 = vweird.f32 %v3049
        %vm3077 = vweird.f32 %v3070
        %vm3078 = vmor %vm3076, %vm3077
        %v3079 = vsel %vm3078, %v3070, %v3075
        %v3080 = vmul.f32 %v3029, %v3059
        %v3081 = vmul.f32 %v3030, %v3069
        %v3082 = vmul.f32 %v3031, %v3079
        %v3083 = vmul.f32 %v3041, %v3041
        %v3084 = vmul.f32 %v3042, %v3042
        %v3085 = vmul.f32 %v3043, %v3043
        %v3086 = vadd.f32 %v3083, 0.81
        %v3087 = vadd.f32 %v3084, 0.81
        %v3088 = vadd.f32 %v3085, 0.81
        %v3089 = vrsqrt.pop %v3086
        %v3090 = vmul.f32 %v3089, %v3086
        %v3091 = vmul.f32 %v3090, %v3089
        %v3092 = vmul.f32 0.5, %v3091
        %v3093 = vsub.f32 1.5, %v3092
        %v3094 = vmul.f32 %v3089, %v3093
        %vm3095 = vweird.f32 %v3086
        %vm3096 = vweird.f32 %v3089
        %vm3097 = vmor %vm3095, %vm3096
        %v3098 = vsel %vm3097, %v3089, %v3094
        %v3099 = vrsqrt.pop %v3087
        %v3100 = vmul.f32 %v3099, %v3087
        %v3101 = vmul.f32 %v3100, %v3099
        %v3102 = vmul.f32 0.5, %v3101
        %v3103 = vsub.f32 1.5, %v3102
        %v3104 = vmul.f32 %v3099, %v3103
        %vm3105 = vweird.f32 %v3087
        %vm3106 = vweird.f32 %v3099
        %vm3107 = vmor %vm3105, %vm3106
        %v3108 = vsel %vm3107, %v3099, %v3104
        %v3109 = vrsqrt.pop %v3088
        %v3110 = vmul.f32 %v3109, %v3088
        %v3111 = vmul.f32 %v3110, %v3109
        %v3112 = vmul.f32 0.5, %v3111
        %v3113 = vsub.f32 1.5, %v3112
        %v3114 = vmul.f32 %v3109, %v3113
        %vm3115 = vweird.f32 %v3088
        %vm3116 = vweird.f32 %v3109
        %vm3117 = vmor %vm3115, %vm3116
        %v3118 = vsel %vm3117, %v3109, %v3114
        %v3119 = vmul.f32 %v3041, %v3098
        %v3120 = vmul.f32 %v3042, %v3108
        %v3121 = vmul.f32 %v3043, %v3118
        %v3122 = vsub.f32 %v3080, %v3119
        %v3123 = vsub.f32 %v3081, %v3120
        %v3124 = vsub.f32 %v3082, %v3121
        %v3125 = vmul.f32 %v3122, %v3122
        %v3126 = vmul.f32 %v3123, %v3123
        %v3127 = vmul.f32 %v3124, %v3124
        %v3128 = vadd.f32 %v3125, 0.1
        %v3129 = vadd.f32 %v3126, 0.1
        %v3130 = vadd.f32 %v3127, 0.1
        %v3131 = vrcp.pop %v3128
        %v3132 = vrcp.pop %v3129
        %v3133 = vrcp.pop %v3130
        %v3137 = vrot.slane %v3131, 5
        %v3138 = vrot.slane %v3132, 5
        %v3139 = vsel %vm2700, %v3137, %v3138
        %v3140 = vrot.slane %v3133, 5
        %v3141 = vsel %vm2700, %v3138, %v3140
        %3142 = vrot.lane.b32.xlu0 %v3137, 127
        %v3143 = vpop.permute.xlu0 %3142
        %3144 = vrot.lane.b32.xlu0 %v3139, 127
        %v3145 = vpop.permute.xlu0 %3144
        %3146 = vrot.lane.b32.xlu0 %v3141, 127
        %v3147 = vpop.permute.xlu0 %3146
        %v3151 = vadd.f32 %v3131, %v3143
        %v3152 = vadd.f32 %v3132, %v3145
        %v3153 = vadd.f32 %v3133, %v3147
        %v3157 = vrot.slane %v3151, 3
        %v3158 = vrot.slane %v3152, 3
        %v3159 = vsel %vm2848, %v3157, %v3158
        %v3160 = vrot.slane %v3153, 3
        %v3161 = vsel %vm2848, %v3158, %v3160
        %3162 = vrot.lane.b32.xlu0 %v3159, 2
        %v3163 = vpop.permute.xlu0 %3162
        %3164 = vrot.lane.b32.xlu0 %v3161, 2
        %v3165 = vpop.permute.xlu0 %3164
        %3166 = vrot.lane.b32.xlu0 %v3160, 2
        %v3167 = vpop.permute.xlu0 %3166
        %v3171 = vadd.f32 %v3017, %v3163
        %v3172 = vadd.f32 %v3018, %v3165
        %v3173 = vadd.f32 %v3019, %v3167
        %v3177 = vsub.f32 %v136, %v2701
        %v3178 = vsub.f32 %v137, %v2703
        %v3179 = vsub.f32 %v138, %v2705
        %v3183 = vsub.f32 %v139, %v2718
        %v3184 = vsub.f32 %v140, %v2720
        %v3185 = vsub.f32 %v141, %v2722
        %v3186 = vmul.f32 %v3177, %v3177
        %v3187 = vmul.f32 %v3178, %v3178
        %v3188 = vmul.f32 %v3179, %v3179
        %v3189 = vadd.f32 %v3186, 0.81
        %v3190 = vadd.f32 %v3187, 0.81
        %v3191 = vadd.f32 %v3188, 0.81
        %v3192 = vrsqrt.pop %v3189
        %v3193 = vmul.f32 %v3192, %v3189
        %v3194 = vmul.f32 %v3193, %v3192
        %v3195 = vmul.f32 0.5, %v3194
        %v3196 = vsub.f32 1.5, %v3195
        %v3197 = vmul.f32 %v3192, %v3196
        %vm3198 = vweird.f32 %v3189
        %vm3199 = vweird.f32 %v3192
        %vm3200 = vmor %vm3198, %vm3199
        %v3201 = vsel %vm3200, %v3192, %v3197
        %v3202 = vrsqrt.pop %v3190
        %v3203 = vmul.f32 %v3202, %v3190
        %v3204 = vmul.f32 %v3203, %v3202
        %v3205 = vmul.f32 0.5, %v3204
        %v3206 = vsub.f32 1.5, %v3205
        %v3207 = vmul.f32 %v3202, %v3206
        %vm3208 = vweird.f32 %v3190
        %vm3209 = vweird.f32 %v3202
        %vm3210 = vmor %vm3208, %vm3209
        %v3211 = vsel %vm3210, %v3202, %v3207
        %v3212 = vrsqrt.pop %v3191
        %v3213 = vmul.f32 %v3212, %v3191
        %v3214 = vmul.f32 %v3213, %v3212
        %v3215 = vmul.f32 0.5, %v3214
        %v3216 = vsub.f32 1.5, %v3215
        %v3217 = vmul.f32 %v3212, %v3216
        %vm3218 = vweird.f32 %v3191
        %vm3219 = vweird.f32 %v3212
        %vm3220 = vmor %vm3218, %vm3219
        %v3221 = vsel %vm3220, %v3212, %v3217
        %v3222 = vmul.f32 %v3177, %v3201
        %v3223 = vmul.f32 %v3178, %v3211
        %v3224 = vmul.f32 %v3179, %v3221
        %v3225 = vmul.f32 %v3183, %v3183
        %v3226 = vmul.f32 %v3184, %v3184
        %v3227 = vmul.f32 %v3185, %v3185
        %v3228 = vadd.f32 %v3225, 0.81
        %v3229 = vadd.f32 %v3226, 0.81
        %v3230 = vadd.f32 %v3227, 0.81
        %v3231 = vrsqrt.pop %v3228
        %v3232 = vmul.f32 %v3231, %v3228
        %v3233 = vmul.f32 %v3232, %v3231
        %v3234 = vmul.f32 0.5, %v3233
        %v3235 = vsub.f32 1.5, %v3234
        %v3236 = vmul.f32 %v3231, %v3235
        %vm3237 = vweird.f32 %v3228
        %vm3238 = vweird.f32 %v3231
        %vm3239 = vmor %vm3237, %vm3238
        %v3240 = vsel %vm3239, %v3231, %v3236
        %v3241 = vrsqrt.pop %v3229
        %v3242 = vmul.f32 %v3241, %v3229
        %v3243 = vmul.f32 %v3242, %v3241
        %v3244 = vmul.f32 0.5, %v3243
        %v3245 = vsub.f32 1.5, %v3244
        %v3246 = vmul.f32 %v3241, %v3245
        %vm3247 = vweird.f32 %v3229
        %vm3248 = vweird.f32 %v3241
        %vm3249 = vmor %vm3247, %vm3248
        %v3250 = vsel %vm3249, %v3241, %v3246
        %v3251 = vrsqrt.pop %v3230
        %v3252 = vmul.f32 %v3251, %v3230
        %v3253 = vmul.f32 %v3252, %v3251
        %v3254 = vmul.f32 0.5, %v3253
        %v3255 = vsub.f32 1.5, %v3254
        %v3256 = vmul.f32 %v3251, %v3255
        %vm3257 = vweird.f32 %v3230
        %vm3258 = vweird.f32 %v3251
        %vm3259 = vmor %vm3257, %vm3258
        %v3260 = vsel %vm3259, %v3251, %v3256
        %v3261 = vmul.f32 %v3183, %v3240
        %v3262 = vmul.f32 %v3184, %v3250
        %v3263 = vmul.f32 %v3185, %v3260
        %v3264 = vsub.f32 %v3222, %v3261
        %v3265 = vsub.f32 %v3223, %v3262
        %v3266 = vsub.f32 %v3224, %v3263
        %v3267 = vmul.f32 %v3264, %v3264
        %v3268 = vmul.f32 %v3265, %v3265
        %v3269 = vmul.f32 %v3266, %v3266
        %v3270 = vadd.f32 %v3267, 0.1
        %v3271 = vadd.f32 %v3268, 0.1
        %v3272 = vadd.f32 %v3269, 0.1
        %v3273 = vrcp.pop %v3270
        %v3274 = vrcp.pop %v3271
        %v3275 = vrcp.pop %v3272
        %v3279 = vrot.slane %v3273, 5
        %v3280 = vrot.slane %v3274, 5
        %v3281 = vsel %vm2700, %v3279, %v3280
        %v3282 = vrot.slane %v3275, 5
        %v3283 = vsel %vm2700, %v3280, %v3282
        %v3287 = vadd.f32 %v3273, %v3279
        %v3288 = vadd.f32 %v3274, %v3281
        %v3289 = vadd.f32 %v3275, %v3283
        %v3293 = vrot.slane %v3287, 3
        %v3294 = vrot.slane %v3288, 3
        %v3295 = vsel %vm2848, %v3293, %v3294
        %v3296 = vrot.slane %v3289, 3
        %v3297 = vsel %vm2848, %v3294, %v3296
        %3298 = vrot.lane.b32.xlu0 %v3295, 1
        %v3299 = vpop.permute.xlu0 %3298
        %3300 = vrot.lane.b32.xlu0 %v3297, 1
        %v3301 = vpop.permute.xlu0 %3300
        %3302 = vrot.lane.b32.xlu0 %v3296, 1
        %v3303 = vpop.permute.xlu0 %3302
        %v3307 = vadd.f32 %v3171, %v3299
        %v3308 = vadd.f32 %v3172, %v3301
        %v3309 = vadd.f32 %v3173, %v3303
        %3310 = vrot.lane.b32.xlu0 %v2701, 1
        %v3311 = vpop.permute.xlu0 %3310
        %3312 = vrot.lane.b32.xlu0 %v2703, 1
        %v3313 = vpop.permute.xlu0 %3312
        %3314 = vrot.lane.b32.xlu0 %v2705, 1
        %v3315 = vpop.permute.xlu0 %3314
        %v3319 = vsub.f32 %v136, %v3311
        %v3320 = vsub.f32 %v137, %v3313
        %v3321 = vsub.f32 %v138, %v3315
        %3322 = vrot.lane.b32.xlu0 %v2718, 1
        %v3323 = vpop.permute.xlu0 %3322
        %3324 = vrot.lane.b32.xlu0 %v2720, 1
        %v3325 = vpop.permute.xlu0 %3324
        %3326 = vrot.lane.b32.xlu0 %v2722, 1
        %v3327 = vpop.permute.xlu0 %3326
        %v3331 = vsub.f32 %v139, %v3323
        %v3332 = vsub.f32 %v140, %v3325
        %v3333 = vsub.f32 %v141, %v3327
        %v3334 = vmul.f32 %v3319, %v3319
        %v3335 = vmul.f32 %v3320, %v3320
        %v3336 = vmul.f32 %v3321, %v3321
        %v3337 = vadd.f32 %v3334, 0.81
        %v3338 = vadd.f32 %v3335, 0.81
        %v3339 = vadd.f32 %v3336, 0.81
        %v3340 = vrsqrt.pop %v3337
        %v3341 = vmul.f32 %v3340, %v3337
        %v3342 = vmul.f32 %v3341, %v3340
        %v3343 = vmul.f32 0.5, %v3342
        %v3344 = vsub.f32 1.5, %v3343
        %v3345 = vmul.f32 %v3340, %v3344
        %vm3346 = vweird.f32 %v3337
        %vm3347 = vweird.f32 %v3340
        %vm3348 = vmor %vm3346, %vm3347
        %v3349 = vsel %vm3348, %v3340, %v3345
        %v3350 = vrsqrt.pop %v3338
        %v3351 = vmul.f32 %v3350, %v3338
        %v3352 = vmul.f32 %v3351, %v3350
        %v3353 = vmul.f32 0.5, %v3352
        %v3354 = vsub.f32 1.5, %v3353
        %v3355 = vmul.f32 %v3350, %v3354
        %vm3356 = vweird.f32 %v3338
        %vm3357 = vweird.f32 %v3350
        %vm3358 = vmor %vm3356, %vm3357
        %v3359 = vsel %vm3358, %v3350, %v3355
        %v3360 = vrsqrt.pop %v3339
        %v3361 = vmul.f32 %v3360, %v3339
        %v3362 = vmul.f32 %v3361, %v3360
        %v3363 = vmul.f32 0.5, %v3362
        %v3364 = vsub.f32 1.5, %v3363
        %v3365 = vmul.f32 %v3360, %v3364
        %vm3366 = vweird.f32 %v3339
        %vm3367 = vweird.f32 %v3360
        %vm3368 = vmor %vm3366, %vm3367
        %v3369 = vsel %vm3368, %v3360, %v3365
        %v3370 = vmul.f32 %v3319, %v3349
        %v3371 = vmul.f32 %v3320, %v3359
        %v3372 = vmul.f32 %v3321, %v3369
        %v3373 = vmul.f32 %v3331, %v3331
        %v3374 = vmul.f32 %v3332, %v3332
        %v3375 = vmul.f32 %v3333, %v3333
        %v3376 = vadd.f32 %v3373, 0.81
        %v3377 = vadd.f32 %v3374, 0.81
        %v3378 = vadd.f32 %v3375, 0.81
        %v3379 = vrsqrt.pop %v3376
        %v3380 = vmul.f32 %v3379, %v3376
        %v3381 = vmul.f32 %v3380, %v3379
        %v3382 = vmul.f32 0.5, %v3381
        %v3383 = vsub.f32 1.5, %v3382
        %v3384 = vmul.f32 %v3379, %v3383
        %vm3385 = vweird.f32 %v3376
        %vm3386 = vweird.f32 %v3379
        %vm3387 = vmor %vm3385, %vm3386
        %v3388 = vsel %vm3387, %v3379, %v3384
        %v3389 = vrsqrt.pop %v3377
        %v3390 = vmul.f32 %v3389, %v3377
        %v3391 = vmul.f32 %v3390, %v3389
        %v3392 = vmul.f32 0.5, %v3391
        %v3393 = vsub.f32 1.5, %v3392
        %v3394 = vmul.f32 %v3389, %v3393
        %vm3395 = vweird.f32 %v3377
        %vm3396 = vweird.f32 %v3389
        %vm3397 = vmor %vm3395, %vm3396
        %v3398 = vsel %vm3397, %v3389, %v3394
        %v3399 = vrsqrt.pop %v3378
        %v3400 = vmul.f32 %v3399, %v3378
        %v3401 = vmul.f32 %v3400, %v3399
        %v3402 = vmul.f32 0.5, %v3401
        %v3403 = vsub.f32 1.5, %v3402
        %v3404 = vmul.f32 %v3399, %v3403
        %vm3405 = vweird.f32 %v3378
        %vm3406 = vweird.f32 %v3399
        %vm3407 = vmor %vm3405, %vm3406
        %v3408 = vsel %vm3407, %v3399, %v3404
        %v3409 = vmul.f32 %v3331, %v3388
        %v3410 = vmul.f32 %v3332, %v3398
        %v3411 = vmul.f32 %v3333, %v3408
        %v3412 = vsub.f32 %v3370, %v3409
        %v3413 = vsub.f32 %v3371, %v3410
        %v3414 = vsub.f32 %v3372, %v3411
        %v3415 = vmul.f32 %v3412, %v3412
        %v3416 = vmul.f32 %v3413, %v3413
        %v3417 = vmul.f32 %v3414, %v3414
        %v3418 = vadd.f32 %v3415, 0.1
        %v3419 = vadd.f32 %v3416, 0.1
        %v3420 = vadd.f32 %v3417, 0.1
        %v3421 = vrcp.pop %v3418
        %v3422 = vrcp.pop %v3419
        %v3423 = vrcp.pop %v3420
        %v3427 = vrot.slane %v3421, 5
        %v3428 = vrot.slane %v3422, 5
        %v3429 = vsel %vm2700, %v3427, %v3428
        %v3430 = vrot.slane %v3423, 5
        %v3431 = vsel %vm2700, %v3428, %v3430
        %3432 = vrot.lane.b32.xlu0 %v3427, 1
        %v3433 = vpop.permute.xlu0 %3432
        %3434 = vrot.lane.b32.xlu0 %v3429, 1
        %v3435 = vpop.permute.xlu0 %3434
        %3436 = vrot.lane.b32.xlu0 %v3431, 1
        %v3437 = vpop.permute.xlu0 %3436
        %v3441 = vadd.f32 %v3421, %v3433
        %v3442 = vadd.f32 %v3422, %v3435
        %v3443 = vadd.f32 %v3423, %v3437
        %v3447 = vrot.slane %v3441, 3
        %v3448 = vrot.slane %v3442, 3
        %v3449 = vsel %vm2848, %v3447, %v3448
        %v3450 = vrot.slane %v3443, 3
        %v3451 = vsel %vm2848, %v3448, %v3450
        %v3455 = vadd.f32 %v3307, %v3449
        %v3456 = vadd.f32 %v3308, %v3451
        %v3457 = vadd.f32 %v3309, %v3450
        %3458 = vrot.lane.b32.xlu0 %v2701, 2
        %v3459 = vpop.permute.xlu0 %3458
        %3460 = vrot.lane.b32.xlu0 %v2703, 2
        %v3461 = vpop.permute.xlu0 %3460
        %3462 = vrot.lane.b32.xlu0 %v2705, 2
        %v3463 = vpop.permute.xlu0 %3462
        %v3467 = vsub.f32 %v136, %v3459
        %v3468 = vsub.f32 %v137, %v3461
        %v3469 = vsub.f32 %v138, %v3463
        %3470 = vrot.lane.b32.xlu0 %v2718, 2
        %v3471 = vpop.permute.xlu0 %3470
        %3472 = vrot.lane.b32.xlu0 %v2720, 2
        %v3473 = vpop.permute.xlu0 %3472
        %3474 = vrot.lane.b32.xlu0 %v2722, 2
        %v3475 = vpop.permute.xlu0 %3474
        %v3479 = vsub.f32 %v139, %v3471
        %v3480 = vsub.f32 %v140, %v3473
        %v3481 = vsub.f32 %v141, %v3475
        %v3482 = vmul.f32 %v3467, %v3467
        %v3483 = vmul.f32 %v3468, %v3468
        %v3484 = vmul.f32 %v3469, %v3469
        %v3485 = vadd.f32 %v3482, 0.81
        %v3486 = vadd.f32 %v3483, 0.81
        %v3487 = vadd.f32 %v3484, 0.81
        %v3488 = vrsqrt.pop %v3485
        %v3489 = vmul.f32 %v3488, %v3485
        %v3490 = vmul.f32 %v3489, %v3488
        %v3491 = vmul.f32 0.5, %v3490
        %v3492 = vsub.f32 1.5, %v3491
        %v3493 = vmul.f32 %v3488, %v3492
        %vm3494 = vweird.f32 %v3485
        %vm3495 = vweird.f32 %v3488
        %vm3496 = vmor %vm3494, %vm3495
        %v3497 = vsel %vm3496, %v3488, %v3493
        %v3498 = vrsqrt.pop %v3486
        %v3499 = vmul.f32 %v3498, %v3486
        %v3500 = vmul.f32 %v3499, %v3498
        %v3501 = vmul.f32 0.5, %v3500
        %v3502 = vsub.f32 1.5, %v3501
        %v3503 = vmul.f32 %v3498, %v3502
        %vm3504 = vweird.f32 %v3486
        %vm3505 = vweird.f32 %v3498
        %vm3506 = vmor %vm3504, %vm3505
        %v3507 = vsel %vm3506, %v3498, %v3503
        %v3508 = vrsqrt.pop %v3487
        %v3509 = vmul.f32 %v3508, %v3487
        %v3510 = vmul.f32 %v3509, %v3508
        %v3511 = vmul.f32 0.5, %v3510
        %v3512 = vsub.f32 1.5, %v3511
        %v3513 = vmul.f32 %v3508, %v3512
        %vm3514 = vweird.f32 %v3487
        %vm3515 = vweird.f32 %v3508
        %vm3516 = vmor %vm3514, %vm3515
        %v3517 = vsel %vm3516, %v3508, %v3513
        %v3518 = vmul.f32 %v3467, %v3497
        %v3519 = vmul.f32 %v3468, %v3507
        %v3520 = vmul.f32 %v3469, %v3517
        %v3521 = vmul.f32 %v3479, %v3479
        %v3522 = vmul.f32 %v3480, %v3480
        %v3523 = vmul.f32 %v3481, %v3481
        %v3524 = vadd.f32 %v3521, 0.81
        %v3525 = vadd.f32 %v3522, 0.81
        %v3526 = vadd.f32 %v3523, 0.81
        %v3527 = vrsqrt.pop %v3524
        %v3528 = vmul.f32 %v3527, %v3524
        %v3529 = vmul.f32 %v3528, %v3527
        %v3530 = vmul.f32 0.5, %v3529
        %v3531 = vsub.f32 1.5, %v3530
        %v3532 = vmul.f32 %v3527, %v3531
        %vm3533 = vweird.f32 %v3524
        %vm3534 = vweird.f32 %v3527
        %vm3535 = vmor %vm3533, %vm3534
        %v3536 = vsel %vm3535, %v3527, %v3532
        %v3537 = vrsqrt.pop %v3525
        %v3538 = vmul.f32 %v3537, %v3525
        %v3539 = vmul.f32 %v3538, %v3537
        %v3540 = vmul.f32 0.5, %v3539
        %v3541 = vsub.f32 1.5, %v3540
        %v3542 = vmul.f32 %v3537, %v3541
        %vm3543 = vweird.f32 %v3525
        %vm3544 = vweird.f32 %v3537
        %vm3545 = vmor %vm3543, %vm3544
        %v3546 = vsel %vm3545, %v3537, %v3542
        %v3547 = vrsqrt.pop %v3526
        %v3548 = vmul.f32 %v3547, %v3526
        %v3549 = vmul.f32 %v3548, %v3547
        %v3550 = vmul.f32 0.5, %v3549
        %v3551 = vsub.f32 1.5, %v3550
        %v3552 = vmul.f32 %v3547, %v3551
        %vm3553 = vweird.f32 %v3526
        %vm3554 = vweird.f32 %v3547
        %vm3555 = vmor %vm3553, %vm3554
        %v3556 = vsel %vm3555, %v3547, %v3552
        %v3557 = vmul.f32 %v3479, %v3536
        %v3558 = vmul.f32 %v3480, %v3546
        %v3559 = vmul.f32 %v3481, %v3556
        %v3560 = vsub.f32 %v3518, %v3557
        %v3561 = vsub.f32 %v3519, %v3558
        %v3562 = vsub.f32 %v3520, %v3559
        %v3563 = vmul.f32 %v3560, %v3560
        %v3564 = vmul.f32 %v3561, %v3561
        %v3565 = vmul.f32 %v3562, %v3562
        %v3566 = vadd.f32 %v3563, 0.1
        %v3567 = vadd.f32 %v3564, 0.1
        %v3568 = vadd.f32 %v3565, 0.1
        %v3569 = vrcp.pop %v3566
        %v3570 = vrcp.pop %v3567
        %v3571 = vrcp.pop %v3568
        %v3575 = vrot.slane %v3569, 5
        %v3576 = vrot.slane %v3570, 5
        %v3577 = vsel %vm2700, %v3575, %v3576
        %v3578 = vrot.slane %v3571, 5
        %v3579 = vsel %vm2700, %v3576, %v3578
        %3580 = vrot.lane.b32.xlu0 %v3575, 2
        %v3581 = vpop.permute.xlu0 %3580
        %3582 = vrot.lane.b32.xlu0 %v3577, 2
        %v3583 = vpop.permute.xlu0 %3582
        %3584 = vrot.lane.b32.xlu0 %v3579, 2
        %v3585 = vpop.permute.xlu0 %3584
        %v3589 = vadd.f32 %v3569, %v3581
        %v3590 = vadd.f32 %v3570, %v3583
        %v3591 = vadd.f32 %v3571, %v3585
        %v3595 = vrot.slane %v3589, 3
        %v3596 = vrot.slane %v3590, 3
        %v3597 = vsel %vm2848, %v3595, %v3596
        %v3598 = vrot.slane %v3591, 3
        %v3599 = vsel %vm2848, %v3596, %v3598
        %3600 = vrot.lane.b32.xlu0 %v3597, 127
        %v3601 = vpop.permute.xlu0 %3600
        %3602 = vrot.lane.b32.xlu0 %v3599, 127
        %v3603 = vpop.permute.xlu0 %3602
        %3604 = vrot.lane.b32.xlu0 %v3598, 127
        %v3605 = vpop.permute.xlu0 %3604
        %v3609 = vadd.f32 %v3455, %v3601
        %v3610 = vadd.f32 %v3456, %v3603
        %v3611 = vadd.f32 %v3457, %v3605
        %3612 = vrot.lane.b32.xlu0 %v2701, 3
        %v3613 = vpop.permute.xlu0 %3612
        %3614 = vrot.lane.b32.xlu0 %v2703, 3
        %v3615 = vpop.permute.xlu0 %3614
        %3616 = vrot.lane.b32.xlu0 %v2705, 3
        %v3617 = vpop.permute.xlu0 %3616
        %v3621 = vsub.f32 %v136, %v3613
        %v3622 = vsub.f32 %v137, %v3615
        %v3623 = vsub.f32 %v138, %v3617
        %3624 = vrot.lane.b32.xlu0 %v2718, 3
        %v3625 = vpop.permute.xlu0 %3624
        %3626 = vrot.lane.b32.xlu0 %v2720, 3
        %v3627 = vpop.permute.xlu0 %3626
        %3628 = vrot.lane.b32.xlu0 %v2722, 3
        %v3629 = vpop.permute.xlu0 %3628
        %v3633 = vsub.f32 %v139, %v3625
        %v3634 = vsub.f32 %v140, %v3627
        %v3635 = vsub.f32 %v141, %v3629
        %v3636 = vmul.f32 %v3621, %v3621
        %v3637 = vmul.f32 %v3622, %v3622
        %v3638 = vmul.f32 %v3623, %v3623
        %v3639 = vadd.f32 %v3636, 0.81
        %v3640 = vadd.f32 %v3637, 0.81
        %v3641 = vadd.f32 %v3638, 0.81
        %v3642 = vrsqrt.pop %v3639
        %v3643 = vmul.f32 %v3642, %v3639
        %v3644 = vmul.f32 %v3643, %v3642
        %v3645 = vmul.f32 0.5, %v3644
        %v3646 = vsub.f32 1.5, %v3645
        %v3647 = vmul.f32 %v3642, %v3646
        %vm3648 = vweird.f32 %v3639
        %vm3649 = vweird.f32 %v3642
        %vm3650 = vmor %vm3648, %vm3649
        %v3651 = vsel %vm3650, %v3642, %v3647
        %v3652 = vrsqrt.pop %v3640
        %v3653 = vmul.f32 %v3652, %v3640
        %v3654 = vmul.f32 %v3653, %v3652
        %v3655 = vmul.f32 0.5, %v3654
        %v3656 = vsub.f32 1.5, %v3655
        %v3657 = vmul.f32 %v3652, %v3656
        %vm3658 = vweird.f32 %v3640
        %vm3659 = vweird.f32 %v3652
        %vm3660 = vmor %vm3658, %vm3659
        %v3661 = vsel %vm3660, %v3652, %v3657
        %v3662 = vrsqrt.pop %v3641
        %v3663 = vmul.f32 %v3662, %v3641
        %v3664 = vmul.f32 %v3663, %v3662
        %v3665 = vmul.f32 0.5, %v3664
        %v3666 = vsub.f32 1.5, %v3665
        %v3667 = vmul.f32 %v3662, %v3666
        %vm3668 = vweird.f32 %v3641
        %vm3669 = vweird.f32 %v3662
        %vm3670 = vmor %vm3668, %vm3669
        %v3671 = vsel %vm3670, %v3662, %v3667
        %v3672 = vmul.f32 %v3621, %v3651
        %v3673 = vmul.f32 %v3622, %v3661
        %v3674 = vmul.f32 %v3623, %v3671
        %v3675 = vmul.f32 %v3633, %v3633
        %v3676 = vmul.f32 %v3634, %v3634
        %v3677 = vmul.f32 %v3635, %v3635
        %v3678 = vadd.f32 %v3675, 0.81
        %v3679 = vadd.f32 %v3676, 0.81
        %v3680 = vadd.f32 %v3677, 0.81
        %v3681 = vrsqrt.pop %v3678
        %v3682 = vmul.f32 %v3681, %v3678
        %v3683 = vmul.f32 %v3682, %v3681
        %v3684 = vmul.f32 0.5, %v3683
        %v3685 = vsub.f32 1.5, %v3684
        %v3686 = vmul.f32 %v3681, %v3685
        %vm3687 = vweird.f32 %v3678
        %vm3688 = vweird.f32 %v3681
        %vm3689 = vmor %vm3687, %vm3688
        %v3690 = vsel %vm3689, %v3681, %v3686
        %v3691 = vrsqrt.pop %v3679
        %v3692 = vmul.f32 %v3691, %v3679
        %v3693 = vmul.f32 %v3692, %v3691
        %v3694 = vmul.f32 0.5, %v3693
        %v3695 = vsub.f32 1.5, %v3694
        %v3696 = vmul.f32 %v3691, %v3695
        %vm3697 = vweird.f32 %v3679
        %vm3698 = vweird.f32 %v3691
        %vm3699 = vmor %vm3697, %vm3698
        %v3700 = vsel %vm3699, %v3691, %v3696
        %v3701 = vrsqrt.pop %v3680
        %v3702 = vmul.f32 %v3701, %v3680
        %v3703 = vmul.f32 %v3702, %v3701
        %v3704 = vmul.f32 0.5, %v3703
        %v3705 = vsub.f32 1.5, %v3704
        %v3706 = vmul.f32 %v3701, %v3705
        %vm3707 = vweird.f32 %v3680
        %vm3708 = vweird.f32 %v3701
        %vm3709 = vmor %vm3707, %vm3708
        %v3710 = vsel %vm3709, %v3701, %v3706
        %v3711 = vmul.f32 %v3633, %v3690
        %v3712 = vmul.f32 %v3634, %v3700
        %v3713 = vmul.f32 %v3635, %v3710
        %v3714 = vsub.f32 %v3672, %v3711
        %v3715 = vsub.f32 %v3673, %v3712
        %v3716 = vsub.f32 %v3674, %v3713
        %v3717 = vmul.f32 %v3714, %v3714
        %v3718 = vmul.f32 %v3715, %v3715
        %v3719 = vmul.f32 %v3716, %v3716
        %v3720 = vadd.f32 %v3717, 0.1
        %v3721 = vadd.f32 %v3718, 0.1
        %v3722 = vadd.f32 %v3719, 0.1
        %v3723 = vrcp.pop %v3720
        %v3724 = vrcp.pop %v3721
        %v3725 = vrcp.pop %v3722
        %v3729 = vrot.slane %v3723, 5
        %v3730 = vrot.slane %v3724, 5
        %v3731 = vsel %vm2700, %v3729, %v3730
        %v3732 = vrot.slane %v3725, 5
        %v3733 = vsel %vm2700, %v3730, %v3732
        %3734 = vrot.lane.b32.xlu0 %v3729, 3
        %v3735 = vpop.permute.xlu0 %3734
        %3736 = vrot.lane.b32.xlu0 %v3731, 3
        %v3737 = vpop.permute.xlu0 %3736
        %3738 = vrot.lane.b32.xlu0 %v3733, 3
        %v3739 = vpop.permute.xlu0 %3738
        %v3743 = vadd.f32 %v3723, %v3735
        %v3744 = vadd.f32 %v3724, %v3737
        %v3745 = vadd.f32 %v3725, %v3739
        %v3749 = vrot.slane %v3743, 3
        %v3750 = vrot.slane %v3744, 3
        %v3751 = vsel %vm2848, %v3749, %v3750
        %v3752 = vrot.slane %v3745, 3
        %v3753 = vsel %vm2848, %v3750, %v3752
        %3754 = vrot.lane.b32.xlu0 %v3751, 126
        %v3755 = vpop.permute.xlu0 %3754
        %3756 = vrot.lane.b32.xlu0 %v3753, 126
        %v3757 = vpop.permute.xlu0 %3756
        %3758 = vrot.lane.b32.xlu0 %v3752, 126
        %v3759 = vpop.permute.xlu0 %3758
        %v3763 = vadd.f32 %v3609, %v3755
        %v3764 = vadd.f32 %v3610, %v3757
        %v3765 = vadd.f32 %v3611, %v3759
        %v3766 = vmul.f32 %v3763, 0.1
        %v3767 = vmul.f32 %v3764, 0.1
        %v3768 = vmul.f32 %v3765, 0.1
        %v3769 = vsub.f32 48.0, %v3766
        %v3770 = vsub.f32 48.0, %v3767
        %v3771 = vsub.f32 48.0, %v3768
        %v3772 = vand.u32 2147483647, %v3769
        %v3773 = vand.u32 2147483647, %v3770
        %v3774 = vand.u32 2147483647, %v3771
        %v3775 = vadd.f32 %v3772, 0.01
        %v3776 = vadd.f32 %v3773, 0.01
        %v3777 = vadd.f32 %v3774, 0.01
        %v3778 = vlog2.pop %v3775
        %v3779 = vmul.f32 %v3778, 0.6931472
        %v3780 = vlog2.pop %v3776
        %v3781 = vmul.f32 %v3780, 0.6931472
        %v3782 = vlog2.pop %v3777
        %v3783 = vmul.f32 %v3782, 0.6931472
        %v3784 = vmul.f32 %v3779, 0.4
        %v3785 = vmul.f32 %v3781, 0.4
        %v3786 = vmul.f32 %v3783, 0.4
        %v3787 = vmul.f32 %v3784, 1.442695
        %v3788 = vpow.pop %v3787
        %v3789 = vmul.f32 %v3785, 1.442695
        %v3790 = vpow.pop %v3789
        %v3791 = vmul.f32 %v3786, 1.442695
        %v3792 = vpow.pop %v3791
        %3796 = vrot.lane.b32.xlu0 %v3788, 124
        %v3797 = vpop.permute.xlu0 %3796
        %3798 = vrot.lane.b32.xlu0 %v3790, 124
        %v3799 = vpop.permute.xlu0 %3798
        %3800 = vrot.lane.b32.xlu0 %v3792, 124
        %v3801 = vpop.permute.xlu0 %3800
        %vm3805 = vcmask 130051
        %3806 = vst.msk [vmem:[%s59 - $0x3] sm:$0xf8] %vm3805, %v3797
        %vm3807 = vcmask 130048
        %3808 = vst.msk [vmem:[%s59 + $0x5] sm:$0xff] %vm3807, %v3799
        %vm3809 = vcmask 124928
        %3810 = vst.msk [vmem:[%s59 + $0xd] sm:$0x7] %vm3809, %v3801
        %s3811 = sand.u32 %s32, 1
        %s3812 = scalar_lea.sflag [#allocation6], %s3811
        %s3813 = sand.u32 %s32, 1
        %s3814 = smul.addr %s3813, 16
        %s3815 = scalar_lea.vmem [#allocation5], %s3814
        // Predicated region
        $region57: #{tpu_custom_call.1} parent=11 // pred_check
          %p3816 = pneg %p38
        $region58: #{tpu_custom_call.1} parent=11 // pred_check_branch
          %3818 = sbr.rel (%p3816) target = $region60
        $region59: #{tpu_custom_call.1} parent=11 // pred_region
          %s3819 = smul.u32 2, %s18
          %3821 = vsyncadd %s3812, 0
          %s3822 = smul.addr %s17, 2
          %s3823 = sadd.s32 %s3819, %s3822
          %s3824 = smul.addr %s3823, 8
          %s3825 = scalar_lea.hbm %s2, %s3824
          %s3826 = sshll.u32 %s3815, 4
          %s3827 = int_to_ptr.vmem [resolvable:$true] %s3826
          %s3828 = sshll.u32 %s3825, 4
          %s3829 = int_to_ptr.hbm [resolvable:$true] %s3828
          %3834 = dma.vmem_to_hbm [thread:$0]  %s3827, 256, %s3829, %s3812, 128, 128, 8
        $region60: #{tpu_custom_call.1} parent=11 // pred_fallthru
          _
      $region12: #{tpu_custom_call.1} parent=5 // pred_fallthru
        _
      %p3835 = scmp.le.s32.totalorder 1, %s11
      // Predicated region
      $region61: #{tpu_custom_call.1} parent=5 // pred_check
        %p3836 = pneg %p3835
      $region62: #{tpu_custom_call.1} parent=5 // pred_check_branch
        %3838 = sbr.rel (%p3836) target = $region64
      $region63: #{tpu_custom_call.1} parent=5 // pred_region
        %s3839 = ssub.s32 %s11, 1
        // Predicated region
        $region65: #{tpu_custom_call.1} parent=63 // pred_check
          %p3840 = pneg %p44
        $region66: #{tpu_custom_call.1} parent=63 // pred_check_branch
          %3842 = sbr.rel (%p3840) target = $region68
        $region67: #{tpu_custom_call.1} parent=63 // pred_region
          %s3843 = sand.u32 %s35, 1
          %s3844 = scalar_lea.sflag [#allocation6], %s3843
          %s3845 = sand.u32 %s35, 1
          %s3846 = smul.addr %s3845, 16
          %s3847 = scalar_lea.vmem [#allocation5], %s3846
          %3849 = dma.done %s3844, 256
        $region68: #{tpu_custom_call.1} parent=63 // pred_fallthru
          _
      $region64: #{tpu_custom_call.1} parent=5 // pred_fallthru
        _
    $region6: #{tpu_custom_call.1} parent=1 // loop_footer
      %s15 = sadd.s32 1, %s11
    $region7: #{tpu_custom_call.1} parent=1 // loop_footer_branch
      %10 = sbr.rel target = $region3
    $region8: #{tpu_custom_call.1} parent=1 // loop_exit
      _
    %3850 = vsyncpa [#allocation6], 1
    %s3851 = scalar_lea.sflag [#allocation6], 1
    %3852 = vsyncpa %s3851, 1
  %3853 = vsyncmov [#allocation4]
  %s3854 = vpop.sfrf %3853
  %p3855 = scmp.eq.s32.totalorder %s3854, 0
  %p3856 = pneg %p3855
  %3858 = shalt.err (%p3856)
  %s3859 = scalar_lea.sflag [#allocation4], 1
  %3860 = vsyncmov %s3859
  %s3861 = vpop.sfrf %3860
  %p3862 = scmp.eq.s32.totalorder %s3861, 0
  %p3863 = pneg %p3862
  %3865 = shalt.err (%p3863)

</llo_original>
